<compile_context>
chip_gen: v7x
topology: tpu7x:2x2x1
jax: 0.10.0
libtpu: 0.0.40
codegen_flags: <defaults>
</compile_context>

<pallas_src>
import numpy as np

import jax
import jax.numpy as jnp
from jax import lax
from jax.experimental import pallas as pl
from jax.experimental.pallas import tpu as pltpu

# ---------------------------------------------------------------------------
# Module configuration (small shapes consistent with AdversarialVAE.__init__):
#   input_channels=4, hidden_dims=[8, 16] (two stride-2 blocks: 16 -> 8 -> 4),
#   latent_size=4 (spatial size after the conv stack), latent_dim=32, batch=2.
# ---------------------------------------------------------------------------
BATCH = 2
INPUT_CHANNELS = 4
SPATIAL = 16
HIDDEN_DIMS = [8, 16]
LATENT_SIZE = 4
LATENT_DIM = 32
NEG_SLOPE = 0.01                      # nn.LeakyReLU default
OUT_PAD = 128                         # lane-dense padding for fc1 / fc2 outputs

# Per-layer flat (CHW) activation widths.
_S1 = SPATIAL // 2                                 # 8
_S2 = SPATIAL // 4                                 # 4  (== LATENT_SIZE)
FLAT_IN = INPUT_CHANNELS * SPATIAL * SPATIAL       # 1024
L1 = HIDDEN_DIMS[0] * _S1 * _S1                    # 512  conv1a out
L2 = HIDDEN_DIMS[0] * _S1 * _S1                    # 512  conv1b out
L3 = HIDDEN_DIMS[1] * _S2 * _S2                    # 256  conv2a out
L4 = HIDDEN_DIMS[1] * _S2 * _S2                    # 256  conv2b out == fc1 fan-in
_HEAD_ROW0 = L2 + L3                               # 768  row offset of fc1/fc2 in slab B

WA_SHAPE = (FLAT_IN + L1, L1)                      # (1536, 512): conv1a, conv1b
WB_SHAPE = (L2 + L3 + L4, 2 * OUT_PAD)             # (1024, 256): conv2a, conv2b, fc1, fc2
BIAS_SHAPE = (8, L1)                               # (8, 512): one f32 bias row per layer


# ---------------------------------------------------------------------------
# The single fused discriminator kernel (one program, everything VMEM-resident).
#   x_ref  : (N, 1024)  f32   NCHW-flat input rows (real images then detached fakes)
#   wa_ref : (1536, 512) bf16 slab A = [conv1a Toeplitz ; conv1b Toeplitz]
#   wb_ref : (1024, 256) bf16 slab B = [conv2a ; conv2b ; fc1 | fc2] (static layout)
#   b_ref  : (8, 512)   f32   bias rows (spatially tiled), one per layer
#   o_ref  : (N, 128)   f32   output slab, logit in lane 0
# ---------------------------------------------------------------------------
def _disc_kernel(x_ref, wa_ref, wb_ref, b_ref, o_ref):
    cdt = wa_ref.dtype                      # bf16 hot path / f32 validation path
    ball = b_ref[...]                       # single (8, 512) f32 load, sliced below

    def layer(act, w, bias_row):
        acc = jnp.dot(act, w, preferred_element_type=jnp.float32) + bias_row
        acc = jnp.where(acc >= 0.0, acc, NEG_SLOPE * acc)         # LeakyReLU (f32)
        return acc.astype(cdt)              # exactly one cast per layer

    x = x_ref[...].astype(cdt)                                               # (N,1024)
    h = layer(x, wa_ref[0:FLAT_IN, 0:L1],              ball[0:1, 0:L1])      # conv 4->8,  s=2
    h = layer(h, wa_ref[FLAT_IN:FLAT_IN + L1, 0:L2],   ball[1:2, 0:L2])      # conv 8->8,  s=1
    h = layer(h, wb_ref[0:L2, 0:L3],                   ball[2:3, 0:L3])      # conv 8->16, s=2
    h = layer(h, wb_ref[L2:L2 + L3, 0:L4],             ball[3:4, 0:L4])      # conv 16->16,s=1
    # Flatten(NCHW) is the identity in this layout; fc1 is one (256,128) matmul.
    z = layer(h, wb_ref[_HEAD_ROW0:_HEAD_ROW0 + L4, 0:OUT_PAD],
              ball[4:5, 0:OUT_PAD])                                          # (N, 128)
    # fc2 (lane-padded to 128; real logit in column 0).  NOTE(v5e): could be a VPU
    # mul + lane reduce instead of an MXU matmul; kept as MXU (fine on v6e/v7x).
    y = jnp.dot(z, wb_ref[_HEAD_ROW0:_HEAD_ROW0 + OUT_PAD, OUT_PAD:2 * OUT_PAD],
                preferred_element_type=jnp.float32) + ball[5:6, 0:OUT_PAD]
    o_ref[...] = y


def discriminator_fused(x_flat, packed):
    """Whole discriminator in one pallas_call.  x_flat: (n_img, 1024) NCHW-flat."""
    wa, wb, bias = packed
    assert x_flat.shape[1] == FLAT_IN
    n_img = x_flat.shape[0]
    # Single program: ~2 MiB resident in VMEM, well under the default scoped limit on
    # every generation.  For large batches, add a row-block grid axis here with
    # dimension_semantics=("parallel",) to use both v7x TensorCores.
    return pl.pallas_call(
        _disc_kernel,
        out_shape=jax.ShapeDtypeStruct((n_img, OUT_PAD), jnp.float32),
        in_specs=[pl.BlockSpec(memory_space=pltpu.MemorySpace.VMEM)] * 4,
        out_specs=pl.BlockSpec(memory_space=pltpu.MemorySpace.VMEM),
    )(x_flat, wa, wb, bias)


# ---------------------------------------------------------------------------
# Init-time weight packing (all layout work hoisted out of the hot path).
# ---------------------------------------------------------------------------
def _conv_to_dense(w_oihw, h_in, stride):
    """Dense (Cin*H*W, Cout*Ho*Wo) Toeplitz matrix of Conv2d(k=3, pad=1, stride=s).

    Row ordering = CHW-flat input, column ordering = CHW-flat output, so chaining
    layers keeps activations in torch NCHW-flatten order end to end.
    """
    w = np.asarray(w_oihw, np.float32)
    co, ci, kh, kw = w.shape
    assert (kh, kw) == (3, 3)
    w_in = h_in
    h_out = (h_in + 2 - 3) // stride + 1
    w_out = h_out
    dense = np.zeros((ci * h_in * w_in, co * h_out * w_out), np.float32)
    oh = np.arange(h_out)
    ow = np.arange(w_out)
    for dh in range(3):
        ih = stride * oh + dh - 1
        ov_h = oh[(ih >= 0) & (ih < h_in)]
        iv_h = stride * ov_h + dh - 1
        for dw in range(3):
            iw = stride * ow + dw - 1
            ov_w = ow[(iw >= 0) & (iw < w_in)]
            iv_w = stride * ov_w + dw - 1
            in_sp = iv_h[:, None] * w_in + iv_w[None, :]
            out_sp = ov_h[:, None] * w_out + ov_w[None, :]
            for c_in in range(ci):
                rows = c_in * h_in * w_in + in_sp
                for c_out in range(co):
                    cols = c_out * h_out * w_out + out_sp
                    dense[rows, cols] = w[c_out, c_in, dh, dw]
    return dense, h_out


def pack_discriminator(raw, dtype=jnp.bfloat16):
    """Pack the whole discriminator into 2 lane-dense weight slabs + 1 bias slab."""
    denses, brows = [], []
    h = SPATIAL
    for (w1, b1, w2, b2) in raw["blocks"]:
        d, h = _conv_to_dense(w1, h, stride=2)
        denses.append(d)
        brows.append(np.repeat(np.asarray(b1, np.float32), h * h))
        d, h = _conv_to_dense(w2, h, stride=1)
        denses.append(d)
        brows.append(np.repeat(np.asarray(b2, np.float32), h * h))
    assert h == LATENT_SIZE
    d1, d2, d3, d4 = denses
    assert d1.shape == (FLAT_IN, L1) and d2.shape == (L1, L2)
    assert d3.shape == (L2, L3) and d4.shape == (L3, L4)

    fc1_w = np.asarray(raw["fc1_w"], np.float32)      # (latent_dim, 256)
    fc1_b = np.asarray(raw["fc1_b"], np.float32)
    fc2_w = np.asarray(raw["fc2_w"], np.float32)      # (1, latent_dim)
    fc2_b = np.asarray(raw["fc2_b"], np.float32)
    assert fc1_w.shape == (LATENT_DIM, L4) and LATENT_DIM <= OUT_PAD

    wa = np.zeros(WA_SHAPE, np.float32)
    wa[0:FLAT_IN, 0:L1] = d1
    wa[FLAT_IN:FLAT_IN + L1, 0:L2] = d2

    wb = np.zeros(WB_SHAPE, np.float32)
    wb[0:L2, 0:L3] = d3
    wb[L2:L2 + L3, 0:L4] = d4
    wb[_HEAD_ROW0:_HEAD_ROW0 + L4, 0:LATENT_DIM] = fc1_w.T              # fc1 (lanes 0:32)
    wb[_HEAD_ROW0:_HEAD_ROW0 + LATENT_DIM, OUT_PAD:OUT_PAD + 1] = fc2_w.T  # fc2 (col 128)

    bias = np.zeros(BIAS_SHAPE, np.float32)
    bias[0, 0:L1] = brows[0]
    bias[1, 0:L2] = brows[1]
    bias[2, 0:L3] = brows[2]
    bias[3, 0:L4] = brows[3]
    bias[4, 0:LATENT_DIM] = fc1_b
    bias[5, 0] = float(fc2_b[0])

    return (jnp.asarray(wa, dtype), jnp.asarray(wb, dtype),
            jnp.asarray(bias, jnp.float32))


# ---------------------------------------------------------------------------
# AdversarialVAE.forward
# ---------------------------------------------------------------------------
def adversarial_vae_forward(x0, packed):
    # TODO(synk): the inner `model: BaseVAE` is abstract in the reference; use an
    # identity reconstruction and zero mu/log_var as a deterministic stub.
    recons = x0
    mu = jnp.zeros((x0.shape[0], LATENT_DIM), jnp.float32)
    log_var = jnp.zeros((x0.shape[0], LATENT_DIM), jnp.float32)

    # Both discriminator passes (real + detached fake) batched into ONE kernel call.
    # NCHW flatten is layout-free (no transpose): the kernel consumes it directly.
    both = jnp.concatenate([x0, lax.stop_gradient(recons)], axis=0)     # (2B, C, H, W)
    flat = both.reshape(both.shape[0], -1)                              # (2B, 1024)
    logits = discriminator_fused(flat, packed)                          # (2B, 128)
    belief = logits[:, :1]
    b = x0.shape[0]
    return [recons, x0, mu, log_var, belief[:b], belief[b:]]


# ---------------------------------------------------------------------------
# Plain-XLA f32 reference of the discriminator (torch semantics) — validation only.
# ---------------------------------------------------------------------------
def _disc_reference(x_nchw, raw):
    lrelu = lambda v: jnp.where(v >= 0, v, NEG_SLOPE * v)
    h = x_nchw
    for (w1, b1, w2, b2) in raw["blocks"]:
        h = lrelu(lax.conv_general_dilated(
            h, w1, window_strides=(2, 2), padding=[(1, 1), (1, 1)],
            dimension_numbers=("NCHW", "OIHW", "NCHW"),
            precision=lax.Precision.HIGHEST) + b1[None, :, None, None])
        h = lrelu(lax.conv_general_dilated(
            h, w2, window_strides=(1, 1), padding=[(1, 1), (1, 1)],
            dimension_numbers=("NCHW", "OIHW", "NCHW"),
            precision=lax.Precision.HIGHEST) + b2[None, :, None, None])
    h = h.reshape(h.shape[0], -1)                                       # Flatten(NCHW)
    h = lrelu(jnp.dot(h, raw["fc1_w"].T, precision="highest") + raw["fc1_b"])
    return jnp.dot(h, raw["fc2_w"].T, precision="highest") + raw["fc2_b"]


# ---------------------------------------------------------------------------
# Deterministic synthetic parameter init (torch layouts, shapes from __init__).
# ---------------------------------------------------------------------------
def init_raw_params(key):
    keys = iter(jax.random.split(key, 32))
    blocks = []
    in_ch = INPUT_CHANNELS
    for hdim in HIDDEN_DIMS:
        w1 = jax.random.normal(next(keys), (hdim, in_ch, 3, 3), jnp.float32) * 0.05
        b1 = jax.random.normal(next(keys), (hdim,), jnp.float32) * 0.05
        w2 = jax.random.normal(next(keys), (hdim, hdim, 3, 3), jnp.float32) * 0.05
        b2 = jax.random.normal(next(keys), (hdim,), jnp.float32) * 0.05
        blocks.append((w1, b1, w2, b2))
        in_ch = hdim
    flat_dim = HIDDEN_DIMS[-1] * LATENT_SIZE * LATENT_SIZE
    fc1_w = jax.random.normal(next(keys), (LATENT_DIM, flat_dim), jnp.float32) * 0.05
    fc1_b = jax.random.normal(next(keys), (LATENT_DIM,), jnp.float32) * 0.05
    fc2_w = jax.random.normal(next(keys), (1, LATENT_DIM), jnp.float32) * 0.05
    fc2_b = jax.random.normal(next(keys), (1,), jnp.float32) * 0.05
    return {"blocks": blocks, "fc1_w": fc1_w, "fc1_b": fc1_b,
            "fc2_w": fc2_w, "fc2_b": fc2_b}


if __name__ == "__main__":
    key = jax.random.PRNGKey(0)
    k_param, k_x = jax.random.split(key)
    raw = init_raw_params(k_param)
    packed = pack_discriminator(raw, dtype=jnp.bfloat16)
    x0 = jax.random.normal(k_x, (BATCH, INPUT_CHANNELS, SPATIAL, SPATIAL), jnp.float32)

    fwd = jax.jit(adversarial_vae_forward)
    recons, x_out, mu, log_var, belief_r, belief_f = fwd(x0, packed)
    jax.block_until_ready((recons, x_out, mu, log_var, belief_r, belief_f))

    assert recons.shape == (BATCH, INPUT_CHANNELS, SPATIAL, SPATIAL)
    assert mu.shape == (BATCH, LATENT_DIM) and log_var.shape == (BATCH, LATENT_DIM)
    assert belief_r.shape == (BATCH, 1) and belief_f.shape == (BATCH, 1)
    assert bool(jnp.all(jnp.isfinite(belief_r))) and bool(jnp.all(jnp.isfinite(belief_f)))

    ref = _disc_reference(x0, raw)

    # 1) Layout validation with f32 packed weights (separates packing/layout errors
    #    from bf16 rounding, per the review's correctness concern).
    packed_f32 = pack_discriminator(raw, dtype=jnp.float32)
    logit_f32 = discriminator_fused(x0.reshape(BATCH, -1), packed_f32)[:, :1]
    err32 = float(jnp.max(jnp.abs(logit_f32 - ref)))
    assert err32 < 5e-3, err32

    # 2) bf16 hot path vs the f32 XLA reference (recons == x0 in the stub).
    err_r = float(jnp.max(jnp.abs(belief_r - ref)))
    err_f = float(jnp.max(jnp.abs(belief_f - ref)))
    assert err_r < 5e-2 and err_f < 5e-2, (err_r, err_f)

    print("KERNEL_OK")
</pallas_src>

<mosaic_0001>
module attributes {stable_mosaic.version = 11 : i64} {
  func.func @_disc_kernel(%arg0: memref<4x1024xf32, #tpu.memory_space<vmem>>, %arg1: memref<1536x512xbf16, #tpu.memory_space<vmem>>, %arg2: memref<1024x256xbf16, #tpu.memory_space<vmem>>, %arg3: memref<8x512xf32, #tpu.memory_space<vmem>>, %arg4: memref<4x128xf32, #tpu.memory_space<vmem>>) attributes {dimension_semantics = [], scalar_prefetch = 0 : i64, scratch_operands = 0 : i64, tpu.core_type = #tpu.core_type<tc>} {
    %c0 = arith.constant 0 : index
    %c0_0 = arith.constant 0 : index
    %0 = vector.load %arg3[%c0, %c0_0] : memref<8x512xf32, #tpu.memory_space<vmem>>, vector<8x512xf32>
    %c0_1 = arith.constant 0 : index
    %c0_2 = arith.constant 0 : index
    %1 = vector.load %arg0[%c0_1, %c0_2] : memref<4x1024xf32, #tpu.memory_space<vmem>>, vector<4x1024xf32>
    %2 = arith.truncf %1 : vector<4x1024xf32> to vector<4x1024xbf16>
    %c0_3 = arith.constant 0 : index
    %c0_4 = arith.constant 0 : index
    %3 = vector.load %arg1[%c0_3, %c0_4] : memref<1536x512xbf16, #tpu.memory_space<vmem>>, vector<1024x512xbf16>
    %4 = vector.extract_strided_slice %0 {offsets = [0, 0], sizes = [1, 512], strides = [1, 1]} : vector<8x512xf32> to vector<1x512xf32>
    %cst = arith.constant dense<0.000000e+00> : vector<4x512xf32>
    %5 = tpu.matmul %2, %3, %cst {dimension_numbers = #tpu.dot_dimension_numbers<[1], [0], [0], [1], [0, 0, 1, 1], [], []>} : vector<4x1024xbf16>, vector<1024x512xbf16>, vector<4x512xf32> -> vector<4x512xf32>
    %6 = vector.broadcast %4 : vector<1x512xf32> to vector<4x512xf32>
    %7 = arith.addf %5, %6 : vector<4x512xf32>
    %cst_5 = arith.constant 0.000000e+00 : f32
    %8 = vector.broadcast %cst_5 : f32 to vector<4x512xf32>
    %9 = arith.cmpf oge, %7, %8 : vector<4x512xf32>
    %cst_6 = arith.constant 0.00999999977 : f32
    %10 = vector.broadcast %cst_6 : f32 to vector<4x512xf32>
    %11 = arith.mulf %10, %7 : vector<4x512xf32>
    %12 = arith.select %9, %7, %11 : vector<4x512xi1>, vector<4x512xf32>
    %13 = arith.truncf %12 : vector<4x512xf32> to vector<4x512xbf16>
    %c1024 = arith.constant 1024 : index
    %c0_7 = arith.constant 0 : index
    %14 = vector.load %arg1[%c1024, %c0_7] : memref<1536x512xbf16, #tpu.memory_space<vmem>>, vector<512x512xbf16>
    %15 = vector.extract_strided_slice %0 {offsets = [1, 0], sizes = [1, 512], strides = [1, 1]} : vector<8x512xf32> to vector<1x512xf32>
    %cst_8 = arith.constant dense<0.000000e+00> : vector<4x512xf32>
    %16 = tpu.matmul %13, %14, %cst_8 {dimension_numbers = #tpu.dot_dimension_numbers<[1], [0], [0], [1], [0, 0, 1, 1], [], []>} : vector<4x512xbf16>, vector<512x512xbf16>, vector<4x512xf32> -> vector<4x512xf32>
    %17 = vector.broadcast %15 : vector<1x512xf32> to vector<4x512xf32>
    %18 = arith.addf %16, %17 : vector<4x512xf32>
    %cst_9 = arith.constant 0.000000e+00 : f32
    %19 = vector.broadcast %cst_9 : f32 to vector<4x512xf32>
    %20 = arith.cmpf oge, %18, %19 : vector<4x512xf32>
    %cst_10 = arith.constant 0.00999999977 : f32
    %21 = vector.broadcast %cst_10 : f32 to vector<4x512xf32>
    %22 = arith.mulf %21, %18 : vector<4x512xf32>
    %23 = arith.select %20, %18, %22 : vector<4x512xi1>, vector<4x512xf32>
    %24 = arith.truncf %23 : vector<4x512xf32> to vector<4x512xbf16>
    %c0_11 = arith.constant 0 : index
    %c0_12 = arith.constant 0 : index
    %25 = vector.load %arg2[%c0_11, %c0_12] : memref<1024x256xbf16, #tpu.memory_space<vmem>>, vector<512x256xbf16>
    %26 = vector.extract_strided_slice %0 {offsets = [2, 0], sizes = [1, 256], strides = [1, 1]} : vector<8x512xf32> to vector<1x256xf32>
    %cst_13 = arith.constant dense<0.000000e+00> : vector<4x256xf32>
    %27 = tpu.matmul %24, %25, %cst_13 {dimension_numbers = #tpu.dot_dimension_numbers<[1], [0], [0], [1], [0, 0, 1, 1], [], []>} : vector<4x512xbf16>, vector<512x256xbf16>, vector<4x256xf32> -> vector<4x256xf32>
    %28 = vector.broadcast %26 : vector<1x256xf32> to vector<4x256xf32>
    %29 = arith.addf %27, %28 : vector<4x256xf32>
    %cst_14 = arith.constant 0.000000e+00 : f32
    %30 = vector.broadcast %cst_14 : f32 to vector<4x256xf32>
    %31 = arith.cmpf oge, %29, %30 : vector<4x256xf32>
    %cst_15 = arith.constant 0.00999999977 : f32
    %32 = vector.broadcast %cst_15 : f32 to vector<4x256xf32>
    %33 = arith.mulf %32, %29 : vector<4x256xf32>
    %34 = arith.select %31, %29, %33 : vector<4x256xi1>, vector<4x256xf32>
    %35 = arith.truncf %34 : vector<4x256xf32> to vector<4x256xbf16>
    %c512 = arith.constant 512 : index
    %c0_16 = arith.constant 0 : index
    %36 = vector.load %arg2[%c512, %c0_16] : memref<1024x256xbf16, #tpu.memory_space<vmem>>, vector<256x256xbf16>
    %37 = vector.extract_strided_slice %0 {offsets = [3, 0], sizes = [1, 256], strides = [1, 1]} : vector<8x512xf32> to vector<1x256xf32>
    %cst_17 = arith.constant dense<0.000000e+00> : vector<4x256xf32>
    %38 = tpu.matmul %35, %36, %cst_17 {dimension_numbers = #tpu.dot_dimension_numbers<[1], [0], [0], [1], [0, 0, 1, 1], [], []>} : vector<4x256xbf16>, vector<256x256xbf16>, vector<4x256xf32> -> vector<4x256xf32>
    %39 = vector.broadcast %37 : vector<1x256xf32> to vector<4x256xf32>
    %40 = arith.addf %38, %39 : vector<4x256xf32>
    %cst_18 = arith.constant 0.000000e+00 : f32
    %41 = vector.broadcast %cst_18 : f32 to vector<4x256xf32>
    %42 = arith.cmpf oge, %40, %41 : vector<4x256xf32>
    %cst_19 = arith.constant 0.00999999977 : f32
    %43 = vector.broadcast %cst_19 : f32 to vector<4x256xf32>
    %44 = arith.mulf %43, %40 : vector<4x256xf32>
    %45 = arith.select %42, %40, %44 : vector<4x256xi1>, vector<4x256xf32>
    %46 = arith.truncf %45 : vector<4x256xf32> to vector<4x256xbf16>
    %c768 = arith.constant 768 : index
    %c0_20 = arith.constant 0 : index
    %47 = vector.load %arg2[%c768, %c0_20] : memref<1024x256xbf16, #tpu.memory_space<vmem>>, vector<256x128xbf16>
    %48 = vector.extract_strided_slice %0 {offsets = [4, 0], sizes = [1, 128], strides = [1, 1]} : vector<8x512xf32> to vector<1x128xf32>
    %cst_21 = arith.constant dense<0.000000e+00> : vector<4x128xf32>
    %49 = tpu.matmul %46, %47, %cst_21 {dimension_numbers = #tpu.dot_dimension_numbers<[1], [0], [0], [1], [0, 0, 1, 1], [], []>} : vector<4x256xbf16>, vector<256x128xbf16>, vector<4x128xf32> -> vector<4x128xf32>
    %50 = vector.broadcast %48 : vector<1x128xf32> to vector<4x128xf32>
    %51 = arith.addf %49, %50 : vector<4x128xf32>
    %cst_22 = arith.constant 0.000000e+00 : f32
    %52 = vector.broadcast %cst_22 : f32 to vector<4x128xf32>
    %53 = arith.cmpf oge, %51, %52 : vector<4x128xf32>
    %cst_23 = arith.constant 0.00999999977 : f32
    %54 = vector.broadcast %cst_23 : f32 to vector<4x128xf32>
    %55 = arith.mulf %54, %51 : vector<4x128xf32>
    %56 = arith.select %53, %51, %55 : vector<4x128xi1>, vector<4x128xf32>
    %57 = arith.truncf %56 : vector<4x128xf32> to vector<4x128xbf16>
    %c768_24 = arith.constant 768 : index
    %c128 = arith.constant 128 : index
    %58 = vector.load %arg2[%c768_24, %c128] : memref<1024x256xbf16, #tpu.memory_space<vmem>>, vector<128x128xbf16>
    %cst_25 = arith.constant dense<0.000000e+00> : vector<4x128xf32>
    %59 = tpu.matmul %57, %58, %cst_25 {dimension_numbers = #tpu.dot_dimension_numbers<[1], [0], [0], [1], [0, 0, 1, 1], [], []>} : vector<4x128xbf16>, vector<128x128xbf16>, vector<4x128xf32> -> vector<4x128xf32>
    %60 = vector.extract_strided_slice %0 {offsets = [5, 0], sizes = [1, 128], strides = [1, 1]} : vector<8x512xf32> to vector<1x128xf32>
    %61 = vector.broadcast %60 : vector<1x128xf32> to vector<4x128xf32>
    %62 = arith.addf %59, %61 : vector<4x128xf32>
    %c0_26 = arith.constant 0 : index
    %c0_27 = arith.constant 0 : index
    %63 = vector.load %arg4[%c0_26, %c0_27] : memref<4x128xf32, #tpu.memory_space<vmem>>, vector<4x128xf32>
    tpu.vector_store %arg4[%c0_26, %c0_27], %62 {strides = array<i32>} : memref<4x128xf32, #tpu.memory_space<vmem>>, vector<4x128xf32>,
    return
  }
}

</mosaic_0001>

<llo_original>
// kernel: adversarial_vae_forward.1
$region0: #{adversarial_vae_forward.1}
  #allocation0 [shape = 'u32[]', space=smem, size = 0x4, offset = 0x4, fixed_abs, tag = 'smem constant byte address 0x4 - core index']
  #allocation1 [shape = 'u32[144,128]{1,0:T(1,128)}', space=vmem, size = 0x12000, scoped, tag = 'internal scratch']
  %s0 = inlined_call_operand.vmem [shape: f32[4,1024], index: 0, kind: input, shape index: {}]
  %s1 = inlined_call_operand.hbm [shape: bf16[1536,512], index: 1, kind: input, shape index: {}]
  %s2 = inlined_call_operand.hbm [shape: bf16[1024,256], index: 2, kind: input, shape index: {}]
  %s3 = inlined_call_operand.hbm [shape: f32[8,512], index: 3, kind: input, shape index: {}]
  %s4 = inlined_call_operand.vmem [shape: f32[4,128], index: 4, kind: output, shape index: {}]
  %s5 = sld [smem:[#allocation0]]
  $region38: #{adversarial_vae_forward.1} parent=0
    _
  %s7 = ssub.s32 1, %s5
  %s8 = scalar_select 0, %s7, %s5
  $region1: #{adversarial_vae_forward.1} parent=0
    #allocation2 [shape = 'u8[1572864]{0}', space=vmem, size = 0x180000, scoped, tag = 'input window, operand 1, single buffered']
    #allocation3 [shape = 's32[1]{0}', space=sflag, size = 0x4, scoped, tag = 'scoped memory for adversarial_vae_forward.1']
    #allocation4 [shape = 'u8[524288]{0}', space=vmem, size = 0x80000, scoped, tag = 'input window, operand 2, single buffered']
    #allocation5 [shape = 's32[1]{0}', space=sflag, size = 0x4, scoped, tag = 'scoped memory for adversarial_vae_forward.1']
    #allocation6 [shape = 'u8[16384]{0}', space=vmem, size = 0x4000, scoped, tag = 'input window, operand 3, single buffered']
    %9 = vsyncpa [#allocation3], 0
    %10 = vsyncpa [#allocation5], 0
    // Predicated region
    $region2: #{adversarial_vae_forward.1} parent=1 // pred_check
      _
    $region3: #{adversarial_vae_forward.1} parent=1 // pred_check_branch
      %12 = sbr.rel (0) target = $region5
    $region4: #{adversarial_vae_forward.1} parent=1 // pred_region
      _
    $region5: #{adversarial_vae_forward.1} parent=1 // pred_fallthru
      _
    // Predicated region
    $region6: #{adversarial_vae_forward.1} parent=1 // pred_check
      _
    $region7: #{adversarial_vae_forward.1} parent=1 // pred_check_branch
      %14 = sbr.rel (0) target = $region9
    $region8: #{adversarial_vae_forward.1} parent=1 // pred_region
      %s16 = ssub.s32 49152, 49152
      %17 = vsyncadd [#allocation3], %s16
      %s18 = sshll.u32 [#allocation2], 4
      %s19 = int_to_ptr.vmem [resolvable:$true] %s18
      %24 = dma.hbm_to_vmem [thread:$0]  %s1, 49152, %s19, [#allocation3], 256, 256, 16
    $region9: #{adversarial_vae_forward.1} parent=1 // pred_fallthru
      _
    // Predicated region
    $region10: #{adversarial_vae_forward.1} parent=1 // pred_check
      _
    $region11: #{adversarial_vae_forward.1} parent=1 // pred_check_branch
      %26 = sbr.rel (0) target = $region13
    $region12: #{adversarial_vae_forward.1} parent=1 // pred_region
      %s28 = ssub.s32 16384, 16384
      %29 = vsyncadd [#allocation5], %s28
      %s30 = sshll.u32 [#allocation4], 4
      %s31 = int_to_ptr.vmem [resolvable:$true] %s30
      %36 = dma.hbm_to_vmem [thread:$0]  %s2, 16384, %s31, [#allocation5], 128, 128, 8
    $region13: #{adversarial_vae_forward.1} parent=1 // pred_fallthru
      _
    // Predicated region
    $region14: #{adversarial_vae_forward.1} parent=1 // pred_check
      _
    $region15: #{adversarial_vae_forward.1} parent=1 // pred_check_branch
      %38 = sbr.rel (0) target = $region17
    $region16: #{adversarial_vae_forward.1} parent=1 // pred_region
      %s40 = ssub.s32 512, 512
      %41 = vsyncadd [#allocation5], %s40
      %s43 = sshll.u32 [#allocation6], 4
      %s44 = int_to_ptr.vmem [resolvable:$true] %s43
      %46 = dma.hbm_to_vmem [thread:$0]  %s3, 512, %s44, [#allocation5]
    $region17: #{adversarial_vae_forward.1} parent=1 // pred_fallthru
      _
    // Predicated region
    $region18: #{adversarial_vae_forward.1} parent=1 // pred_check
      _
    $region19: #{adversarial_vae_forward.1} parent=1 // pred_check_branch
      %48 = sbr.rel (0) target = $region21
    $region20: #{adversarial_vae_forward.1} parent=1 // pred_region
      %49 = dma.done [#allocation3], 49152
    $region21: #{adversarial_vae_forward.1} parent=1 // pred_fallthru
      _
    // Predicated region
    $region22: #{adversarial_vae_forward.1} parent=1 // pred_check
      _
    $region23: #{adversarial_vae_forward.1} parent=1 // pred_check_branch
      %51 = sbr.rel (0) target = $region25
    $region24: #{adversarial_vae_forward.1} parent=1 // pred_region
      %52 = dma.done [#allocation5], 16384
    $region25: #{adversarial_vae_forward.1} parent=1 // pred_fallthru
      _
    // Predicated region
    $region26: #{adversarial_vae_forward.1} parent=1 // pred_check
      _
    $region27: #{adversarial_vae_forward.1} parent=1 // pred_check_branch
      %54 = sbr.rel (0) target = $region29
    $region28: #{adversarial_vae_forward.1} parent=1 // pred_region
      %55 = dma.done [#allocation5], 512
    $region29: #{adversarial_vae_forward.1} parent=1 // pred_fallthru
      _
    %v57 = vld [vmem:[#allocation6] sm:$0xff]
    %v58 = vld [vmem:[#allocation6 + $0x8] sm:$0xff]
    %v59 = vld [vmem:[#allocation6 + $0x10] sm:$0xff]
    %v60 = vld [vmem:[#allocation6 + $0x18] sm:$0xff]
    %v61 = vld [vmem:[%s0] sm:$0xff]
    %v62 = vld [vmem:[%s0 + $0x8] sm:$0xff]
    %v63 = vld [vmem:[%s0 + $0x10] sm:$0xff]
    %v64 = vld [vmem:[%s0 + $0x18] sm:$0xff]
    %v69 = vcombine.high %v61, %v61
    %v70 = vcombine.high %v62, %v62
    %v71 = vcombine.high %v63, %v63
    %v72 = vcombine.high %v64, %v64
    %v77 = vpack.c.bf16 %v61, %v61
    %v78 = vpack.c.bf16 %v69, %v69
    %v79 = vpack.c.bf16 %v62, %v62
    %v80 = vpack.c.bf16 %v70, %v70
    %v81 = vpack.c.bf16 %v63, %v63
    %v82 = vpack.c.bf16 %v71, %v71
    %v83 = vpack.c.bf16 %v64, %v64
    %v84 = vpack.c.bf16 %v72, %v72
    %v85 = vld [vmem:[#allocation2] sm:$0xff]
    %v86 = vld [vmem:[#allocation2 + $0x8] sm:$0xff]
    %v87 = vld [vmem:[#allocation2 + $0x10] sm:$0xff]
    %v88 = vld [vmem:[#allocation2 + $0x18] sm:$0xff]
    %v89 = vld [vmem:[#allocation2 + $0x20] sm:$0xff]
    %v90 = vld [vmem:[#allocation2 + $0x28] sm:$0xff]
    %v91 = vld [vmem:[#allocation2 + $0x30] sm:$0xff]
    %v92 = vld [vmem:[#allocation2 + $0x38] sm:$0xff]
    %v93 = vld [vmem:[#allocation2 + $0x40] sm:$0xff]
    %v94 = vld [vmem:[#allocation2 + $0x48] sm:$0xff]
    %v95 = vld [vmem:[#allocation2 + $0x50] sm:$0xff]
    %v96 = vld [vmem:[#allocation2 + $0x58] sm:$0xff]
    %v97 = vld [vmem:[#allocation2 + $0x60] sm:$0xff]
    %v98 = vld [vmem:[#allocation2 + $0x68] sm:$0xff]
    %v99 = vld [vmem:[#allocation2 + $0x70] sm:$0xff]
    %v100 = vld [vmem:[#allocation2 + $0x78] sm:$0xff]
    %v101 = vld [vmem:[#allocation2 + $0x80] sm:$0xff]
    %v102 = vld [vmem:[#allocation2 + $0x88] sm:$0xff]
    %v103 = vld [vmem:[#allocation2 + $0x90] sm:$0xff]
    %v104 = vld [vmem:[#allocation2 + $0x98] sm:$0xff]
    %v105 = vld [vmem:[#allocation2 + $0xa0] sm:$0xff]
    %v106 = vld [vmem:[#allocation2 + $0xa8] sm:$0xff]
    %v107 = vld [vmem:[#allocation2 + $0xb0] sm:$0xff]
    %v108 = vld [vmem:[#allocation2 + $0xb8] sm:$0xff]
    %v109 = vld [vmem:[#allocation2 + $0xc0] sm:$0xff]
    %v110 = vld [vmem:[#allocation2 + $0xc8] sm:$0xff]
    %v111 = vld [vmem:[#allocation2 + $0xd0] sm:$0xff]
    %v112 = vld [vmem:[#allocation2 + $0xd8] sm:$0xff]
    %v113 = vld [vmem:[#allocation2 + $0xe0] sm:$0xff]
    %v114 = vld [vmem:[#allocation2 + $0xe8] sm:$0xff]
    %v115 = vld [vmem:[#allocation2 + $0xf0] sm:$0xff]
    %v116 = vld [vmem:[#allocation2 + $0xf8] sm:$0xff]
    %v117 = vld [vmem:[#allocation2 + $0x100] sm:$0xff]
    %v118 = vld [vmem:[#allocation2 + $0x108] sm:$0xff]
    %v119 = vld [vmem:[#allocation2 + $0x110] sm:$0xff]
    %v120 = vld [vmem:[#allocation2 + $0x118] sm:$0xff]
    %v121 = vld [vmem:[#allocation2 + $0x120] sm:$0xff]
    %v122 = vld [vmem:[#allocation2 + $0x128] sm:$0xff]
    %v123 = vld [vmem:[#allocation2 + $0x130] sm:$0xff]
    %v124 = vld [vmem:[#allocation2 + $0x138] sm:$0xff]
    %v125 = vld [vmem:[#allocation2 + $0x140] sm:$0xff]
    %v126 = vld [vmem:[#allocation2 + $0x148] sm:$0xff]
    %v127 = vld [vmem:[#allocation2 + $0x150] sm:$0xff]
    %v128 = vld [vmem:[#allocation2 + $0x158] sm:$0xff]
    %v129 = vld [vmem:[#allocation2 + $0x160] sm:$0xff]
    %v130 = vld [vmem:[#allocation2 + $0x168] sm:$0xff]
    %v131 = vld [vmem:[#allocation2 + $0x170] sm:$0xff]
    %v132 = vld [vmem:[#allocation2 + $0x178] sm:$0xff]
    %v133 = vld [vmem:[#allocation2 + $0x180] sm:$0xff]
    %v134 = vld [vmem:[#allocation2 + $0x188] sm:$0xff]
    %v135 = vld [vmem:[#allocation2 + $0x190] sm:$0xff]
    %v136 = vld [vmem:[#allocation2 + $0x198] sm:$0xff]
    %v137 = vld [vmem:[#allocation2 + $0x1a0] sm:$0xff]
    %v138 = vld [vmem:[#allocation2 + $0x1a8] sm:$0xff]
    %v139 = vld [vmem:[#allocation2 + $0x1b0] sm:$0xff]
    %v140 = vld [vmem:[#allocation2 + $0x1b8] sm:$0xff]
    %v141 = vld [vmem:[#allocation2 + $0x1c0] sm:$0xff]
    %v142 = vld [vmem:[#allocation2 + $0x1c8] sm:$0xff]
    %v143 = vld [vmem:[#allocation2 + $0x1d0] sm:$0xff]
    %v144 = vld [vmem:[#allocation2 + $0x1d8] sm:$0xff]
    %v145 = vld [vmem:[#allocation2 + $0x1e0] sm:$0xff]
    %v146 = vld [vmem:[#allocation2 + $0x1e8] sm:$0xff]
    %v147 = vld [vmem:[#allocation2 + $0x1f0] sm:$0xff]
    %v148 = vld [vmem:[#allocation2 + $0x1f8] sm:$0xff]
    %v149 = vld [vmem:[#allocation2 + $0x200] sm:$0xff]
    %v150 = vld [vmem:[#allocation2 + $0x208] sm:$0xff]
    %v151 = vld [vmem:[#allocation2 + $0x210] sm:$0xff]
    %v152 = vld [vmem:[#allocation2 + $0x218] sm:$0xff]
    %v153 = vld [vmem:[#allocation2 + $0x220] sm:$0xff]
    %v154 = vld [vmem:[#allocation2 + $0x228] sm:$0xff]
    %v155 = vld [vmem:[#allocation2 + $0x230] sm:$0xff]
    %v156 = vld [vmem:[#allocation2 + $0x238] sm:$0xff]
    %v157 = vld [vmem:[#allocation2 + $0x240] sm:$0xff]
    %v158 = vld [vmem:[#allocation2 + $0x248] sm:$0xff]
    %v159 = vld [vmem:[#allocation2 + $0x250] sm:$0xff]
    %v160 = vld [vmem:[#allocation2 + $0x258] sm:$0xff]
    %v161 = vld [vmem:[#allocation2 + $0x260] sm:$0xff]
    %v162 = vld [vmem:[#allocation2 + $0x268] sm:$0xff]
    %v163 = vld [vmem:[#allocation2 + $0x270] sm:$0xff]
    %v164 = vld [vmem:[#allocation2 + $0x278] sm:$0xff]
    %v165 = vld [vmem:[#allocation2 + $0x280] sm:$0xff]
    %v166 = vld [vmem:[#allocation2 + $0x288] sm:$0xff]
    %v167 = vld [vmem:[#allocation2 + $0x290] sm:$0xff]
    %v168 = vld [vmem:[#allocation2 + $0x298] sm:$0xff]
    %v169 = vld [vmem:[#allocation2 + $0x2a0] sm:$0xff]
    %v170 = vld [vmem:[#allocation2 + $0x2a8] sm:$0xff]
    %v171 = vld [vmem:[#allocation2 + $0x2b0] sm:$0xff]
    %v172 = vld [vmem:[#allocation2 + $0x2b8] sm:$0xff]
    %v173 = vld [vmem:[#allocation2 + $0x2c0] sm:$0xff]
    %v174 = vld [vmem:[#allocation2 + $0x2c8] sm:$0xff]
    %v175 = vld [vmem:[#allocation2 + $0x2d0] sm:$0xff]
    %v176 = vld [vmem:[#allocation2 + $0x2d8] sm:$0xff]
    %v177 = vld [vmem:[#allocation2 + $0x2e0] sm:$0xff]
    %v178 = vld [vmem:[#allocation2 + $0x2e8] sm:$0xff]
    %v179 = vld [vmem:[#allocation2 + $0x2f0] sm:$0xff]
    %v180 = vld [vmem:[#allocation2 + $0x2f8] sm:$0xff]
    %v181 = vld [vmem:[#allocation2 + $0x300] sm:$0xff]
    %v182 = vld [vmem:[#allocation2 + $0x308] sm:$0xff]
    %v183 = vld [vmem:[#allocation2 + $0x310] sm:$0xff]
    %v184 = vld [vmem:[#allocation2 + $0x318] sm:$0xff]
    %v185 = vld [vmem:[#allocation2 + $0x320] sm:$0xff]
    %v186 = vld [vmem:[#allocation2 + $0x328] sm:$0xff]
    %v187 = vld [vmem:[#allocation2 + $0x330] sm:$0xff]
    %v188 = vld [vmem:[#allocation2 + $0x338] sm:$0xff]
    %v189 = vld [vmem:[#allocation2 + $0x340] sm:$0xff]
    %v190 = vld [vmem:[#allocation2 + $0x348] sm:$0xff]
    %v191 = vld [vmem:[#allocation2 + $0x350] sm:$0xff]
    %v192 = vld [vmem:[#allocation2 + $0x358] sm:$0xff]
    %v193 = vld [vmem:[#allocation2 + $0x360] sm:$0xff]
    %v194 = vld [vmem:[#allocation2 + $0x368] sm:$0xff]
    %v195 = vld [vmem:[#allocation2 + $0x370] sm:$0xff]
    %v196 = vld [vmem:[#allocation2 + $0x378] sm:$0xff]
    %v197 = vld [vmem:[#allocation2 + $0x380] sm:$0xff]
    %v198 = vld [vmem:[#allocation2 + $0x388] sm:$0xff]
    %v199 = vld [vmem:[#allocation2 + $0x390] sm:$0xff]
    %v200 = vld [vmem:[#allocation2 + $0x398] sm:$0xff]
    %v201 = vld [vmem:[#allocation2 + $0x3a0] sm:$0xff]
    %v202 = vld [vmem:[#allocation2 + $0x3a8] sm:$0xff]
    %v203 = vld [vmem:[#allocation2 + $0x3b0] sm:$0xff]
    %v204 = vld [vmem:[#allocation2 + $0x3b8] sm:$0xff]
    %v205 = vld [vmem:[#allocation2 + $0x3c0] sm:$0xff]
    %v206 = vld [vmem:[#allocation2 + $0x3c8] sm:$0xff]
    %v207 = vld [vmem:[#allocation2 + $0x3d0] sm:$0xff]
    %v208 = vld [vmem:[#allocation2 + $0x3d8] sm:$0xff]
    %v209 = vld [vmem:[#allocation2 + $0x3e0] sm:$0xff]
    %v210 = vld [vmem:[#allocation2 + $0x3e8] sm:$0xff]
    %v211 = vld [vmem:[#allocation2 + $0x3f0] sm:$0xff]
    %v212 = vld [vmem:[#allocation2 + $0x3f8] sm:$0xff]
    %v213 = vld [vmem:[#allocation2 + $0x400] sm:$0xff]
    %v214 = vld [vmem:[#allocation2 + $0x408] sm:$0xff]
    %v215 = vld [vmem:[#allocation2 + $0x410] sm:$0xff]
    %v216 = vld [vmem:[#allocation2 + $0x418] sm:$0xff]
    %v217 = vld [vmem:[#allocation2 + $0x420] sm:$0xff]
    %v218 = vld [vmem:[#allocation2 + $0x428] sm:$0xff]
    %v219 = vld [vmem:[#allocation2 + $0x430] sm:$0xff]
    %v220 = vld [vmem:[#allocation2 + $0x438] sm:$0xff]
    %v221 = vld [vmem:[#allocation2 + $0x440] sm:$0xff]
    %v222 = vld [vmem:[#allocation2 + $0x448] sm:$0xff]
    %v223 = vld [vmem:[#allocation2 + $0x450] sm:$0xff]
    %v224 = vld [vmem:[#allocation2 + $0x458] sm:$0xff]
    %v225 = vld [vmem:[#allocation2 + $0x460] sm:$0xff]
    %v226 = vld [vmem:[#allocation2 + $0x468] sm:$0xff]
    %v227 = vld [vmem:[#allocation2 + $0x470] sm:$0xff]
    %v228 = vld [vmem:[#allocation2 + $0x478] sm:$0xff]
    %v229 = vld [vmem:[#allocation2 + $0x480] sm:$0xff]
    %v230 = vld [vmem:[#allocation2 + $0x488] sm:$0xff]
    %v231 = vld [vmem:[#allocation2 + $0x490] sm:$0xff]
    %v232 = vld [vmem:[#allocation2 + $0x498] sm:$0xff]
    %v233 = vld [vmem:[#allocation2 + $0x4a0] sm:$0xff]
    %v234 = vld [vmem:[#allocation2 + $0x4a8] sm:$0xff]
    %v235 = vld [vmem:[#allocation2 + $0x4b0] sm:$0xff]
    %v236 = vld [vmem:[#allocation2 + $0x4b8] sm:$0xff]
    %v237 = vld [vmem:[#allocation2 + $0x4c0] sm:$0xff]
    %v238 = vld [vmem:[#allocation2 + $0x4c8] sm:$0xff]
    %v239 = vld [vmem:[#allocation2 + $0x4d0] sm:$0xff]
    %v240 = vld [vmem:[#allocation2 + $0x4d8] sm:$0xff]
    %v241 = vld [vmem:[#allocation2 + $0x4e0] sm:$0xff]
    %v242 = vld [vmem:[#allocation2 + $0x4e8] sm:$0xff]
    %v243 = vld [vmem:[#allocation2 + $0x4f0] sm:$0xff]
    %v244 = vld [vmem:[#allocation2 + $0x4f8] sm:$0xff]
    %v245 = vld [vmem:[#allocation2 + $0x500] sm:$0xff]
    %v246 = vld [vmem:[#allocation2 + $0x508] sm:$0xff]
    %v247 = vld [vmem:[#allocation2 + $0x510] sm:$0xff]
    %v248 = vld [vmem:[#allocation2 + $0x518] sm:$0xff]
    %v249 = vld [vmem:[#allocation2 + $0x520] sm:$0xff]
    %v250 = vld [vmem:[#allocation2 + $0x528] sm:$0xff]
    %v251 = vld [vmem:[#allocation2 + $0x530] sm:$0xff]
    %v252 = vld [vmem:[#allocation2 + $0x538] sm:$0xff]
    %v253 = vld [vmem:[#allocation2 + $0x540] sm:$0xff]
    %v254 = vld [vmem:[#allocation2 + $0x548] sm:$0xff]
    %v255 = vld [vmem:[#allocation2 + $0x550] sm:$0xff]
    %v256 = vld [vmem:[#allocation2 + $0x558] sm:$0xff]
    %v257 = vld [vmem:[#allocation2 + $0x560] sm:$0xff]
    %v258 = vld [vmem:[#allocation2 + $0x568] sm:$0xff]
    %v259 = vld [vmem:[#allocation2 + $0x570] sm:$0xff]
    %v260 = vld [vmem:[#allocation2 + $0x578] sm:$0xff]
    %v261 = vld [vmem:[#allocation2 + $0x580] sm:$0xff]
    %v262 = vld [vmem:[#allocation2 + $0x588] sm:$0xff]
    %v263 = vld [vmem:[#allocation2 + $0x590] sm:$0xff]
    %v264 = vld [vmem:[#allocation2 + $0x598] sm:$0xff]
    %v265 = vld [vmem:[#allocation2 + $0x5a0] sm:$0xff]
    %v266 = vld [vmem:[#allocation2 + $0x5a8] sm:$0xff]
    %v267 = vld [vmem:[#allocation2 + $0x5b0] sm:$0xff]
    %v268 = vld [vmem:[#allocation2 + $0x5b8] sm:$0xff]
    %v269 = vld [vmem:[#allocation2 + $0x5c0] sm:$0xff]
    %v270 = vld [vmem:[#allocation2 + $0x5c8] sm:$0xff]
    %v271 = vld [vmem:[#allocation2 + $0x5d0] sm:$0xff]
    %v272 = vld [vmem:[#allocation2 + $0x5d8] sm:$0xff]
    %v273 = vld [vmem:[#allocation2 + $0x5e0] sm:$0xff]
    %v274 = vld [vmem:[#allocation2 + $0x5e8] sm:$0xff]
    %v275 = vld [vmem:[#allocation2 + $0x5f0] sm:$0xff]
    %v276 = vld [vmem:[#allocation2 + $0x5f8] sm:$0xff]
    %v277 = vld [vmem:[#allocation2 + $0x600] sm:$0xff]
    %v278 = vld [vmem:[#allocation2 + $0x608] sm:$0xff]
    %v279 = vld [vmem:[#allocation2 + $0x610] sm:$0xff]
    %v280 = vld [vmem:[#allocation2 + $0x618] sm:$0xff]
    %v281 = vld [vmem:[#allocation2 + $0x620] sm:$0xff]
    %v282 = vld [vmem:[#allocation2 + $0x628] sm:$0xff]
    %v283 = vld [vmem:[#allocation2 + $0x630] sm:$0xff]
    %v284 = vld [vmem:[#allocation2 + $0x638] sm:$0xff]
    %v285 = vld [vmem:[#allocation2 + $0x640] sm:$0xff]
    %v286 = vld [vmem:[#allocation2 + $0x648] sm:$0xff]
    %v287 = vld [vmem:[#allocation2 + $0x650] sm:$0xff]
    %v288 = vld [vmem:[#allocation2 + $0x658] sm:$0xff]
    %v289 = vld [vmem:[#allocation2 + $0x660] sm:$0xff]
    %v290 = vld [vmem:[#allocation2 + $0x668] sm:$0xff]
    %v291 = vld [vmem:[#allocation2 + $0x670] sm:$0xff]
    %v292 = vld [vmem:[#allocation2 + $0x678] sm:$0xff]
    %v293 = vld [vmem:[#allocation2 + $0x680] sm:$0xff]
    %v294 = vld [vmem:[#allocation2 + $0x688] sm:$0xff]
    %v295 = vld [vmem:[#allocation2 + $0x690] sm:$0xff]
    %v296 = vld [vmem:[#allocation2 + $0x698] sm:$0xff]
    %v297 = vld [vmem:[#allocation2 + $0x6a0] sm:$0xff]
    %v298 = vld [vmem:[#allocation2 + $0x6a8] sm:$0xff]
    %v299 = vld [vmem:[#allocation2 + $0x6b0] sm:$0xff]
    %v300 = vld [vmem:[#allocation2 + $0x6b8] sm:$0xff]
    %v301 = vld [vmem:[#allocation2 + $0x6c0] sm:$0xff]
    %v302 = vld [vmem:[#allocation2 + $0x6c8] sm:$0xff]
    %v303 = vld [vmem:[#allocation2 + $0x6d0] sm:$0xff]
    %v304 = vld [vmem:[#allocation2 + $0x6d8] sm:$0xff]
    %v305 = vld [vmem:[#allocation2 + $0x6e0] sm:$0xff]
    %v306 = vld [vmem:[#allocation2 + $0x6e8] sm:$0xff]
    %v307 = vld [vmem:[#allocation2 + $0x6f0] sm:$0xff]
    %v308 = vld [vmem:[#allocation2 + $0x6f8] sm:$0xff]
    %v309 = vld [vmem:[#allocation2 + $0x700] sm:$0xff]
    %v310 = vld [vmem:[#allocation2 + $0x708] sm:$0xff]
    %v311 = vld [vmem:[#allocation2 + $0x710] sm:$0xff]
    %v312 = vld [vmem:[#allocation2 + $0x718] sm:$0xff]
    %v313 = vld [vmem:[#allocation2 + $0x720] sm:$0xff]
    %v314 = vld [vmem:[#allocation2 + $0x728] sm:$0xff]
    %v315 = vld [vmem:[#allocation2 + $0x730] sm:$0xff]
    %v316 = vld [vmem:[#allocation2 + $0x738] sm:$0xff]
    %v317 = vld [vmem:[#allocation2 + $0x740] sm:$0xff]
    %v318 = vld [vmem:[#allocation2 + $0x748] sm:$0xff]
    %v319 = vld [vmem:[#allocation2 + $0x750] sm:$0xff]
    %v320 = vld [vmem:[#allocation2 + $0x758] sm:$0xff]
    %v321 = vld [vmem:[#allocation2 + $0x760] sm:$0xff]
    %v322 = vld [vmem:[#allocation2 + $0x768] sm:$0xff]
    %v323 = vld [vmem:[#allocation2 + $0x770] sm:$0xff]
    %v324 = vld [vmem:[#allocation2 + $0x778] sm:$0xff]
    %v325 = vld [vmem:[#allocation2 + $0x780] sm:$0xff]
    %v326 = vld [vmem:[#allocation2 + $0x788] sm:$0xff]
    %v327 = vld [vmem:[#allocation2 + $0x790] sm:$0xff]
    %v328 = vld [vmem:[#allocation2 + $0x798] sm:$0xff]
    %v329 = vld [vmem:[#allocation2 + $0x7a0] sm:$0xff]
    %v330 = vld [vmem:[#allocation2 + $0x7a8] sm:$0xff]
    %v331 = vld [vmem:[#allocation2 + $0x7b0] sm:$0xff]
    %v332 = vld [vmem:[#allocation2 + $0x7b8] sm:$0xff]
    %v333 = vld [vmem:[#allocation2 + $0x7c0] sm:$0xff]
    %v334 = vld [vmem:[#allocation2 + $0x7c8] sm:$0xff]
    %v335 = vld [vmem:[#allocation2 + $0x7d0] sm:$0xff]
    %v336 = vld [vmem:[#allocation2 + $0x7d8] sm:$0xff]
    %v337 = vld [vmem:[#allocation2 + $0x7e0] sm:$0xff]
    %v338 = vld [vmem:[#allocation2 + $0x7e8] sm:$0xff]
    %v339 = vld [vmem:[#allocation2 + $0x7f0] sm:$0xff]
    %v340 = vld [vmem:[#allocation2 + $0x7f8] sm:$0xff]
    %v341 = vlaneseq
    %v342 = vshrl.u32 %v341, 7
    %v343 = vsub.s32 0, %v342
    %v344 = vrot.slane %v57, %v343
    %v345 = vlaneseq
    %v346 = vshrl.u32 %v345, 7
    %v347 = vsub.s32 0, %v346
    %v348 = vrot.slane %v58, %v347
    %v349 = vlaneseq
    %v350 = vshrl.u32 %v349, 7
    %v351 = vsub.s32 0, %v350
    %v352 = vrot.slane %v59, %v351
    %v353 = vlaneseq
    %v354 = vshrl.u32 %v353, 7
    %v355 = vsub.s32 0, %v354
    %v356 = vrot.slane %v60, %v355
    %v613 = vunpack.c.l.b16 %v85
    %v614 = vunpack.c.h.b16 %v85
    %v615 = vunpack.c.l.b16 %v86
    %v616 = vunpack.c.h.b16 %v86
    %v617 = vunpack.c.l.b16 %v87
    %v618 = vunpack.c.h.b16 %v87
    %v619 = vunpack.c.l.b16 %v88
    %v620 = vunpack.c.h.b16 %v88
    %v621 = vunpack.c.l.b16 %v89
    %v622 = vunpack.c.h.b16 %v89
    %v623 = vunpack.c.l.b16 %v90
    %v624 = vunpack.c.h.b16 %v90
    %v625 = vunpack.c.l.b16 %v91
    %v626 = vunpack.c.h.b16 %v91
    %v627 = vunpack.c.l.b16 %v92
    %v628 = vunpack.c.h.b16 %v92
    %v629 = vunpack.c.l.b16 %v93
    %v630 = vunpack.c.h.b16 %v93
    %v631 = vunpack.c.l.b16 %v94
    %v632 = vunpack.c.h.b16 %v94
    %v633 = vunpack.c.l.b16 %v95
    %v634 = vunpack.c.h.b16 %v95
    %v635 = vunpack.c.l.b16 %v96
    %v636 = vunpack.c.h.b16 %v96
    %v637 = vunpack.c.l.b16 %v97
    %v638 = vunpack.c.h.b16 %v97
    %v639 = vunpack.c.l.b16 %v98
    %v640 = vunpack.c.h.b16 %v98
    %v641 = vunpack.c.l.b16 %v99
    %v642 = vunpack.c.h.b16 %v99
    %v643 = vunpack.c.l.b16 %v100
    %v644 = vunpack.c.h.b16 %v100
    %v645 = vunpack.c.l.b16 %v101
    %v646 = vunpack.c.h.b16 %v101
    %v647 = vunpack.c.l.b16 %v102
    %v648 = vunpack.c.h.b16 %v102
    %v649 = vunpack.c.l.b16 %v103
    %v650 = vunpack.c.h.b16 %v103
    %v651 = vunpack.c.l.b16 %v104
    %v652 = vunpack.c.h.b16 %v104
    %v653 = vunpack.c.l.b16 %v105
    %v654 = vunpack.c.h.b16 %v105
    %v655 = vunpack.c.l.b16 %v106
    %v656 = vunpack.c.h.b16 %v106
    %v657 = vunpack.c.l.b16 %v107
    %v658 = vunpack.c.h.b16 %v107
    %v659 = vunpack.c.l.b16 %v108
    %v660 = vunpack.c.h.b16 %v108
    %v661 = vunpack.c.l.b16 %v109
    %v662 = vunpack.c.h.b16 %v109
    %v663 = vunpack.c.l.b16 %v110
    %v664 = vunpack.c.h.b16 %v110
    %v665 = vunpack.c.l.b16 %v111
    %v666 = vunpack.c.h.b16 %v111
    %v667 = vunpack.c.l.b16 %v112
    %v668 = vunpack.c.h.b16 %v112
    %v669 = vunpack.c.l.b16 %v113
    %v670 = vunpack.c.h.b16 %v113
    %v671 = vunpack.c.l.b16 %v114
    %v672 = vunpack.c.h.b16 %v114
    %v673 = vunpack.c.l.b16 %v115
    %v674 = vunpack.c.h.b16 %v115
    %v675 = vunpack.c.l.b16 %v116
    %v676 = vunpack.c.h.b16 %v116
    %v677 = vunpack.c.l.b16 %v117
    %v678 = vunpack.c.h.b16 %v117
    %v679 = vunpack.c.l.b16 %v118
    %v680 = vunpack.c.h.b16 %v118
    %v681 = vunpack.c.l.b16 %v119
    %v682 = vunpack.c.h.b16 %v119
    %v683 = vunpack.c.l.b16 %v120
    %v684 = vunpack.c.h.b16 %v120
    %v685 = vunpack.c.l.b16 %v121
    %v686 = vunpack.c.h.b16 %v121
    %v687 = vunpack.c.l.b16 %v122
    %v688 = vunpack.c.h.b16 %v122
    %v689 = vunpack.c.l.b16 %v123
    %v690 = vunpack.c.h.b16 %v123
    %v691 = vunpack.c.l.b16 %v124
    %v692 = vunpack.c.h.b16 %v124
    %v693 = vunpack.c.l.b16 %v125
    %v694 = vunpack.c.h.b16 %v125
    %v695 = vunpack.c.l.b16 %v126
    %v696 = vunpack.c.h.b16 %v126
    %v697 = vunpack.c.l.b16 %v127
    %v698 = vunpack.c.h.b16 %v127
    %v699 = vunpack.c.l.b16 %v128
    %v700 = vunpack.c.h.b16 %v128
    %v701 = vunpack.c.l.b16 %v129
    %v702 = vunpack.c.h.b16 %v129
    %v703 = vunpack.c.l.b16 %v130
    %v704 = vunpack.c.h.b16 %v130
    %v705 = vunpack.c.l.b16 %v131
    %v706 = vunpack.c.h.b16 %v131
    %v707 = vunpack.c.l.b16 %v132
    %v708 = vunpack.c.h.b16 %v132
    %v709 = vunpack.c.l.b16 %v133
    %v710 = vunpack.c.h.b16 %v133
    %v711 = vunpack.c.l.b16 %v134
    %v712 = vunpack.c.h.b16 %v134
    %v713 = vunpack.c.l.b16 %v135
    %v714 = vunpack.c.h.b16 %v135
    %v715 = vunpack.c.l.b16 %v136
    %v716 = vunpack.c.h.b16 %v136
    %v717 = vunpack.c.l.b16 %v137
    %v718 = vunpack.c.h.b16 %v137
    %v719 = vunpack.c.l.b16 %v138
    %v720 = vunpack.c.h.b16 %v138
    %v721 = vunpack.c.l.b16 %v139
    %v722 = vunpack.c.h.b16 %v139
    %v723 = vunpack.c.l.b16 %v140
    %v724 = vunpack.c.h.b16 %v140
    %v725 = vunpack.c.l.b16 %v141
    %v726 = vunpack.c.h.b16 %v141
    %v727 = vunpack.c.l.b16 %v142
    %v728 = vunpack.c.h.b16 %v142
    %v729 = vunpack.c.l.b16 %v143
    %v730 = vunpack.c.h.b16 %v143
    %v731 = vunpack.c.l.b16 %v144
    %v732 = vunpack.c.h.b16 %v144
    %v733 = vunpack.c.l.b16 %v145
    %v734 = vunpack.c.h.b16 %v145
    %v735 = vunpack.c.l.b16 %v146
    %v736 = vunpack.c.h.b16 %v146
    %v737 = vunpack.c.l.b16 %v147
    %v738 = vunpack.c.h.b16 %v147
    %v739 = vunpack.c.l.b16 %v148
    %v740 = vunpack.c.h.b16 %v148
    %v741 = vunpack.c.l.b16 %v149
    %v742 = vunpack.c.h.b16 %v149
    %v743 = vunpack.c.l.b16 %v150
    %v744 = vunpack.c.h.b16 %v150
    %v745 = vunpack.c.l.b16 %v151
    %v746 = vunpack.c.h.b16 %v151
    %v747 = vunpack.c.l.b16 %v152
    %v748 = vunpack.c.h.b16 %v152
    %v749 = vunpack.c.l.b16 %v153
    %v750 = vunpack.c.h.b16 %v153
    %v751 = vunpack.c.l.b16 %v154
    %v752 = vunpack.c.h.b16 %v154
    %v753 = vunpack.c.l.b16 %v155
    %v754 = vunpack.c.h.b16 %v155
    %v755 = vunpack.c.l.b16 %v156
    %v756 = vunpack.c.h.b16 %v156
    %v757 = vunpack.c.l.b16 %v157
    %v758 = vunpack.c.h.b16 %v157
    %v759 = vunpack.c.l.b16 %v158
    %v760 = vunpack.c.h.b16 %v158
    %v761 = vunpack.c.l.b16 %v159
    %v762 = vunpack.c.h.b16 %v159
    %v763 = vunpack.c.l.b16 %v160
    %v764 = vunpack.c.h.b16 %v160
    %v765 = vunpack.c.l.b16 %v161
    %v766 = vunpack.c.h.b16 %v161
    %v767 = vunpack.c.l.b16 %v162
    %v768 = vunpack.c.h.b16 %v162
    %v769 = vunpack.c.l.b16 %v163
    %v770 = vunpack.c.h.b16 %v163
    %v771 = vunpack.c.l.b16 %v164
    %v772 = vunpack.c.h.b16 %v164
    %v773 = vunpack.c.l.b16 %v165
    %v774 = vunpack.c.h.b16 %v165
    %v775 = vunpack.c.l.b16 %v166
    %v776 = vunpack.c.h.b16 %v166
    %v777 = vunpack.c.l.b16 %v167
    %v778 = vunpack.c.h.b16 %v167
    %v779 = vunpack.c.l.b16 %v168
    %v780 = vunpack.c.h.b16 %v168
    %v781 = vunpack.c.l.b16 %v169
    %v782 = vunpack.c.h.b16 %v169
    %v783 = vunpack.c.l.b16 %v170
    %v784 = vunpack.c.h.b16 %v170
    %v785 = vunpack.c.l.b16 %v171
    %v786 = vunpack.c.h.b16 %v171
    %v787 = vunpack.c.l.b16 %v172
    %v788 = vunpack.c.h.b16 %v172
    %v789 = vunpack.c.l.b16 %v173
    %v790 = vunpack.c.h.b16 %v173
    %v791 = vunpack.c.l.b16 %v174
    %v792 = vunpack.c.h.b16 %v174
    %v793 = vunpack.c.l.b16 %v175
    %v794 = vunpack.c.h.b16 %v175
    %v795 = vunpack.c.l.b16 %v176
    %v796 = vunpack.c.h.b16 %v176
    %v797 = vunpack.c.l.b16 %v177
    %v798 = vunpack.c.h.b16 %v177
    %v799 = vunpack.c.l.b16 %v178
    %v800 = vunpack.c.h.b16 %v178
    %v801 = vunpack.c.l.b16 %v179
    %v802 = vunpack.c.h.b16 %v179
    %v803 = vunpack.c.l.b16 %v180
    %v804 = vunpack.c.h.b16 %v180
    %v805 = vunpack.c.l.b16 %v181
    %v806 = vunpack.c.h.b16 %v181
    %v807 = vunpack.c.l.b16 %v182
    %v808 = vunpack.c.h.b16 %v182
    %v809 = vunpack.c.l.b16 %v183
    %v810 = vunpack.c.h.b16 %v183
    %v811 = vunpack.c.l.b16 %v184
    %v812 = vunpack.c.h.b16 %v184
    %v813 = vunpack.c.l.b16 %v185
    %v814 = vunpack.c.h.b16 %v185
    %v815 = vunpack.c.l.b16 %v186
    %v816 = vunpack.c.h.b16 %v186
    %v817 = vunpack.c.l.b16 %v187
    %v818 = vunpack.c.h.b16 %v187
    %v819 = vunpack.c.l.b16 %v188
    %v820 = vunpack.c.h.b16 %v188
    %v821 = vunpack.c.l.b16 %v189
    %v822 = vunpack.c.h.b16 %v189
    %v823 = vunpack.c.l.b16 %v190
    %v824 = vunpack.c.h.b16 %v190
    %v825 = vunpack.c.l.b16 %v191
    %v826 = vunpack.c.h.b16 %v191
    %v827 = vunpack.c.l.b16 %v192
    %v828 = vunpack.c.h.b16 %v192
    %v829 = vunpack.c.l.b16 %v193
    %v830 = vunpack.c.h.b16 %v193
    %v831 = vunpack.c.l.b16 %v194
    %v832 = vunpack.c.h.b16 %v194
    %v833 = vunpack.c.l.b16 %v195
    %v834 = vunpack.c.h.b16 %v195
    %v835 = vunpack.c.l.b16 %v196
    %v836 = vunpack.c.h.b16 %v196
    %v837 = vunpack.c.l.b16 %v197
    %v838 = vunpack.c.h.b16 %v197
    %v839 = vunpack.c.l.b16 %v198
    %v840 = vunpack.c.h.b16 %v198
    %v841 = vunpack.c.l.b16 %v199
    %v842 = vunpack.c.h.b16 %v199
    %v843 = vunpack.c.l.b16 %v200
    %v844 = vunpack.c.h.b16 %v200
    %v845 = vunpack.c.l.b16 %v201
    %v846 = vunpack.c.h.b16 %v201
    %v847 = vunpack.c.l.b16 %v202
    %v848 = vunpack.c.h.b16 %v202
    %v849 = vunpack.c.l.b16 %v203
    %v850 = vunpack.c.h.b16 %v203
    %v851 = vunpack.c.l.b16 %v204
    %v852 = vunpack.c.h.b16 %v204
    %v853 = vunpack.c.l.b16 %v205
    %v854 = vunpack.c.h.b16 %v205
    %v855 = vunpack.c.l.b16 %v206
    %v856 = vunpack.c.h.b16 %v206
    %v857 = vunpack.c.l.b16 %v207
    %v858 = vunpack.c.h.b16 %v207
    %v859 = vunpack.c.l.b16 %v208
    %v860 = vunpack.c.h.b16 %v208
    %v861 = vunpack.c.l.b16 %v209
    %v862 = vunpack.c.h.b16 %v209
    %v863 = vunpack.c.l.b16 %v210
    %v864 = vunpack.c.h.b16 %v210
    %v865 = vunpack.c.l.b16 %v211
    %v866 = vunpack.c.h.b16 %v211
    %v867 = vunpack.c.l.b16 %v212
    %v868 = vunpack.c.h.b16 %v212
    %v869 = vunpack.c.l.b16 %v213
    %v870 = vunpack.c.h.b16 %v213
    %v871 = vunpack.c.l.b16 %v214
    %v872 = vunpack.c.h.b16 %v214
    %v873 = vunpack.c.l.b16 %v215
    %v874 = vunpack.c.h.b16 %v215
    %v875 = vunpack.c.l.b16 %v216
    %v876 = vunpack.c.h.b16 %v216
    %v877 = vunpack.c.l.b16 %v217
    %v878 = vunpack.c.h.b16 %v217
    %v879 = vunpack.c.l.b16 %v218
    %v880 = vunpack.c.h.b16 %v218
    %v881 = vunpack.c.l.b16 %v219
    %v882 = vunpack.c.h.b16 %v219
    %v883 = vunpack.c.l.b16 %v220
    %v884 = vunpack.c.h.b16 %v220
    %v885 = vunpack.c.l.b16 %v221
    %v886 = vunpack.c.h.b16 %v221
    %v887 = vunpack.c.l.b16 %v222
    %v888 = vunpack.c.h.b16 %v222
    %v889 = vunpack.c.l.b16 %v223
    %v890 = vunpack.c.h.b16 %v223
    %v891 = vunpack.c.l.b16 %v224
    %v892 = vunpack.c.h.b16 %v224
    %v893 = vunpack.c.l.b16 %v225
    %v894 = vunpack.c.h.b16 %v225
    %v895 = vunpack.c.l.b16 %v226
    %v896 = vunpack.c.h.b16 %v226
    %v897 = vunpack.c.l.b16 %v227
    %v898 = vunpack.c.h.b16 %v227
    %v899 = vunpack.c.l.b16 %v228
    %v900 = vunpack.c.h.b16 %v228
    %v901 = vunpack.c.l.b16 %v229
    %v902 = vunpack.c.h.b16 %v229
    %v903 = vunpack.c.l.b16 %v230
    %v904 = vunpack.c.h.b16 %v230
    %v905 = vunpack.c.l.b16 %v231
    %v906 = vunpack.c.h.b16 %v231
    %v907 = vunpack.c.l.b16 %v232
    %v908 = vunpack.c.h.b16 %v232
    %v909 = vunpack.c.l.b16 %v233
    %v910 = vunpack.c.h.b16 %v233
    %v911 = vunpack.c.l.b16 %v234
    %v912 = vunpack.c.h.b16 %v234
    %v913 = vunpack.c.l.b16 %v235
    %v914 = vunpack.c.h.b16 %v235
    %v915 = vunpack.c.l.b16 %v236
    %v916 = vunpack.c.h.b16 %v236
    %v917 = vunpack.c.l.b16 %v237
    %v918 = vunpack.c.h.b16 %v237
    %v919 = vunpack.c.l.b16 %v238
    %v920 = vunpack.c.h.b16 %v238
    %v921 = vunpack.c.l.b16 %v239
    %v922 = vunpack.c.h.b16 %v239
    %v923 = vunpack.c.l.b16 %v240
    %v924 = vunpack.c.h.b16 %v240
    %v925 = vunpack.c.l.b16 %v241
    %v926 = vunpack.c.h.b16 %v241
    %v927 = vunpack.c.l.b16 %v242
    %v928 = vunpack.c.h.b16 %v242
    %v929 = vunpack.c.l.b16 %v243
    %v930 = vunpack.c.h.b16 %v243
    %v931 = vunpack.c.l.b16 %v244
    %v932 = vunpack.c.h.b16 %v244
    %v933 = vunpack.c.l.b16 %v245
    %v934 = vunpack.c.h.b16 %v245
    %v935 = vunpack.c.l.b16 %v246
    %v936 = vunpack.c.h.b16 %v246
    %v937 = vunpack.c.l.b16 %v247
    %v938 = vunpack.c.h.b16 %v247
    %v939 = vunpack.c.l.b16 %v248
    %v940 = vunpack.c.h.b16 %v248
    %v941 = vunpack.c.l.b16 %v249
    %v942 = vunpack.c.h.b16 %v249
    %v943 = vunpack.c.l.b16 %v250
    %v944 = vunpack.c.h.b16 %v250
    %v945 = vunpack.c.l.b16 %v251
    %v946 = vunpack.c.h.b16 %v251
    %v947 = vunpack.c.l.b16 %v252
    %v948 = vunpack.c.h.b16 %v252
    %v949 = vunpack.c.l.b16 %v253
    %v950 = vunpack.c.h.b16 %v253
    %v951 = vunpack.c.l.b16 %v254
    %v952 = vunpack.c.h.b16 %v254
    %v953 = vunpack.c.l.b16 %v255
    %v954 = vunpack.c.h.b16 %v255
    %v955 = vunpack.c.l.b16 %v256
    %v956 = vunpack.c.h.b16 %v256
    %v957 = vunpack.c.l.b16 %v257
    %v958 = vunpack.c.h.b16 %v257
    %v959 = vunpack.c.l.b16 %v258
    %v960 = vunpack.c.h.b16 %v258
    %v961 = vunpack.c.l.b16 %v259
    %v962 = vunpack.c.h.b16 %v259
    %v963 = vunpack.c.l.b16 %v260
    %v964 = vunpack.c.h.b16 %v260
    %v965 = vunpack.c.l.b16 %v261
    %v966 = vunpack.c.h.b16 %v261
    %v967 = vunpack.c.l.b16 %v262
    %v968 = vunpack.c.h.b16 %v262
    %v969 = vunpack.c.l.b16 %v263
    %v970 = vunpack.c.h.b16 %v263
    %v971 = vunpack.c.l.b16 %v264
    %v972 = vunpack.c.h.b16 %v264
    %v973 = vunpack.c.l.b16 %v265
    %v974 = vunpack.c.h.b16 %v265
    %v975 = vunpack.c.l.b16 %v266
    %v976 = vunpack.c.h.b16 %v266
    %v977 = vunpack.c.l.b16 %v267
    %v978 = vunpack.c.h.b16 %v267
    %v979 = vunpack.c.l.b16 %v268
    %v980 = vunpack.c.h.b16 %v268
    %v981 = vunpack.c.l.b16 %v269
    %v982 = vunpack.c.h.b16 %v269
    %v983 = vunpack.c.l.b16 %v270
    %v984 = vunpack.c.h.b16 %v270
    %v985 = vunpack.c.l.b16 %v271
    %v986 = vunpack.c.h.b16 %v271
    %v987 = vunpack.c.l.b16 %v272
    %v988 = vunpack.c.h.b16 %v272
    %v989 = vunpack.c.l.b16 %v273
    %v990 = vunpack.c.h.b16 %v273
    %v991 = vunpack.c.l.b16 %v274
    %v992 = vunpack.c.h.b16 %v274
    %v993 = vunpack.c.l.b16 %v275
    %v994 = vunpack.c.h.b16 %v275
    %v995 = vunpack.c.l.b16 %v276
    %v996 = vunpack.c.h.b16 %v276
    %v997 = vunpack.c.l.b16 %v277
    %v998 = vunpack.c.h.b16 %v277
    %v999 = vunpack.c.l.b16 %v278
    %v1000 = vunpack.c.h.b16 %v278
    %v1001 = vunpack.c.l.b16 %v279
    %v1002 = vunpack.c.h.b16 %v279
    %v1003 = vunpack.c.l.b16 %v280
    %v1004 = vunpack.c.h.b16 %v280
    %v1005 = vunpack.c.l.b16 %v281
    %v1006 = vunpack.c.h.b16 %v281
    %v1007 = vunpack.c.l.b16 %v282
    %v1008 = vunpack.c.h.b16 %v282
    %v1009 = vunpack.c.l.b16 %v283
    %v1010 = vunpack.c.h.b16 %v283
    %v1011 = vunpack.c.l.b16 %v284
    %v1012 = vunpack.c.h.b16 %v284
    %v1013 = vunpack.c.l.b16 %v285
    %v1014 = vunpack.c.h.b16 %v285
    %v1015 = vunpack.c.l.b16 %v286
    %v1016 = vunpack.c.h.b16 %v286
    %v1017 = vunpack.c.l.b16 %v287
    %v1018 = vunpack.c.h.b16 %v287
    %v1019 = vunpack.c.l.b16 %v288
    %v1020 = vunpack.c.h.b16 %v288
    %v1021 = vunpack.c.l.b16 %v289
    %v1022 = vunpack.c.h.b16 %v289
    %v1023 = vunpack.c.l.b16 %v290
    %v1024 = vunpack.c.h.b16 %v290
    %v1025 = vunpack.c.l.b16 %v291
    %v1026 = vunpack.c.h.b16 %v291
    %v1027 = vunpack.c.l.b16 %v292
    %v1028 = vunpack.c.h.b16 %v292
    %v1029 = vunpack.c.l.b16 %v293
    %v1030 = vunpack.c.h.b16 %v293
    %v1031 = vunpack.c.l.b16 %v294
    %v1032 = vunpack.c.h.b16 %v294
    %v1033 = vunpack.c.l.b16 %v295
    %v1034 = vunpack.c.h.b16 %v295
    %v1035 = vunpack.c.l.b16 %v296
    %v1036 = vunpack.c.h.b16 %v296
    %v1037 = vunpack.c.l.b16 %v297
    %v1038 = vunpack.c.h.b16 %v297
    %v1039 = vunpack.c.l.b16 %v298
    %v1040 = vunpack.c.h.b16 %v298
    %v1041 = vunpack.c.l.b16 %v299
    %v1042 = vunpack.c.h.b16 %v299
    %v1043 = vunpack.c.l.b16 %v300
    %v1044 = vunpack.c.h.b16 %v300
    %v1045 = vunpack.c.l.b16 %v301
    %v1046 = vunpack.c.h.b16 %v301
    %v1047 = vunpack.c.l.b16 %v302
    %v1048 = vunpack.c.h.b16 %v302
    %v1049 = vunpack.c.l.b16 %v303
    %v1050 = vunpack.c.h.b16 %v303
    %v1051 = vunpack.c.l.b16 %v304
    %v1052 = vunpack.c.h.b16 %v304
    %v1053 = vunpack.c.l.b16 %v305
    %v1054 = vunpack.c.h.b16 %v305
    %v1055 = vunpack.c.l.b16 %v306
    %v1056 = vunpack.c.h.b16 %v306
    %v1057 = vunpack.c.l.b16 %v307
    %v1058 = vunpack.c.h.b16 %v307
    %v1059 = vunpack.c.l.b16 %v308
    %v1060 = vunpack.c.h.b16 %v308
    %v1061 = vunpack.c.l.b16 %v309
    %v1062 = vunpack.c.h.b16 %v309
    %v1063 = vunpack.c.l.b16 %v310
    %v1064 = vunpack.c.h.b16 %v310
    %v1065 = vunpack.c.l.b16 %v311
    %v1066 = vunpack.c.h.b16 %v311
    %v1067 = vunpack.c.l.b16 %v312
    %v1068 = vunpack.c.h.b16 %v312
    %v1069 = vunpack.c.l.b16 %v313
    %v1070 = vunpack.c.h.b16 %v313
    %v1071 = vunpack.c.l.b16 %v314
    %v1072 = vunpack.c.h.b16 %v314
    %v1073 = vunpack.c.l.b16 %v315
    %v1074 = vunpack.c.h.b16 %v315
    %v1075 = vunpack.c.l.b16 %v316
    %v1076 = vunpack.c.h.b16 %v316
    %v1077 = vunpack.c.l.b16 %v317
    %v1078 = vunpack.c.h.b16 %v317
    %v1079 = vunpack.c.l.b16 %v318
    %v1080 = vunpack.c.h.b16 %v318
    %v1081 = vunpack.c.l.b16 %v319
    %v1082 = vunpack.c.h.b16 %v319
    %v1083 = vunpack.c.l.b16 %v320
    %v1084 = vunpack.c.h.b16 %v320
    %v1085 = vunpack.c.l.b16 %v321
    %v1086 = vunpack.c.h.b16 %v321
    %v1087 = vunpack.c.l.b16 %v322
    %v1088 = vunpack.c.h.b16 %v322
    %v1089 = vunpack.c.l.b16 %v323
    %v1090 = vunpack.c.h.b16 %v323
    %v1091 = vunpack.c.l.b16 %v324
    %v1092 = vunpack.c.h.b16 %v324
    %v1093 = vunpack.c.l.b16 %v325
    %v1094 = vunpack.c.h.b16 %v325
    %v1095 = vunpack.c.l.b16 %v326
    %v1096 = vunpack.c.h.b16 %v326
    %v1097 = vunpack.c.l.b16 %v327
    %v1098 = vunpack.c.h.b16 %v327
    %v1099 = vunpack.c.l.b16 %v328
    %v1100 = vunpack.c.h.b16 %v328
    %v1101 = vunpack.c.l.b16 %v329
    %v1102 = vunpack.c.h.b16 %v329
    %v1103 = vunpack.c.l.b16 %v330
    %v1104 = vunpack.c.h.b16 %v330
    %v1105 = vunpack.c.l.b16 %v331
    %v1106 = vunpack.c.h.b16 %v331
    %v1107 = vunpack.c.l.b16 %v332
    %v1108 = vunpack.c.h.b16 %v332
    %v1109 = vunpack.c.l.b16 %v333
    %v1110 = vunpack.c.h.b16 %v333
    %v1111 = vunpack.c.l.b16 %v334
    %v1112 = vunpack.c.h.b16 %v334
    %v1113 = vunpack.c.l.b16 %v335
    %v1114 = vunpack.c.h.b16 %v335
    %v1115 = vunpack.c.l.b16 %v336
    %v1116 = vunpack.c.h.b16 %v336
    %v1117 = vunpack.c.l.b16 %v337
    %v1118 = vunpack.c.h.b16 %v337
    %v1119 = vunpack.c.l.b16 %v338
    %v1120 = vunpack.c.h.b16 %v338
    %v1121 = vunpack.c.l.b16 %v339
    %v1122 = vunpack.c.h.b16 %v339
    %v1123 = vunpack.c.l.b16 %v340
    %v1124 = vunpack.c.h.b16 %v340
    %v1125 = vpack.c.b16 %v617, %v613
    %v1126 = vpack.c.b16 %v618, %v614
    %v1127 = vpack.c.b16 %v619, %v615
    %v1128 = vpack.c.b16 %v620, %v616
    %v1129 = vpack.c.b16 %v625, %v621
    %v1130 = vpack.c.b16 %v626, %v622
    %v1131 = vpack.c.b16 %v627, %v623
    %v1132 = vpack.c.b16 %v628, %v624
    %v1133 = vpack.c.b16 %v633, %v629
    %v1134 = vpack.c.b16 %v634, %v630
    %v1135 = vpack.c.b16 %v635, %v631
    %v1136 = vpack.c.b16 %v636, %v632
    %v1137 = vpack.c.b16 %v641, %v637
    %v1138 = vpack.c.b16 %v642, %v638
    %v1139 = vpack.c.b16 %v643, %v639
    %v1140 = vpack.c.b16 %v644, %v640
    %v1141 = vpack.c.b16 %v649, %v645
    %v1142 = vpack.c.b16 %v650, %v646
    %v1143 = vpack.c.b16 %v651, %v647
    %v1144 = vpack.c.b16 %v652, %v648
    %v1145 = vpack.c.b16 %v657, %v653
    %v1146 = vpack.c.b16 %v658, %v654
    %v1147 = vpack.c.b16 %v659, %v655
    %v1148 = vpack.c.b16 %v660, %v656
    %v1149 = vpack.c.b16 %v665, %v661
    %v1150 = vpack.c.b16 %v666, %v662
    %v1151 = vpack.c.b16 %v667, %v663
    %v1152 = vpack.c.b16 %v668, %v664
    %v1153 = vpack.c.b16 %v673, %v669
    %v1154 = vpack.c.b16 %v674, %v670
    %v1155 = vpack.c.b16 %v675, %v671
    %v1156 = vpack.c.b16 %v676, %v672
    %v1157 = vpack.c.b16 %v681, %v677
    %v1158 = vpack.c.b16 %v682, %v678
    %v1159 = vpack.c.b16 %v683, %v679
    %v1160 = vpack.c.b16 %v684, %v680
    %v1161 = vpack.c.b16 %v689, %v685
    %v1162 = vpack.c.b16 %v690, %v686
    %v1163 = vpack.c.b16 %v691, %v687
    %v1164 = vpack.c.b16 %v692, %v688
    %v1165 = vpack.c.b16 %v697, %v693
    %v1166 = vpack.c.b16 %v698, %v694
    %v1167 = vpack.c.b16 %v699, %v695
    %v1168 = vpack.c.b16 %v700, %v696
    %v1169 = vpack.c.b16 %v705, %v701
    %v1170 = vpack.c.b16 %v706, %v702
    %v1171 = vpack.c.b16 %v707, %v703
    %v1172 = vpack.c.b16 %v708, %v704
    %v1173 = vpack.c.b16 %v713, %v709
    %v1174 = vpack.c.b16 %v714, %v710
    %v1175 = vpack.c.b16 %v715, %v711
    %v1176 = vpack.c.b16 %v716, %v712
    %v1177 = vpack.c.b16 %v721, %v717
    %v1178 = vpack.c.b16 %v722, %v718
    %v1179 = vpack.c.b16 %v723, %v719
    %v1180 = vpack.c.b16 %v724, %v720
    %v1181 = vpack.c.b16 %v729, %v725
    %v1182 = vpack.c.b16 %v730, %v726
    %v1183 = vpack.c.b16 %v731, %v727
    %v1184 = vpack.c.b16 %v732, %v728
    %v1185 = vpack.c.b16 %v737, %v733
    %v1186 = vpack.c.b16 %v738, %v734
    %v1187 = vpack.c.b16 %v739, %v735
    %v1188 = vpack.c.b16 %v740, %v736
    %v1189 = vpack.c.b16 %v745, %v741
    %v1190 = vpack.c.b16 %v746, %v742
    %v1191 = vpack.c.b16 %v747, %v743
    %v1192 = vpack.c.b16 %v748, %v744
    %v1193 = vpack.c.b16 %v753, %v749
    %v1194 = vpack.c.b16 %v754, %v750
    %v1195 = vpack.c.b16 %v755, %v751
    %v1196 = vpack.c.b16 %v756, %v752
    %v1197 = vpack.c.b16 %v761, %v757
    %v1198 = vpack.c.b16 %v762, %v758
    %v1199 = vpack.c.b16 %v763, %v759
    %v1200 = vpack.c.b16 %v764, %v760
    %v1201 = vpack.c.b16 %v769, %v765
    %v1202 = vpack.c.b16 %v770, %v766
    %v1203 = vpack.c.b16 %v771, %v767
    %v1204 = vpack.c.b16 %v772, %v768
    %v1205 = vpack.c.b16 %v777, %v773
    %v1206 = vpack.c.b16 %v778, %v774
    %v1207 = vpack.c.b16 %v779, %v775
    %v1208 = vpack.c.b16 %v780, %v776
    %v1209 = vpack.c.b16 %v785, %v781
    %v1210 = vpack.c.b16 %v786, %v782
    %v1211 = vpack.c.b16 %v787, %v783
    %v1212 = vpack.c.b16 %v788, %v784
    %v1213 = vpack.c.b16 %v793, %v789
    %v1214 = vpack.c.b16 %v794, %v790
    %v1215 = vpack.c.b16 %v795, %v791
    %v1216 = vpack.c.b16 %v796, %v792
    %v1217 = vpack.c.b16 %v801, %v797
    %v1218 = vpack.c.b16 %v802, %v798
    %v1219 = vpack.c.b16 %v803, %v799
    %v1220 = vpack.c.b16 %v804, %v800
    %v1221 = vpack.c.b16 %v809, %v805
    %v1222 = vpack.c.b16 %v810, %v806
    %v1223 = vpack.c.b16 %v811, %v807
    %v1224 = vpack.c.b16 %v812, %v808
    %v1225 = vpack.c.b16 %v817, %v813
    %v1226 = vpack.c.b16 %v818, %v814
    %v1227 = vpack.c.b16 %v819, %v815
    %v1228 = vpack.c.b16 %v820, %v816
    %v1229 = vpack.c.b16 %v825, %v821
    %v1230 = vpack.c.b16 %v826, %v822
    %v1231 = vpack.c.b16 %v827, %v823
    %v1232 = vpack.c.b16 %v828, %v824
    %v1233 = vpack.c.b16 %v833, %v829
    %v1234 = vpack.c.b16 %v834, %v830
    %v1235 = vpack.c.b16 %v835, %v831
    %v1236 = vpack.c.b16 %v836, %v832
    %v1237 = vpack.c.b16 %v841, %v837
    %v1238 = vpack.c.b16 %v842, %v838
    %v1239 = vpack.c.b16 %v843, %v839
    %v1240 = vpack.c.b16 %v844, %v840
    %v1241 = vpack.c.b16 %v849, %v845
    %v1242 = vpack.c.b16 %v850, %v846
    %v1243 = vpack.c.b16 %v851, %v847
    %v1244 = vpack.c.b16 %v852, %v848
    %v1245 = vpack.c.b16 %v857, %v853
    %v1246 = vpack.c.b16 %v858, %v854
    %v1247 = vpack.c.b16 %v859, %v855
    %v1248 = vpack.c.b16 %v860, %v856
    %v1249 = vpack.c.b16 %v865, %v861
    %v1250 = vpack.c.b16 %v866, %v862
    %v1251 = vpack.c.b16 %v867, %v863
    %v1252 = vpack.c.b16 %v868, %v864
    %v1253 = vpack.c.b16 %v873, %v869
    %v1254 = vpack.c.b16 %v874, %v870
    %v1255 = vpack.c.b16 %v875, %v871
    %v1256 = vpack.c.b16 %v876, %v872
    %v1257 = vpack.c.b16 %v881, %v877
    %v1258 = vpack.c.b16 %v882, %v878
    %v1259 = vpack.c.b16 %v883, %v879
    %v1260 = vpack.c.b16 %v884, %v880
    %v1261 = vpack.c.b16 %v889, %v885
    %v1262 = vpack.c.b16 %v890, %v886
    %v1263 = vpack.c.b16 %v891, %v887
    %v1264 = vpack.c.b16 %v892, %v888
    %v1265 = vpack.c.b16 %v897, %v893
    %v1266 = vpack.c.b16 %v898, %v894
    %v1267 = vpack.c.b16 %v899, %v895
    %v1268 = vpack.c.b16 %v900, %v896
    %v1269 = vpack.c.b16 %v905, %v901
    %v1270 = vpack.c.b16 %v906, %v902
    %v1271 = vpack.c.b16 %v907, %v903
    %v1272 = vpack.c.b16 %v908, %v904
    %v1273 = vpack.c.b16 %v913, %v909
    %v1274 = vpack.c.b16 %v914, %v910
    %v1275 = vpack.c.b16 %v915, %v911
    %v1276 = vpack.c.b16 %v916, %v912
    %v1277 = vpack.c.b16 %v921, %v917
    %v1278 = vpack.c.b16 %v922, %v918
    %v1279 = vpack.c.b16 %v923, %v919
    %v1280 = vpack.c.b16 %v924, %v920
    %v1281 = vpack.c.b16 %v929, %v925
    %v1282 = vpack.c.b16 %v930, %v926
    %v1283 = vpack.c.b16 %v931, %v927
    %v1284 = vpack.c.b16 %v932, %v928
    %v1285 = vpack.c.b16 %v937, %v933
    %v1286 = vpack.c.b16 %v938, %v934
    %v1287 = vpack.c.b16 %v939, %v935
    %v1288 = vpack.c.b16 %v940, %v936
    %v1289 = vpack.c.b16 %v945, %v941
    %v1290 = vpack.c.b16 %v946, %v942
    %v1291 = vpack.c.b16 %v947, %v943
    %v1292 = vpack.c.b16 %v948, %v944
    %v1293 = vpack.c.b16 %v953, %v949
    %v1294 = vpack.c.b16 %v954, %v950
    %v1295 = vpack.c.b16 %v955, %v951
    %v1296 = vpack.c.b16 %v956, %v952
    %v1297 = vpack.c.b16 %v961, %v957
    %v1298 = vpack.c.b16 %v962, %v958
    %v1299 = vpack.c.b16 %v963, %v959
    %v1300 = vpack.c.b16 %v964, %v960
    %v1301 = vpack.c.b16 %v969, %v965
    %v1302 = vpack.c.b16 %v970, %v966
    %v1303 = vpack.c.b16 %v971, %v967
    %v1304 = vpack.c.b16 %v972, %v968
    %v1305 = vpack.c.b16 %v977, %v973
    %v1306 = vpack.c.b16 %v978, %v974
    %v1307 = vpack.c.b16 %v979, %v975
    %v1308 = vpack.c.b16 %v980, %v976
    %v1309 = vpack.c.b16 %v985, %v981
    %v1310 = vpack.c.b16 %v986, %v982
    %v1311 = vpack.c.b16 %v987, %v983
    %v1312 = vpack.c.b16 %v988, %v984
    %v1313 = vpack.c.b16 %v993, %v989
    %v1314 = vpack.c.b16 %v994, %v990
    %v1315 = vpack.c.b16 %v995, %v991
    %v1316 = vpack.c.b16 %v996, %v992
    %v1317 = vpack.c.b16 %v1001, %v997
    %v1318 = vpack.c.b16 %v1002, %v998
    %v1319 = vpack.c.b16 %v1003, %v999
    %v1320 = vpack.c.b16 %v1004, %v1000
    %v1321 = vpack.c.b16 %v1009, %v1005
    %v1322 = vpack.c.b16 %v1010, %v1006
    %v1323 = vpack.c.b16 %v1011, %v1007
    %v1324 = vpack.c.b16 %v1012, %v1008
    %v1325 = vpack.c.b16 %v1017, %v1013
    %v1326 = vpack.c.b16 %v1018, %v1014
    %v1327 = vpack.c.b16 %v1019, %v1015
    %v1328 = vpack.c.b16 %v1020, %v1016
    %v1329 = vpack.c.b16 %v1025, %v1021
    %v1330 = vpack.c.b16 %v1026, %v1022
    %v1331 = vpack.c.b16 %v1027, %v1023
    %v1332 = vpack.c.b16 %v1028, %v1024
    %v1333 = vpack.c.b16 %v1033, %v1029
    %v1334 = vpack.c.b16 %v1034, %v1030
    %v1335 = vpack.c.b16 %v1035, %v1031
    %v1336 = vpack.c.b16 %v1036, %v1032
    %v1337 = vpack.c.b16 %v1041, %v1037
    %v1338 = vpack.c.b16 %v1042, %v1038
    %v1339 = vpack.c.b16 %v1043, %v1039
    %v1340 = vpack.c.b16 %v1044, %v1040
    %v1341 = vpack.c.b16 %v1049, %v1045
    %v1342 = vpack.c.b16 %v1050, %v1046
    %v1343 = vpack.c.b16 %v1051, %v1047
    %v1344 = vpack.c.b16 %v1052, %v1048
    %v1345 = vpack.c.b16 %v1057, %v1053
    %v1346 = vpack.c.b16 %v1058, %v1054
    %v1347 = vpack.c.b16 %v1059, %v1055
    %v1348 = vpack.c.b16 %v1060, %v1056
    %v1349 = vpack.c.b16 %v1065, %v1061
    %v1350 = vpack.c.b16 %v1066, %v1062
    %v1351 = vpack.c.b16 %v1067, %v1063
    %v1352 = vpack.c.b16 %v1068, %v1064
    %v1353 = vpack.c.b16 %v1073, %v1069
    %v1354 = vpack.c.b16 %v1074, %v1070
    %v1355 = vpack.c.b16 %v1075, %v1071
    %v1356 = vpack.c.b16 %v1076, %v1072
    %v1357 = vpack.c.b16 %v1081, %v1077
    %v1358 = vpack.c.b16 %v1082, %v1078
    %v1359 = vpack.c.b16 %v1083, %v1079
    %v1360 = vpack.c.b16 %v1084, %v1080
    %v1361 = vpack.c.b16 %v1089, %v1085
    %v1362 = vpack.c.b16 %v1090, %v1086
    %v1363 = vpack.c.b16 %v1091, %v1087
    %v1364 = vpack.c.b16 %v1092, %v1088
    %v1365 = vpack.c.b16 %v1097, %v1093
    %v1366 = vpack.c.b16 %v1098, %v1094
    %v1367 = vpack.c.b16 %v1099, %v1095
    %v1368 = vpack.c.b16 %v1100, %v1096
    %v1369 = vpack.c.b16 %v1105, %v1101
    %v1370 = vpack.c.b16 %v1106, %v1102
    %v1371 = vpack.c.b16 %v1107, %v1103
    %v1372 = vpack.c.b16 %v1108, %v1104
    %v1373 = vpack.c.b16 %v1113, %v1109
    %v1374 = vpack.c.b16 %v1114, %v1110
    %v1375 = vpack.c.b16 %v1115, %v1111
    %v1376 = vpack.c.b16 %v1116, %v1112
    %v1377 = vpack.c.b16 %v1121, %v1117
    %v1378 = vpack.c.b16 %v1122, %v1118
    %v1379 = vpack.c.b16 %v1123, %v1119
    %v1380 = vpack.c.b16 %v1124, %v1120
    %1637 = vmatprep.subr.bf16.mxu0 %v1126
    %1638 = vmatpush1.bf16.msra.mxu0 %v1125
    %1639 = vmatprep.subr.bf16.mxu0 %v1130
    %1640 = vmatpush1.bf16.msra.mxu0 %v1129
    %1641 = vmatprep.subr.bf16.mxu0 %v1134
    %1642 = vmatpush1.bf16.msra.mxu0 %v1133
    %1643 = vmatprep.subr.bf16.mxu0 %v1138
    %1644 = vmatpush1.bf16.msra.mxu0 %v1137
    %1645 = vmatprep.subr.bf16.mxu0 %v1142
    %1646 = vmatpush1.bf16.msra.mxu0 %v1141
    %1647 = vmatprep.subr.bf16.mxu0 %v1146
    %1648 = vmatpush1.bf16.msra.mxu0 %v1145
    %1649 = vmatprep.subr.bf16.mxu0 %v1150
    %1650 = vmatpush1.bf16.msra.mxu0 %v1149
    %1651 = vmatprep.subr.bf16.mxu0 %v1154
    %1652 = vmatpush1.bf16.msra.mxu0 %v1153
    %1653 = vmatprep.subr.bf16.mxu0 %v1158
    %1654 = vmatpush1.bf16.msra.mxu0 %v1157
    %1655 = vmatprep.subr.bf16.mxu0 %v1162
    %1656 = vmatpush1.bf16.msra.mxu0 %v1161
    %1657 = vmatprep.subr.bf16.mxu0 %v1166
    %1658 = vmatpush1.bf16.msra.mxu0 %v1165
    %1659 = vmatprep.subr.bf16.mxu0 %v1170
    %1660 = vmatpush1.bf16.msra.mxu0 %v1169
    %1661 = vmatprep.subr.bf16.mxu0 %v1174
    %1662 = vmatpush1.bf16.msra.mxu0 %v1173
    %1663 = vmatprep.subr.bf16.mxu0 %v1178
    %1664 = vmatpush1.bf16.msra.mxu0 %v1177
    %1665 = vmatprep.subr.bf16.mxu0 %v1182
    %1666 = vmatpush1.bf16.msra.mxu0 %v1181
    %1667 = vmatprep.subr.bf16.mxu0 %v1186
    %1668 = vmatpush1.bf16.msra.mxu0 %v1185
    %1669 = vmatprep.mubr.bf16.mxu0 %v78
    %1670 = vmatmul.mubr.bf16.gmra.mrb[0].mxu0 %v77
    %v1671 = vpop.f32.mrb[0].mxu0
    %v1672 = vadd.f32 %v344, %v1671
    %v1673 = vpop.f32.mrb[0].mxu0
    %v1674 = vadd.f32 %v348, %v1673
    %v1675 = vpop.f32.mrb[0].mxu0
    %v1676 = vpop.f32.mrb[0].mxu0
    %1677 = vdwg.mxu0
    %1678 = vmatprep.subr.bf16.mxu0 %v1190
    %1679 = vmatpush1.bf16.msra.mxu0 %v1189
    %1680 = vmatprep.subr.bf16.mxu0 %v1194
    %1681 = vmatpush1.bf16.msra.mxu0 %v1193
    %1682 = vmatprep.subr.bf16.mxu0 %v1198
    %1683 = vmatpush1.bf16.msra.mxu0 %v1197
    %1684 = vmatprep.subr.bf16.mxu0 %v1202
    %1685 = vmatpush1.bf16.msra.mxu0 %v1201
    %1686 = vmatprep.subr.bf16.mxu0 %v1206
    %1687 = vmatpush1.bf16.msra.mxu0 %v1205
    %1688 = vmatprep.subr.bf16.mxu0 %v1210
    %1689 = vmatpush1.bf16.msra.mxu0 %v1209
    %1690 = vmatprep.subr.bf16.mxu0 %v1214
    %1691 = vmatpush1.bf16.msra.mxu0 %v1213
    %1692 = vmatprep.subr.bf16.mxu0 %v1218
    %1693 = vmatpush1.bf16.msra.mxu0 %v1217
    %1694 = vmatprep.subr.bf16.mxu0 %v1222
    %1695 = vmatpush1.bf16.msra.mxu0 %v1221
    %1696 = vmatprep.subr.bf16.mxu0 %v1226
    %1697 = vmatpush1.bf16.msra.mxu0 %v1225
    %1698 = vmatprep.subr.bf16.mxu0 %v1230
    %1699 = vmatpush1.bf16.msra.mxu0 %v1229
    %1700 = vmatprep.subr.bf16.mxu0 %v1234
    %1701 = vmatpush1.bf16.msra.mxu0 %v1233
    %1702 = vmatprep.subr.bf16.mxu0 %v1238
    %1703 = vmatpush1.bf16.msra.mxu0 %v1237
    %1704 = vmatprep.subr.bf16.mxu0 %v1242
    %1705 = vmatpush1.bf16.msra.mxu0 %v1241
    %1706 = vmatprep.subr.bf16.mxu0 %v1246
    %1707 = vmatpush1.bf16.msra.mxu0 %v1245
    %1708 = vmatprep.subr.bf16.mxu0 %v1250
    %1709 = vmatpush1.bf16.msra.mxu0 %v1249
    %1710 = vmatprep.mubr.bf16.mxu0 %v80
    %1711 = vmatmul.mubr.bf16.gmra.mrb[0].mxu0 %v79
    %v1712 = vpop.f32.mrb[0].mxu0
    %v1713 = vadd.f32 %v1672, %v1712
    %v1714 = vpop.f32.mrb[0].mxu0
    %v1715 = vadd.f32 %v1674, %v1714
    %v1716 = vpop.f32.mrb[0].mxu0
    %v1717 = vpop.f32.mrb[0].mxu0
    %1718 = vdwg.mxu0
    %1719 = vmatprep.subr.bf16.mxu0 %v1254
    %1720 = vmatpush1.bf16.msra.mxu0 %v1253
    %1721 = vmatprep.subr.bf16.mxu0 %v1258
    %1722 = vmatpush1.bf16.msra.mxu0 %v1257
    %1723 = vmatprep.subr.bf16.mxu0 %v1262
    %1724 = vmatpush1.bf16.msra.mxu0 %v1261
    %1725 = vmatprep.subr.bf16.mxu0 %v1266
    %1726 = vmatpush1.bf16.msra.mxu0 %v1265
    %1727 = vmatprep.subr.bf16.mxu0 %v1270
    %1728 = vmatpush1.bf16.msra.mxu0 %v1269
    %1729 = vmatprep.subr.bf16.mxu0 %v1274
    %1730 = vmatpush1.bf16.msra.mxu0 %v1273
    %1731 = vmatprep.subr.bf16.mxu0 %v1278
    %1732 = vmatpush1.bf16.msra.mxu0 %v1277
    %1733 = vmatprep.subr.bf16.mxu0 %v1282
    %1734 = vmatpush1.bf16.msra.mxu0 %v1281
    %1735 = vmatprep.subr.bf16.mxu0 %v1286
    %1736 = vmatpush1.bf16.msra.mxu0 %v1285
    %1737 = vmatprep.subr.bf16.mxu0 %v1290
    %1738 = vmatpush1.bf16.msra.mxu0 %v1289
    %1739 = vmatprep.subr.bf16.mxu0 %v1294
    %1740 = vmatpush1.bf16.msra.mxu0 %v1293
    %1741 = vmatprep.subr.bf16.mxu0 %v1298
    %1742 = vmatpush1.bf16.msra.mxu0 %v1297
    %1743 = vmatprep.subr.bf16.mxu0 %v1302
    %1744 = vmatpush1.bf16.msra.mxu0 %v1301
    %1745 = vmatprep.subr.bf16.mxu0 %v1306
    %1746 = vmatpush1.bf16.msra.mxu0 %v1305
    %1747 = vmatprep.subr.bf16.mxu0 %v1310
    %1748 = vmatpush1.bf16.msra.mxu0 %v1309
    %1749 = vmatprep.subr.bf16.mxu0 %v1314
    %1750 = vmatpush1.bf16.msra.mxu0 %v1313
    %1751 = vmatprep.mubr.bf16.mxu0 %v82
    %1752 = vmatmul.mubr.bf16.gmra.mrb[0].mxu0 %v81
    %v1753 = vpop.f32.mrb[0].mxu0
    %v1754 = vadd.f32 %v1713, %v1753
    %v1755 = vpop.f32.mrb[0].mxu0
    %v1756 = vadd.f32 %v1715, %v1755
    %v1757 = vpop.f32.mrb[0].mxu0
    %v1758 = vpop.f32.mrb[0].mxu0
    %1759 = vdwg.mxu0
    %1760 = vmatprep.subr.bf16.mxu0 %v1318
    %1761 = vmatpush1.bf16.msra.mxu0 %v1317
    %1762 = vmatprep.subr.bf16.mxu0 %v1322
    %1763 = vmatpush1.bf16.msra.mxu0 %v1321
    %1764 = vmatprep.subr.bf16.mxu0 %v1326
    %1765 = vmatpush1.bf16.msra.mxu0 %v1325
    %1766 = vmatprep.subr.bf16.mxu0 %v1330
    %1767 = vmatpush1.bf16.msra.mxu0 %v1329
    %1768 = vmatprep.subr.bf16.mxu0 %v1334
    %1769 = vmatpush1.bf16.msra.mxu0 %v1333
    %1770 = vmatprep.subr.bf16.mxu0 %v1338
    %1771 = vmatpush1.bf16.msra.mxu0 %v1337
    %1772 = vmatprep.subr.bf16.mxu0 %v1342
    %1773 = vmatpush1.bf16.msra.mxu0 %v1341
    %1774 = vmatprep.subr.bf16.mxu0 %v1346
    %1775 = vmatpush1.bf16.msra.mxu0 %v1345
    %1776 = vmatprep.subr.bf16.mxu0 %v1350
    %1777 = vmatpush1.bf16.msra.mxu0 %v1349
    %1778 = vmatprep.subr.bf16.mxu0 %v1354
    %1779 = vmatpush1.bf16.msra.mxu0 %v1353
    %1780 = vmatprep.subr.bf16.mxu0 %v1358
    %1781 = vmatpush1.bf16.msra.mxu0 %v1357
    %1782 = vmatprep.subr.bf16.mxu0 %v1362
    %1783 = vmatpush1.bf16.msra.mxu0 %v1361
    %1784 = vmatprep.subr.bf16.mxu0 %v1366
    %1785 = vmatpush1.bf16.msra.mxu0 %v1365
    %1786 = vmatprep.subr.bf16.mxu0 %v1370
    %1787 = vmatpush1.bf16.msra.mxu0 %v1369
    %1788 = vmatprep.subr.bf16.mxu0 %v1374
    %1789 = vmatpush1.bf16.msra.mxu0 %v1373
    %1790 = vmatprep.subr.bf16.mxu0 %v1378
    %1791 = vmatpush1.bf16.msra.mxu0 %v1377
    %1792 = vmatprep.mubr.bf16.mxu0 %v84
    %1793 = vmatmul.mubr.bf16.gmra.mrb[0].mxu0 %v83
    %v1794 = vpop.f32.mrb[0].mxu0
    %v1795 = vadd.f32 %v1754, %v1794
    %v1796 = vpop.f32.mrb[0].mxu0
    %v1797 = vadd.f32 %v1756, %v1796
    %v1798 = vpop.f32.mrb[0].mxu0
    %v1799 = vpop.f32.mrb[0].mxu0
    %1800 = vdwg.mxu0
    %1801 = vmatprep.subr.bf16.mxu0 %v1128
    %1802 = vmatpush1.bf16.msra.mxu0 %v1127
    %1803 = vmatprep.subr.bf16.mxu0 %v1132
    %1804 = vmatpush1.bf16.msra.mxu0 %v1131
    %1805 = vmatprep.subr.bf16.mxu0 %v1136
    %1806 = vmatpush1.bf16.msra.mxu0 %v1135
    %1807 = vmatprep.subr.bf16.mxu0 %v1140
    %1808 = vmatpush1.bf16.msra.mxu0 %v1139
    %1809 = vmatprep.subr.bf16.mxu0 %v1144
    %1810 = vmatpush1.bf16.msra.mxu0 %v1143
    %1811 = vmatprep.subr.bf16.mxu0 %v1148
    %1812 = vmatpush1.bf16.msra.mxu0 %v1147
    %1813 = vmatprep.subr.bf16.mxu0 %v1152
    %1814 = vmatpush1.bf16.msra.mxu0 %v1151
    %1815 = vmatprep.subr.bf16.mxu0 %v1156
    %1816 = vmatpush1.bf16.msra.mxu0 %v1155
    %1817 = vmatprep.subr.bf16.mxu0 %v1160
    %1818 = vmatpush1.bf16.msra.mxu0 %v1159
    %1819 = vmatprep.subr.bf16.mxu0 %v1164
    %1820 = vmatpush1.bf16.msra.mxu0 %v1163
    %1821 = vmatprep.subr.bf16.mxu0 %v1168
    %1822 = vmatpush1.bf16.msra.mxu0 %v1167
    %1823 = vmatprep.subr.bf16.mxu0 %v1172
    %1824 = vmatpush1.bf16.msra.mxu0 %v1171
    %1825 = vmatprep.subr.bf16.mxu0 %v1176
    %1826 = vmatpush1.bf16.msra.mxu0 %v1175
    %1827 = vmatprep.subr.bf16.mxu0 %v1180
    %1828 = vmatpush1.bf16.msra.mxu0 %v1179
    %1829 = vmatprep.subr.bf16.mxu0 %v1184
    %1830 = vmatpush1.bf16.msra.mxu0 %v1183
    %1831 = vmatprep.subr.bf16.mxu0 %v1188
    %1832 = vmatpush1.bf16.msra.mxu0 %v1187
    %1833 = vmatprep.mubr.bf16.mxu0 %v78
    %1834 = vmatmul.mubr.bf16.gmra.mrb[0].mxu0 %v77
    %v1835 = vpop.f32.mrb[0].mxu0
    %v1836 = vadd.f32 %v352, %v1835
    %v1837 = vpop.f32.mrb[0].mxu0
    %v1838 = vadd.f32 %v356, %v1837
    %v1839 = vpop.f32.mrb[0].mxu0
    %v1840 = vpop.f32.mrb[0].mxu0
    %1841 = vdwg.mxu0
    %1842 = vmatprep.subr.bf16.mxu0 %v1192
    %1843 = vmatpush1.bf16.msra.mxu0 %v1191
    %1844 = vmatprep.subr.bf16.mxu0 %v1196
    %1845 = vmatpush1.bf16.msra.mxu0 %v1195
    %1846 = vmatprep.subr.bf16.mxu0 %v1200
    %1847 = vmatpush1.bf16.msra.mxu0 %v1199
    %1848 = vmatprep.subr.bf16.mxu0 %v1204
    %1849 = vmatpush1.bf16.msra.mxu0 %v1203
    %1850 = vmatprep.subr.bf16.mxu0 %v1208
    %1851 = vmatpush1.bf16.msra.mxu0 %v1207
    %1852 = vmatprep.subr.bf16.mxu0 %v1212
    %1853 = vmatpush1.bf16.msra.mxu0 %v1211
    %1854 = vmatprep.subr.bf16.mxu0 %v1216
    %1855 = vmatpush1.bf16.msra.mxu0 %v1215
    %1856 = vmatprep.subr.bf16.mxu0 %v1220
    %1857 = vmatpush1.bf16.msra.mxu0 %v1219
    %1858 = vmatprep.subr.bf16.mxu0 %v1224
    %1859 = vmatpush1.bf16.msra.mxu0 %v1223
    %1860 = vmatprep.subr.bf16.mxu0 %v1228
    %1861 = vmatpush1.bf16.msra.mxu0 %v1227
    %1862 = vmatprep.subr.bf16.mxu0 %v1232
    %1863 = vmatpush1.bf16.msra.mxu0 %v1231
    %1864 = vmatprep.subr.bf16.mxu0 %v1236
    %1865 = vmatpush1.bf16.msra.mxu0 %v1235
    %1866 = vmatprep.subr.bf16.mxu0 %v1240
    %1867 = vmatpush1.bf16.msra.mxu0 %v1239
    %1868 = vmatprep.subr.bf16.mxu0 %v1244
    %1869 = vmatpush1.bf16.msra.mxu0 %v1243
    %1870 = vmatprep.subr.bf16.mxu0 %v1248
    %1871 = vmatpush1.bf16.msra.mxu0 %v1247
    %1872 = vmatprep.subr.bf16.mxu0 %v1252
    %1873 = vmatpush1.bf16.msra.mxu0 %v1251
    %1874 = vmatprep.mubr.bf16.mxu0 %v80
    %1875 = vmatmul.mubr.bf16.gmra.mrb[0].mxu0 %v79
    %v1876 = vpop.f32.mrb[0].mxu0
    %v1877 = vadd.f32 %v1836, %v1876
    %v1878 = vpop.f32.mrb[0].mxu0
    %v1879 = vadd.f32 %v1838, %v1878
    %v1880 = vpop.f32.mrb[0].mxu0
    %v1881 = vpop.f32.mrb[0].mxu0
    %1882 = vdwg.mxu0
    %1883 = vmatprep.subr.bf16.mxu0 %v1256
    %1884 = vmatpush1.bf16.msra.mxu0 %v1255
    %1885 = vmatprep.subr.bf16.mxu0 %v1260
    %1886 = vmatpush1.bf16.msra.mxu0 %v1259
    %1887 = vmatprep.subr.bf16.mxu0 %v1264
    %1888 = vmatpush1.bf16.msra.mxu0 %v1263
    %1889 = vmatprep.subr.bf16.mxu0 %v1268
    %1890 = vmatpush1.bf16.msra.mxu0 %v1267
    %1891 = vmatprep.subr.bf16.mxu0 %v1272
    %1892 = vmatpush1.bf16.msra.mxu0 %v1271
    %1893 = vmatprep.subr.bf16.mxu0 %v1276
    %1894 = vmatpush1.bf16.msra.mxu0 %v1275
    %1895 = vmatprep.subr.bf16.mxu0 %v1280
    %1896 = vmatpush1.bf16.msra.mxu0 %v1279
    %1897 = vmatprep.subr.bf16.mxu0 %v1284
    %1898 = vmatpush1.bf16.msra.mxu0 %v1283
    %1899 = vmatprep.subr.bf16.mxu0 %v1288
    %1900 = vmatpush1.bf16.msra.mxu0 %v1287
    %1901 = vmatprep.subr.bf16.mxu0 %v1292
    %1902 = vmatpush1.bf16.msra.mxu0 %v1291
    %1903 = vmatprep.subr.bf16.mxu0 %v1296
    %1904 = vmatpush1.bf16.msra.mxu0 %v1295
    %1905 = vmatprep.subr.bf16.mxu0 %v1300
    %1906 = vmatpush1.bf16.msra.mxu0 %v1299
    %1907 = vmatprep.subr.bf16.mxu0 %v1304
    %1908 = vmatpush1.bf16.msra.mxu0 %v1303
    %1909 = vmatprep.subr.bf16.mxu0 %v1308
    %1910 = vmatpush1.bf16.msra.mxu0 %v1307
    %1911 = vmatprep.subr.bf16.mxu0 %v1312
    %1912 = vmatpush1.bf16.msra.mxu0 %v1311
    %1913 = vmatprep.subr.bf16.mxu0 %v1316
    %1914 = vmatpush1.bf16.msra.mxu0 %v1315
    %1915 = vmatprep.mubr.bf16.mxu0 %v82
    %1916 = vmatmul.mubr.bf16.gmra.mrb[0].mxu0 %v81
    %v1917 = vpop.f32.mrb[0].mxu0
    %v1918 = vadd.f32 %v1877, %v1917
    %v1919 = vpop.f32.mrb[0].mxu0
    %v1920 = vadd.f32 %v1879, %v1919
    %v1921 = vpop.f32.mrb[0].mxu0
    %v1922 = vpop.f32.mrb[0].mxu0
    %1923 = vdwg.mxu0
    %1924 = vmatprep.subr.bf16.mxu0 %v1320
    %1925 = vmatpush1.bf16.msra.mxu0 %v1319
    %1926 = vmatprep.subr.bf16.mxu0 %v1324
    %1927 = vmatpush1.bf16.msra.mxu0 %v1323
    %1928 = vmatprep.subr.bf16.mxu0 %v1328
    %1929 = vmatpush1.bf16.msra.mxu0 %v1327
    %1930 = vmatprep.subr.bf16.mxu0 %v1332
    %1931 = vmatpush1.bf16.msra.mxu0 %v1331
    %1932 = vmatprep.subr.bf16.mxu0 %v1336
    %1933 = vmatpush1.bf16.msra.mxu0 %v1335
    %1934 = vmatprep.subr.bf16.mxu0 %v1340
    %1935 = vmatpush1.bf16.msra.mxu0 %v1339
    %1936 = vmatprep.subr.bf16.mxu0 %v1344
    %1937 = vmatpush1.bf16.msra.mxu0 %v1343
    %1938 = vmatprep.subr.bf16.mxu0 %v1348
    %1939 = vmatpush1.bf16.msra.mxu0 %v1347
    %1940 = vmatprep.subr.bf16.mxu0 %v1352
    %1941 = vmatpush1.bf16.msra.mxu0 %v1351
    %1942 = vmatprep.subr.bf16.mxu0 %v1356
    %1943 = vmatpush1.bf16.msra.mxu0 %v1355
    %1944 = vmatprep.subr.bf16.mxu0 %v1360
    %1945 = vmatpush1.bf16.msra.mxu0 %v1359
    %1946 = vmatprep.subr.bf16.mxu0 %v1364
    %1947 = vmatpush1.bf16.msra.mxu0 %v1363
    %1948 = vmatprep.subr.bf16.mxu0 %v1368
    %1949 = vmatpush1.bf16.msra.mxu0 %v1367
    %1950 = vmatprep.subr.bf16.mxu0 %v1372
    %1951 = vmatpush1.bf16.msra.mxu0 %v1371
    %1952 = vmatprep.subr.bf16.mxu0 %v1376
    %1953 = vmatpush1.bf16.msra.mxu0 %v1375
    %1954 = vmatprep.subr.bf16.mxu0 %v1380
    %1955 = vmatpush1.bf16.msra.mxu0 %v1379
    %1956 = vmatprep.mubr.bf16.mxu0 %v84
    %1957 = vmatmul.mubr.bf16.gmra.mrb[0].mxu0 %v83
    %v1958 = vpop.f32.mrb[0].mxu0
    %v1959 = vadd.f32 %v1918, %v1958
    %v1960 = vpop.f32.mrb[0].mxu0
    %v1961 = vadd.f32 %v1920, %v1960
    %v1962 = vpop.f32.mrb[0].mxu0
    %v1963 = vpop.f32.mrb[0].mxu0
    %1964 = vdwg.mxu0
    %vm1965 = vcmp.ge.f32.partialorder %v1795, 0.0
    %vm1966 = vcmp.ge.f32.partialorder %v1797, 0.0
    %vm1967 = vcmp.ge.f32.partialorder %v1959, 0.0
    %vm1968 = vcmp.ge.f32.partialorder %v1961, 0.0
    %v1969 = vmul.f32 %v1795, 0.01
    %v1970 = vmul.f32 %v1797, 0.01
    %v1971 = vmul.f32 %v1959, 0.01
    %v1972 = vmul.f32 %v1961, 0.01
    %v1973 = vsel %vm1965, %v1795, %v1969
    %v1974 = vsel %vm1966, %v1797, %v1970
    %v1975 = vsel %vm1967, %v1959, %v1971
    %v1976 = vsel %vm1968, %v1961, %v1972
    %v1977 = vpack.c.bf16 %v1973, %v1973
    %v1978 = vpack.c.bf16 %v1974, %v1974
    %v1979 = vpack.c.bf16 %v1975, %v1975
    %v1980 = vpack.c.bf16 %v1976, %v1976
    %v1981 = vld [vmem:[#allocation2 + $0x800] sm:$0xff]
    %v1982 = vld [vmem:[#allocation2 + $0x808] sm:$0xff]
    %v1983 = vld [vmem:[#allocation2 + $0x810] sm:$0xff]
    %v1984 = vld [vmem:[#allocation2 + $0x818] sm:$0xff]
    %v1985 = vld [vmem:[#allocation2 + $0x820] sm:$0xff]
    %v1986 = vld [vmem:[#allocation2 + $0x828] sm:$0xff]
    %v1987 = vld [vmem:[#allocation2 + $0x830] sm:$0xff]
    %v1988 = vld [vmem:[#allocation2 + $0x838] sm:$0xff]
    %v1989 = vld [vmem:[#allocation2 + $0x840] sm:$0xff]
    %v1990 = vld [vmem:[#allocation2 + $0x848] sm:$0xff]
    %v1991 = vld [vmem:[#allocation2 + $0x850] sm:$0xff]
    %v1992 = vld [vmem:[#allocation2 + $0x858] sm:$0xff]
    %v1993 = vld [vmem:[#allocation2 + $0x860] sm:$0xff]
    %v1994 = vld [vmem:[#allocation2 + $0x868] sm:$0xff]
    %v1995 = vld [vmem:[#allocation2 + $0x870] sm:$0xff]
    %v1996 = vld [vmem:[#allocation2 + $0x878] sm:$0xff]
    %v1997 = vld [vmem:[#allocation2 + $0x880] sm:$0xff]
    %v1998 = vld [vmem:[#allocation2 + $0x888] sm:$0xff]
    %v1999 = vld [vmem:[#allocation2 + $0x890] sm:$0xff]
    %v2000 = vld [vmem:[#allocation2 + $0x898] sm:$0xff]
    %v2001 = vld [vmem:[#allocation2 + $0x8a0] sm:$0xff]
    %v2002 = vld [vmem:[#allocation2 + $0x8a8] sm:$0xff]
    %v2003 = vld [vmem:[#allocation2 + $0x8b0] sm:$0xff]
    %v2004 = vld [vmem:[#allocation2 + $0x8b8] sm:$0xff]
    %v2005 = vld [vmem:[#allocation2 + $0x8c0] sm:$0xff]
    %v2006 = vld [vmem:[#allocation2 + $0x8c8] sm:$0xff]
    %v2007 = vld [vmem:[#allocation2 + $0x8d0] sm:$0xff]
    %v2008 = vld [vmem:[#allocation2 + $0x8d8] sm:$0xff]
    %v2009 = vld [vmem:[#allocation2 + $0x8e0] sm:$0xff]
    %v2010 = vld [vmem:[#allocation2 + $0x8e8] sm:$0xff]
    %v2011 = vld [vmem:[#allocation2 + $0x8f0] sm:$0xff]
    %v2012 = vld [vmem:[#allocation2 + $0x8f8] sm:$0xff]
    %v2013 = vld [vmem:[#allocation2 + $0x900] sm:$0xff]
    %v2014 = vld [vmem:[#allocation2 + $0x908] sm:$0xff]
    %v2015 = vld [vmem:[#allocation2 + $0x910] sm:$0xff]
    %v2016 = vld [vmem:[#allocation2 + $0x918] sm:$0xff]
    %v2017 = vld [vmem:[#allocation2 + $0x920] sm:$0xff]
    %v2018 = vld [vmem:[#allocation2 + $0x928] sm:$0xff]
    %v2019 = vld [vmem:[#allocation2 + $0x930] sm:$0xff]
    %v2020 = vld [vmem:[#allocation2 + $0x938] sm:$0xff]
    %v2021 = vld [vmem:[#allocation2 + $0x940] sm:$0xff]
    %v2022 = vld [vmem:[#allocation2 + $0x948] sm:$0xff]
    %v2023 = vld [vmem:[#allocation2 + $0x950] sm:$0xff]
    %v2024 = vld [vmem:[#allocation2 + $0x958] sm:$0xff]
    %v2025 = vld [vmem:[#allocation2 + $0x960] sm:$0xff]
    %v2026 = vld [vmem:[#allocation2 + $0x968] sm:$0xff]
    %v2027 = vld [vmem:[#allocation2 + $0x970] sm:$0xff]
    %v2028 = vld [vmem:[#allocation2 + $0x978] sm:$0xff]
    %v2029 = vld [vmem:[#allocation2 + $0x980] sm:$0xff]
    %v2030 = vld [vmem:[#allocation2 + $0x988] sm:$0xff]
    %v2031 = vld [vmem:[#allocation2 + $0x990] sm:$0xff]
    %v2032 = vld [vmem:[#allocation2 + $0x998] sm:$0xff]
    %v2033 = vld [vmem:[#allocation2 + $0x9a0] sm:$0xff]
    %v2034 = vld [vmem:[#allocation2 + $0x9a8] sm:$0xff]
    %v2035 = vld [vmem:[#allocation2 + $0x9b0] sm:$0xff]
    %v2036 = vld [vmem:[#allocation2 + $0x9b8] sm:$0xff]
    %v2037 = vld [vmem:[#allocation2 + $0x9c0] sm:$0xff]
    %v2038 = vld [vmem:[#allocation2 + $0x9c8] sm:$0xff]
    %v2039 = vld [vmem:[#allocation2 + $0x9d0] sm:$0xff]
    %v2040 = vld [vmem:[#allocation2 + $0x9d8] sm:$0xff]
    %v2041 = vld [vmem:[#allocation2 + $0x9e0] sm:$0xff]
    %v2042 = vld [vmem:[#allocation2 + $0x9e8] sm:$0xff]
    %v2043 = vld [vmem:[#allocation2 + $0x9f0] sm:$0xff]
    %v2044 = vld [vmem:[#allocation2 + $0x9f8] sm:$0xff]
    %v2045 = vld [vmem:[#allocation2 + $0xa00] sm:$0xff]
    %v2046 = vld [vmem:[#allocation2 + $0xa08] sm:$0xff]
    %v2047 = vld [vmem:[#allocation2 + $0xa10] sm:$0xff]
    %v2048 = vld [vmem:[#allocation2 + $0xa18] sm:$0xff]
    %v2049 = vld [vmem:[#allocation2 + $0xa20] sm:$0xff]
    %v2050 = vld [vmem:[#allocation2 + $0xa28] sm:$0xff]
    %v2051 = vld [vmem:[#allocation2 + $0xa30] sm:$0xff]
    %v2052 = vld [vmem:[#allocation2 + $0xa38] sm:$0xff]
    %v2053 = vld [vmem:[#allocation2 + $0xa40] sm:$0xff]
    %v2054 = vld [vmem:[#allocation2 + $0xa48] sm:$0xff]
    %v2055 = vld [vmem:[#allocation2 + $0xa50] sm:$0xff]
    %v2056 = vld [vmem:[#allocation2 + $0xa58] sm:$0xff]
    %v2057 = vld [vmem:[#allocation2 + $0xa60] sm:$0xff]
    %v2058 = vld [vmem:[#allocation2 + $0xa68] sm:$0xff]
    %v2059 = vld [vmem:[#allocation2 + $0xa70] sm:$0xff]
    %v2060 = vld [vmem:[#allocation2 + $0xa78] sm:$0xff]
    %v2061 = vld [vmem:[#allocation2 + $0xa80] sm:$0xff]
    %v2062 = vld [vmem:[#allocation2 + $0xa88] sm:$0xff]
    %v2063 = vld [vmem:[#allocation2 + $0xa90] sm:$0xff]
    %v2064 = vld [vmem:[#allocation2 + $0xa98] sm:$0xff]
    %v2065 = vld [vmem:[#allocation2 + $0xaa0] sm:$0xff]
    %v2066 = vld [vmem:[#allocation2 + $0xaa8] sm:$0xff]
    %v2067 = vld [vmem:[#allocation2 + $0xab0] sm:$0xff]
    %v2068 = vld [vmem:[#allocation2 + $0xab8] sm:$0xff]
    %v2069 = vld [vmem:[#allocation2 + $0xac0] sm:$0xff]
    %v2070 = vld [vmem:[#allocation2 + $0xac8] sm:$0xff]
    %v2071 = vld [vmem:[#allocation2 + $0xad0] sm:$0xff]
    %v2072 = vld [vmem:[#allocation2 + $0xad8] sm:$0xff]
    %v2073 = vld [vmem:[#allocation2 + $0xae0] sm:$0xff]
    %v2074 = vld [vmem:[#allocation2 + $0xae8] sm:$0xff]
    %v2075 = vld [vmem:[#allocation2 + $0xaf0] sm:$0xff]
    %v2076 = vld [vmem:[#allocation2 + $0xaf8] sm:$0xff]
    %v2077 = vld [vmem:[#allocation2 + $0xb00] sm:$0xff]
    %v2078 = vld [vmem:[#allocation2 + $0xb08] sm:$0xff]
    %v2079 = vld [vmem:[#allocation2 + $0xb10] sm:$0xff]
    %v2080 = vld [vmem:[#allocation2 + $0xb18] sm:$0xff]
    %v2081 = vld [vmem:[#allocation2 + $0xb20] sm:$0xff]
    %v2082 = vld [vmem:[#allocation2 + $0xb28] sm:$0xff]
    %v2083 = vld [vmem:[#allocation2 + $0xb30] sm:$0xff]
    %v2084 = vld [vmem:[#allocation2 + $0xb38] sm:$0xff]
    %v2085 = vld [vmem:[#allocation2 + $0xb40] sm:$0xff]
    %v2086 = vld [vmem:[#allocation2 + $0xb48] sm:$0xff]
    %v2087 = vld [vmem:[#allocation2 + $0xb50] sm:$0xff]
    %v2088 = vld [vmem:[#allocation2 + $0xb58] sm:$0xff]
    %v2089 = vld [vmem:[#allocation2 + $0xb60] sm:$0xff]
    %v2090 = vld [vmem:[#allocation2 + $0xb68] sm:$0xff]
    %v2091 = vld [vmem:[#allocation2 + $0xb70] sm:$0xff]
    %v2092 = vld [vmem:[#allocation2 + $0xb78] sm:$0xff]
    %v2093 = vld [vmem:[#allocation2 + $0xb80] sm:$0xff]
    %v2094 = vld [vmem:[#allocation2 + $0xb88] sm:$0xff]
    %v2095 = vld [vmem:[#allocation2 + $0xb90] sm:$0xff]
    %v2096 = vld [vmem:[#allocation2 + $0xb98] sm:$0xff]
    %v2097 = vld [vmem:[#allocation2 + $0xba0] sm:$0xff]
    %v2098 = vld [vmem:[#allocation2 + $0xba8] sm:$0xff]
    %v2099 = vld [vmem:[#allocation2 + $0xbb0] sm:$0xff]
    %v2100 = vld [vmem:[#allocation2 + $0xbb8] sm:$0xff]
    %v2101 = vld [vmem:[#allocation2 + $0xbc0] sm:$0xff]
    %v2102 = vld [vmem:[#allocation2 + $0xbc8] sm:$0xff]
    %v2103 = vld [vmem:[#allocation2 + $0xbd0] sm:$0xff]
    %v2104 = vld [vmem:[#allocation2 + $0xbd8] sm:$0xff]
    %v2105 = vld [vmem:[#allocation2 + $0xbe0] sm:$0xff]
    %v2106 = vld [vmem:[#allocation2 + $0xbe8] sm:$0xff]
    %v2107 = vld [vmem:[#allocation2 + $0xbf0] sm:$0xff]
    %v2108 = vld [vmem:[#allocation2 + $0xbf8] sm:$0xff]
    %v2109 = vlaneseq
    %v2110 = vshrl.u32 %v2109, 7
    %v2111 = vsub.s32 1, %v2110
    %v2112 = vrot.slane %v57, %v2111
    %v2113 = vlaneseq
    %v2114 = vshrl.u32 %v2113, 7
    %v2115 = vsub.s32 1, %v2114
    %v2116 = vrot.slane %v58, %v2115
    %v2117 = vlaneseq
    %v2118 = vshrl.u32 %v2117, 7
    %v2119 = vsub.s32 1, %v2118
    %v2120 = vrot.slane %v59, %v2119
    %v2121 = vlaneseq
    %v2122 = vshrl.u32 %v2121, 7
    %v2123 = vsub.s32 1, %v2122
    %v2124 = vrot.slane %v60, %v2123
    %v2253 = vunpack.c.l.b16 %v1981
    %v2254 = vunpack.c.h.b16 %v1981
    %v2255 = vunpack.c.l.b16 %v1982
    %v2256 = vunpack.c.h.b16 %v1982
    %v2257 = vunpack.c.l.b16 %v1983
    %v2258 = vunpack.c.h.b16 %v1983
    %v2259 = vunpack.c.l.b16 %v1984
    %v2260 = vunpack.c.h.b16 %v1984
    %v2261 = vunpack.c.l.b16 %v1985
    %v2262 = vunpack.c.h.b16 %v1985
    %v2263 = vunpack.c.l.b16 %v1986
    %v2264 = vunpack.c.h.b16 %v1986
    %v2265 = vunpack.c.l.b16 %v1987
    %v2266 = vunpack.c.h.b16 %v1987
    %v2267 = vunpack.c.l.b16 %v1988
    %v2268 = vunpack.c.h.b16 %v1988
    %v2269 = vunpack.c.l.b16 %v1989
    %v2270 = vunpack.c.h.b16 %v1989
    %v2271 = vunpack.c.l.b16 %v1990
    %v2272 = vunpack.c.h.b16 %v1990
    %v2273 = vunpack.c.l.b16 %v1991
    %v2274 = vunpack.c.h.b16 %v1991
    %v2275 = vunpack.c.l.b16 %v1992
    %v2276 = vunpack.c.h.b16 %v1992
    %v2277 = vunpack.c.l.b16 %v1993
    %v2278 = vunpack.c.h.b16 %v1993
    %v2279 = vunpack.c.l.b16 %v1994
    %v2280 = vunpack.c.h.b16 %v1994
    %v2281 = vunpack.c.l.b16 %v1995
    %v2282 = vunpack.c.h.b16 %v1995
    %v2283 = vunpack.c.l.b16 %v1996
    %v2284 = vunpack.c.h.b16 %v1996
    %v2285 = vunpack.c.l.b16 %v1997
    %v2286 = vunpack.c.h.b16 %v1997
    %v2287 = vunpack.c.l.b16 %v1998
    %v2288 = vunpack.c.h.b16 %v1998
    %v2289 = vunpack.c.l.b16 %v1999
    %v2290 = vunpack.c.h.b16 %v1999
    %v2291 = vunpack.c.l.b16 %v2000
    %v2292 = vunpack.c.h.b16 %v2000
    %v2293 = vunpack.c.l.b16 %v2001
    %v2294 = vunpack.c.h.b16 %v2001
    %v2295 = vunpack.c.l.b16 %v2002
    %v2296 = vunpack.c.h.b16 %v2002
    %v2297 = vunpack.c.l.b16 %v2003
    %v2298 = vunpack.c.h.b16 %v2003
    %v2299 = vunpack.c.l.b16 %v2004
    %v2300 = vunpack.c.h.b16 %v2004
    %v2301 = vunpack.c.l.b16 %v2005
    %v2302 = vunpack.c.h.b16 %v2005
    %v2303 = vunpack.c.l.b16 %v2006
    %v2304 = vunpack.c.h.b16 %v2006
    %v2305 = vunpack.c.l.b16 %v2007
    %v2306 = vunpack.c.h.b16 %v2007
    %v2307 = vunpack.c.l.b16 %v2008
    %v2308 = vunpack.c.h.b16 %v2008
    %v2309 = vunpack.c.l.b16 %v2009
    %v2310 = vunpack.c.h.b16 %v2009
    %v2311 = vunpack.c.l.b16 %v2010
    %v2312 = vunpack.c.h.b16 %v2010
    %v2313 = vunpack.c.l.b16 %v2011
    %v2314 = vunpack.c.h.b16 %v2011
    %v2315 = vunpack.c.l.b16 %v2012
    %v2316 = vunpack.c.h.b16 %v2012
    %v2317 = vunpack.c.l.b16 %v2013
    %v2318 = vunpack.c.h.b16 %v2013
    %v2319 = vunpack.c.l.b16 %v2014
    %v2320 = vunpack.c.h.b16 %v2014
    %v2321 = vunpack.c.l.b16 %v2015
    %v2322 = vunpack.c.h.b16 %v2015
    %v2323 = vunpack.c.l.b16 %v2016
    %v2324 = vunpack.c.h.b16 %v2016
    %v2325 = vunpack.c.l.b16 %v2017
    %v2326 = vunpack.c.h.b16 %v2017
    %v2327 = vunpack.c.l.b16 %v2018
    %v2328 = vunpack.c.h.b16 %v2018
    %v2329 = vunpack.c.l.b16 %v2019
    %v2330 = vunpack.c.h.b16 %v2019
    %v2331 = vunpack.c.l.b16 %v2020
    %v2332 = vunpack.c.h.b16 %v2020
    %v2333 = vunpack.c.l.b16 %v2021
    %v2334 = vunpack.c.h.b16 %v2021
    %v2335 = vunpack.c.l.b16 %v2022
    %v2336 = vunpack.c.h.b16 %v2022
    %v2337 = vunpack.c.l.b16 %v2023
    %v2338 = vunpack.c.h.b16 %v2023
    %v2339 = vunpack.c.l.b16 %v2024
    %v2340 = vunpack.c.h.b16 %v2024
    %v2341 = vunpack.c.l.b16 %v2025
    %v2342 = vunpack.c.h.b16 %v2025
    %v2343 = vunpack.c.l.b16 %v2026
    %v2344 = vunpack.c.h.b16 %v2026
    %v2345 = vunpack.c.l.b16 %v2027
    %v2346 = vunpack.c.h.b16 %v2027
    %v2347 = vunpack.c.l.b16 %v2028
    %v2348 = vunpack.c.h.b16 %v2028
    %v2349 = vunpack.c.l.b16 %v2029
    %v2350 = vunpack.c.h.b16 %v2029
    %v2351 = vunpack.c.l.b16 %v2030
    %v2352 = vunpack.c.h.b16 %v2030
    %v2353 = vunpack.c.l.b16 %v2031
    %v2354 = vunpack.c.h.b16 %v2031
    %v2355 = vunpack.c.l.b16 %v2032
    %v2356 = vunpack.c.h.b16 %v2032
    %v2357 = vunpack.c.l.b16 %v2033
    %v2358 = vunpack.c.h.b16 %v2033
    %v2359 = vunpack.c.l.b16 %v2034
    %v2360 = vunpack.c.h.b16 %v2034
    %v2361 = vunpack.c.l.b16 %v2035
    %v2362 = vunpack.c.h.b16 %v2035
    %v2363 = vunpack.c.l.b16 %v2036
    %v2364 = vunpack.c.h.b16 %v2036
    %v2365 = vunpack.c.l.b16 %v2037
    %v2366 = vunpack.c.h.b16 %v2037
    %v2367 = vunpack.c.l.b16 %v2038
    %v2368 = vunpack.c.h.b16 %v2038
    %v2369 = vunpack.c.l.b16 %v2039
    %v2370 = vunpack.c.h.b16 %v2039
    %v2371 = vunpack.c.l.b16 %v2040
    %v2372 = vunpack.c.h.b16 %v2040
    %v2373 = vunpack.c.l.b16 %v2041
    %v2374 = vunpack.c.h.b16 %v2041
    %v2375 = vunpack.c.l.b16 %v2042
    %v2376 = vunpack.c.h.b16 %v2042
    %v2377 = vunpack.c.l.b16 %v2043
    %v2378 = vunpack.c.h.b16 %v2043
    %v2379 = vunpack.c.l.b16 %v2044
    %v2380 = vunpack.c.h.b16 %v2044
    %v2381 = vunpack.c.l.b16 %v2045
    %v2382 = vunpack.c.h.b16 %v2045
    %v2383 = vunpack.c.l.b16 %v2046
    %v2384 = vunpack.c.h.b16 %v2046
    %v2385 = vunpack.c.l.b16 %v2047
    %v2386 = vunpack.c.h.b16 %v2047
    %v2387 = vunpack.c.l.b16 %v2048
    %v2388 = vunpack.c.h.b16 %v2048
    %v2389 = vunpack.c.l.b16 %v2049
    %v2390 = vunpack.c.h.b16 %v2049
    %v2391 = vunpack.c.l.b16 %v2050
    %v2392 = vunpack.c.h.b16 %v2050
    %v2393 = vunpack.c.l.b16 %v2051
    %v2394 = vunpack.c.h.b16 %v2051
    %v2395 = vunpack.c.l.b16 %v2052
    %v2396 = vunpack.c.h.b16 %v2052
    %v2397 = vunpack.c.l.b16 %v2053
    %v2398 = vunpack.c.h.b16 %v2053
    %v2399 = vunpack.c.l.b16 %v2054
    %v2400 = vunpack.c.h.b16 %v2054
    %v2401 = vunpack.c.l.b16 %v2055
    %v2402 = vunpack.c.h.b16 %v2055
    %v2403 = vunpack.c.l.b16 %v2056
    %v2404 = vunpack.c.h.b16 %v2056
    %v2405 = vunpack.c.l.b16 %v2057
    %v2406 = vunpack.c.h.b16 %v2057
    %v2407 = vunpack.c.l.b16 %v2058
    %v2408 = vunpack.c.h.b16 %v2058
    %v2409 = vunpack.c.l.b16 %v2059
    %v2410 = vunpack.c.h.b16 %v2059
    %v2411 = vunpack.c.l.b16 %v2060
    %v2412 = vunpack.c.h.b16 %v2060
    %v2413 = vunpack.c.l.b16 %v2061
    %v2414 = vunpack.c.h.b16 %v2061
    %v2415 = vunpack.c.l.b16 %v2062
    %v2416 = vunpack.c.h.b16 %v2062
    %v2417 = vunpack.c.l.b16 %v2063
    %v2418 = vunpack.c.h.b16 %v2063
    %v2419 = vunpack.c.l.b16 %v2064
    %v2420 = vunpack.c.h.b16 %v2064
    %v2421 = vunpack.c.l.b16 %v2065
    %v2422 = vunpack.c.h.b16 %v2065
    %v2423 = vunpack.c.l.b16 %v2066
    %v2424 = vunpack.c.h.b16 %v2066
    %v2425 = vunpack.c.l.b16 %v2067
    %v2426 = vunpack.c.h.b16 %v2067
    %v2427 = vunpack.c.l.b16 %v2068
    %v2428 = vunpack.c.h.b16 %v2068
    %v2429 = vunpack.c.l.b16 %v2069
    %v2430 = vunpack.c.h.b16 %v2069
    %v2431 = vunpack.c.l.b16 %v2070
    %v2432 = vunpack.c.h.b16 %v2070
    %v2433 = vunpack.c.l.b16 %v2071
    %v2434 = vunpack.c.h.b16 %v2071
    %v2435 = vunpack.c.l.b16 %v2072
    %v2436 = vunpack.c.h.b16 %v2072
    %v2437 = vunpack.c.l.b16 %v2073
    %v2438 = vunpack.c.h.b16 %v2073
    %v2439 = vunpack.c.l.b16 %v2074
    %v2440 = vunpack.c.h.b16 %v2074
    %v2441 = vunpack.c.l.b16 %v2075
    %v2442 = vunpack.c.h.b16 %v2075
    %v2443 = vunpack.c.l.b16 %v2076
    %v2444 = vunpack.c.h.b16 %v2076
    %v2445 = vunpack.c.l.b16 %v2077
    %v2446 = vunpack.c.h.b16 %v2077
    %v2447 = vunpack.c.l.b16 %v2078
    %v2448 = vunpack.c.h.b16 %v2078
    %v2449 = vunpack.c.l.b16 %v2079
    %v2450 = vunpack.c.h.b16 %v2079
    %v2451 = vunpack.c.l.b16 %v2080
    %v2452 = vunpack.c.h.b16 %v2080
    %v2453 = vunpack.c.l.b16 %v2081
    %v2454 = vunpack.c.h.b16 %v2081
    %v2455 = vunpack.c.l.b16 %v2082
    %v2456 = vunpack.c.h.b16 %v2082
    %v2457 = vunpack.c.l.b16 %v2083
    %v2458 = vunpack.c.h.b16 %v2083
    %v2459 = vunpack.c.l.b16 %v2084
    %v2460 = vunpack.c.h.b16 %v2084
    %v2461 = vunpack.c.l.b16 %v2085
    %v2462 = vunpack.c.h.b16 %v2085
    %v2463 = vunpack.c.l.b16 %v2086
    %v2464 = vunpack.c.h.b16 %v2086
    %v2465 = vunpack.c.l.b16 %v2087
    %v2466 = vunpack.c.h.b16 %v2087
    %v2467 = vunpack.c.l.b16 %v2088
    %v2468 = vunpack.c.h.b16 %v2088
    %v2469 = vunpack.c.l.b16 %v2089
    %v2470 = vunpack.c.h.b16 %v2089
    %v2471 = vunpack.c.l.b16 %v2090
    %v2472 = vunpack.c.h.b16 %v2090
    %v2473 = vunpack.c.l.b16 %v2091
    %v2474 = vunpack.c.h.b16 %v2091
    %v2475 = vunpack.c.l.b16 %v2092
    %v2476 = vunpack.c.h.b16 %v2092
    %v2477 = vunpack.c.l.b16 %v2093
    %v2478 = vunpack.c.h.b16 %v2093
    %v2479 = vunpack.c.l.b16 %v2094
    %v2480 = vunpack.c.h.b16 %v2094
    %v2481 = vunpack.c.l.b16 %v2095
    %v2482 = vunpack.c.h.b16 %v2095
    %v2483 = vunpack.c.l.b16 %v2096
    %v2484 = vunpack.c.h.b16 %v2096
    %v2485 = vunpack.c.l.b16 %v2097
    %v2486 = vunpack.c.h.b16 %v2097
    %v2487 = vunpack.c.l.b16 %v2098
    %v2488 = vunpack.c.h.b16 %v2098
    %v2489 = vunpack.c.l.b16 %v2099
    %v2490 = vunpack.c.h.b16 %v2099
    %v2491 = vunpack.c.l.b16 %v2100
    %v2492 = vunpack.c.h.b16 %v2100
    %v2493 = vunpack.c.l.b16 %v2101
    %v2494 = vunpack.c.h.b16 %v2101
    %v2495 = vunpack.c.l.b16 %v2102
    %v2496 = vunpack.c.h.b16 %v2102
    %v2497 = vunpack.c.l.b16 %v2103
    %v2498 = vunpack.c.h.b16 %v2103
    %v2499 = vunpack.c.l.b16 %v2104
    %v2500 = vunpack.c.h.b16 %v2104
    %v2501 = vunpack.c.l.b16 %v2105
    %v2502 = vunpack.c.h.b16 %v2105
    %v2503 = vunpack.c.l.b16 %v2106
    %v2504 = vunpack.c.h.b16 %v2106
    %v2505 = vunpack.c.l.b16 %v2107
    %v2506 = vunpack.c.h.b16 %v2107
    %v2507 = vunpack.c.l.b16 %v2108
    %v2508 = vunpack.c.h.b16 %v2108
    %v2509 = vpack.c.b16 %v2257, %v2253
    %v2510 = vpack.c.b16 %v2258, %v2254
    %v2511 = vpack.c.b16 %v2259, %v2255
    %v2512 = vpack.c.b16 %v2260, %v2256
    %v2513 = vpack.c.b16 %v2265, %v2261
    %v2514 = vpack.c.b16 %v2266, %v2262
    %v2515 = vpack.c.b16 %v2267, %v2263
    %v2516 = vpack.c.b16 %v2268, %v2264
    %v2517 = vpack.c.b16 %v2273, %v2269
    %v2518 = vpack.c.b16 %v2274, %v2270
    %v2519 = vpack.c.b16 %v2275, %v2271
    %v2520 = vpack.c.b16 %v2276, %v2272
    %v2521 = vpack.c.b16 %v2281, %v2277
    %v2522 = vpack.c.b16 %v2282, %v2278
    %v2523 = vpack.c.b16 %v2283, %v2279
    %v2524 = vpack.c.b16 %v2284, %v2280
    %v2525 = vpack.c.b16 %v2289, %v2285
    %v2526 = vpack.c.b16 %v2290, %v2286
    %v2527 = vpack.c.b16 %v2291, %v2287
    %v2528 = vpack.c.b16 %v2292, %v2288
    %v2529 = vpack.c.b16 %v2297, %v2293
    %v2530 = vpack.c.b16 %v2298, %v2294
    %v2531 = vpack.c.b16 %v2299, %v2295
    %v2532 = vpack.c.b16 %v2300, %v2296
    %v2533 = vpack.c.b16 %v2305, %v2301
    %v2534 = vpack.c.b16 %v2306, %v2302
    %v2535 = vpack.c.b16 %v2307, %v2303
    %v2536 = vpack.c.b16 %v2308, %v2304
    %v2537 = vpack.c.b16 %v2313, %v2309
    %v2538 = vpack.c.b16 %v2314, %v2310
    %v2539 = vpack.c.b16 %v2315, %v2311
    %v2540 = vpack.c.b16 %v2316, %v2312
    %v2541 = vpack.c.b16 %v2321, %v2317
    %v2542 = vpack.c.b16 %v2322, %v2318
    %v2543 = vpack.c.b16 %v2323, %v2319
    %v2544 = vpack.c.b16 %v2324, %v2320
    %v2545 = vpack.c.b16 %v2329, %v2325
    %v2546 = vpack.c.b16 %v2330, %v2326
    %v2547 = vpack.c.b16 %v2331, %v2327
    %v2548 = vpack.c.b16 %v2332, %v2328
    %v2549 = vpack.c.b16 %v2337, %v2333
    %v2550 = vpack.c.b16 %v2338, %v2334
    %v2551 = vpack.c.b16 %v2339, %v2335
    %v2552 = vpack.c.b16 %v2340, %v2336
    %v2553 = vpack.c.b16 %v2345, %v2341
    %v2554 = vpack.c.b16 %v2346, %v2342
    %v2555 = vpack.c.b16 %v2347, %v2343
    %v2556 = vpack.c.b16 %v2348, %v2344
    %v2557 = vpack.c.b16 %v2353, %v2349
    %v2558 = vpack.c.b16 %v2354, %v2350
    %v2559 = vpack.c.b16 %v2355, %v2351
    %v2560 = vpack.c.b16 %v2356, %v2352
    %v2561 = vpack.c.b16 %v2361, %v2357
    %v2562 = vpack.c.b16 %v2362, %v2358
    %v2563 = vpack.c.b16 %v2363, %v2359
    %v2564 = vpack.c.b16 %v2364, %v2360
    %v2565 = vpack.c.b16 %v2369, %v2365
    %v2566 = vpack.c.b16 %v2370, %v2366
    %v2567 = vpack.c.b16 %v2371, %v2367
    %v2568 = vpack.c.b16 %v2372, %v2368
    %v2569 = vpack.c.b16 %v2377, %v2373
    %v2570 = vpack.c.b16 %v2378, %v2374
    %v2571 = vpack.c.b16 %v2379, %v2375
    %v2572 = vpack.c.b16 %v2380, %v2376
    %v2573 = vpack.c.b16 %v2385, %v2381
    %v2574 = vpack.c.b16 %v2386, %v2382
    %v2575 = vpack.c.b16 %v2387, %v2383
    %v2576 = vpack.c.b16 %v2388, %v2384
    %v2577 = vpack.c.b16 %v2393, %v2389
    %v2578 = vpack.c.b16 %v2394, %v2390
    %v2579 = vpack.c.b16 %v2395, %v2391
    %v2580 = vpack.c.b16 %v2396, %v2392
    %v2581 = vpack.c.b16 %v2401, %v2397
    %v2582 = vpack.c.b16 %v2402, %v2398
    %v2583 = vpack.c.b16 %v2403, %v2399
    %v2584 = vpack.c.b16 %v2404, %v2400
    %v2585 = vpack.c.b16 %v2409, %v2405
    %v2586 = vpack.c.b16 %v2410, %v2406
    %v2587 = vpack.c.b16 %v2411, %v2407
    %v2588 = vpack.c.b16 %v2412, %v2408
    %v2589 = vpack.c.b16 %v2417, %v2413
    %v2590 = vpack.c.b16 %v2418, %v2414
    %v2591 = vpack.c.b16 %v2419, %v2415
    %v2592 = vpack.c.b16 %v2420, %v2416
    %v2593 = vpack.c.b16 %v2425, %v2421
    %v2594 = vpack.c.b16 %v2426, %v2422
    %v2595 = vpack.c.b16 %v2427, %v2423
    %v2596 = vpack.c.b16 %v2428, %v2424
    %v2597 = vpack.c.b16 %v2433, %v2429
    %v2598 = vpack.c.b16 %v2434, %v2430
    %v2599 = vpack.c.b16 %v2435, %v2431
    %v2600 = vpack.c.b16 %v2436, %v2432
    %v2601 = vpack.c.b16 %v2441, %v2437
    %v2602 = vpack.c.b16 %v2442, %v2438
    %v2603 = vpack.c.b16 %v2443, %v2439
    %v2604 = vpack.c.b16 %v2444, %v2440
    %v2605 = vpack.c.b16 %v2449, %v2445
    %v2606 = vpack.c.b16 %v2450, %v2446
    %v2607 = vpack.c.b16 %v2451, %v2447
    %v2608 = vpack.c.b16 %v2452, %v2448
    %v2609 = vpack.c.b16 %v2457, %v2453
    %v2610 = vpack.c.b16 %v2458, %v2454
    %v2611 = vpack.c.b16 %v2459, %v2455
    %v2612 = vpack.c.b16 %v2460, %v2456
    %v2613 = vpack.c.b16 %v2465, %v2461
    %v2614 = vpack.c.b16 %v2466, %v2462
    %v2615 = vpack.c.b16 %v2467, %v2463
    %v2616 = vpack.c.b16 %v2468, %v2464
    %v2617 = vpack.c.b16 %v2473, %v2469
    %v2618 = vpack.c.b16 %v2474, %v2470
    %v2619 = vpack.c.b16 %v2475, %v2471
    %v2620 = vpack.c.b16 %v2476, %v2472
    %v2621 = vpack.c.b16 %v2481, %v2477
    %v2622 = vpack.c.b16 %v2482, %v2478
    %v2623 = vpack.c.b16 %v2483, %v2479
    %v2624 = vpack.c.b16 %v2484, %v2480
    %v2625 = vpack.c.b16 %v2489, %v2485
    %v2626 = vpack.c.b16 %v2490, %v2486
    %v2627 = vpack.c.b16 %v2491, %v2487
    %v2628 = vpack.c.b16 %v2492, %v2488
    %v2629 = vpack.c.b16 %v2497, %v2493
    %v2630 = vpack.c.b16 %v2498, %v2494
    %v2631 = vpack.c.b16 %v2499, %v2495
    %v2632 = vpack.c.b16 %v2500, %v2496
    %v2633 = vpack.c.b16 %v2505, %v2501
    %v2634 = vpack.c.b16 %v2506, %v2502
    %v2635 = vpack.c.b16 %v2507, %v2503
    %v2636 = vpack.c.b16 %v2508, %v2504
    %2765 = vmatprep.subr.bf16.mxu0 %v2510
    %2766 = vmatpush1.bf16.msra.mxu0 %v2509
    %2767 = vmatprep.subr.bf16.mxu0 %v2514
    %2768 = vmatpush1.bf16.msra.mxu0 %v2513
    %2769 = vmatprep.subr.bf16.mxu0 %v2518
    %2770 = vmatpush1.bf16.msra.mxu0 %v2517
    %2771 = vmatprep.subr.bf16.mxu0 %v2522
    %2772 = vmatpush1.bf16.msra.mxu0 %v2521
    %2773 = vmatprep.subr.bf16.mxu0 %v2526
    %2774 = vmatpush1.bf16.msra.mxu0 %v2525
    %2775 = vmatprep.subr.bf16.mxu0 %v2530
    %2776 = vmatpush1.bf16.msra.mxu0 %v2529
    %2777 = vmatprep.subr.bf16.mxu0 %v2534
    %2778 = vmatpush1.bf16.msra.mxu0 %v2533
    %2779 = vmatprep.subr.bf16.mxu0 %v2538
    %2780 = vmatpush1.bf16.msra.mxu0 %v2537
    %2781 = vmatprep.subr.bf16.mxu0 %v2542
    %2782 = vmatpush1.bf16.msra.mxu0 %v2541
    %2783 = vmatprep.subr.bf16.mxu0 %v2546
    %2784 = vmatpush1.bf16.msra.mxu0 %v2545
    %2785 = vmatprep.subr.bf16.mxu0 %v2550
    %2786 = vmatpush1.bf16.msra.mxu0 %v2549
    %2787 = vmatprep.subr.bf16.mxu0 %v2554
    %2788 = vmatpush1.bf16.msra.mxu0 %v2553
    %2789 = vmatprep.subr.bf16.mxu0 %v2558
    %2790 = vmatpush1.bf16.msra.mxu0 %v2557
    %2791 = vmatprep.subr.bf16.mxu0 %v2562
    %2792 = vmatpush1.bf16.msra.mxu0 %v2561
    %2793 = vmatprep.subr.bf16.mxu0 %v2566
    %2794 = vmatpush1.bf16.msra.mxu0 %v2565
    %2795 = vmatprep.subr.bf16.mxu0 %v2570
    %2796 = vmatpush1.bf16.msra.mxu0 %v2569
    %2797 = vmatprep.mubr.bf16.mxu0 %v1978
    %2798 = vmatmul.mubr.bf16.gmra.mrb[0].mxu0 %v1977
    %v2799 = vpop.f32.mrb[0].mxu0
    %v2800 = vadd.f32 %v2112, %v2799
    %v2801 = vpop.f32.mrb[0].mxu0
    %v2802 = vadd.f32 %v2116, %v2801
    %v2803 = vpop.f32.mrb[0].mxu0
    %v2804 = vpop.f32.mrb[0].mxu0
    %2805 = vdwg.mxu0
    %2806 = vmatprep.subr.bf16.mxu0 %v2574
    %2807 = vmatpush1.bf16.msra.mxu0 %v2573
    %2808 = vmatprep.subr.bf16.mxu0 %v2578
    %2809 = vmatpush1.bf16.msra.mxu0 %v2577
    %2810 = vmatprep.subr.bf16.mxu0 %v2582
    %2811 = vmatpush1.bf16.msra.mxu0 %v2581
    %2812 = vmatprep.subr.bf16.mxu0 %v2586
    %2813 = vmatpush1.bf16.msra.mxu0 %v2585
    %2814 = vmatprep.subr.bf16.mxu0 %v2590
    %2815 = vmatpush1.bf16.msra.mxu0 %v2589
    %2816 = vmatprep.subr.bf16.mxu0 %v2594
    %2817 = vmatpush1.bf16.msra.mxu0 %v2593
    %2818 = vmatprep.subr.bf16.mxu0 %v2598
    %2819 = vmatpush1.bf16.msra.mxu0 %v2597
    %2820 = vmatprep.subr.bf16.mxu0 %v2602
    %2821 = vmatpush1.bf16.msra.mxu0 %v2601
    %2822 = vmatprep.subr.bf16.mxu0 %v2606
    %2823 = vmatpush1.bf16.msra.mxu0 %v2605
    %2824 = vmatprep.subr.bf16.mxu0 %v2610
    %2825 = vmatpush1.bf16.msra.mxu0 %v2609
    %2826 = vmatprep.subr.bf16.mxu0 %v2614
    %2827 = vmatpush1.bf16.msra.mxu0 %v2613
    %2828 = vmatprep.subr.bf16.mxu0 %v2618
    %2829 = vmatpush1.bf16.msra.mxu0 %v2617
    %2830 = vmatprep.subr.bf16.mxu0 %v2622
    %2831 = vmatpush1.bf16.msra.mxu0 %v2621
    %2832 = vmatprep.subr.bf16.mxu0 %v2626
    %2833 = vmatpush1.bf16.msra.mxu0 %v2625
    %2834 = vmatprep.subr.bf16.mxu0 %v2630
    %2835 = vmatpush1.bf16.msra.mxu0 %v2629
    %2836 = vmatprep.subr.bf16.mxu0 %v2634
    %2837 = vmatpush1.bf16.msra.mxu0 %v2633
    %2838 = vmatprep.mubr.bf16.mxu0 %v1980
    %2839 = vmatmul.mubr.bf16.gmra.mrb[0].mxu0 %v1979
    %v2840 = vpop.f32.mrb[0].mxu0
    %v2841 = vadd.f32 %v2800, %v2840
    %v2842 = vpop.f32.mrb[0].mxu0
    %v2843 = vadd.f32 %v2802, %v2842
    %v2844 = vpop.f32.mrb[0].mxu0
    %v2845 = vpop.f32.mrb[0].mxu0
    %2846 = vdwg.mxu0
    %2847 = vmatprep.subr.bf16.mxu0 %v2512
    %2848 = vmatpush1.bf16.msra.mxu0 %v2511
    %2849 = vmatprep.subr.bf16.mxu0 %v2516
    %2850 = vmatpush1.bf16.msra.mxu0 %v2515
    %2851 = vmatprep.subr.bf16.mxu0 %v2520
    %2852 = vmatpush1.bf16.msra.mxu0 %v2519
    %2853 = vmatprep.subr.bf16.mxu0 %v2524
    %2854 = vmatpush1.bf16.msra.mxu0 %v2523
    %2855 = vmatprep.subr.bf16.mxu0 %v2528
    %2856 = vmatpush1.bf16.msra.mxu0 %v2527
    %2857 = vmatprep.subr.bf16.mxu0 %v2532
    %2858 = vmatpush1.bf16.msra.mxu0 %v2531
    %2859 = vmatprep.subr.bf16.mxu0 %v2536
    %2860 = vmatpush1.bf16.msra.mxu0 %v2535
    %2861 = vmatprep.subr.bf16.mxu0 %v2540
    %2862 = vmatpush1.bf16.msra.mxu0 %v2539
    %2863 = vmatprep.subr.bf16.mxu0 %v2544
    %2864 = vmatpush1.bf16.msra.mxu0 %v2543
    %2865 = vmatprep.subr.bf16.mxu0 %v2548
    %2866 = vmatpush1.bf16.msra.mxu0 %v2547
    %2867 = vmatprep.subr.bf16.mxu0 %v2552
    %2868 = vmatpush1.bf16.msra.mxu0 %v2551
    %2869 = vmatprep.subr.bf16.mxu0 %v2556
    %2870 = vmatpush1.bf16.msra.mxu0 %v2555
    %2871 = vmatprep.subr.bf16.mxu0 %v2560
    %2872 = vmatpush1.bf16.msra.mxu0 %v2559
    %2873 = vmatprep.subr.bf16.mxu0 %v2564
    %2874 = vmatpush1.bf16.msra.mxu0 %v2563
    %2875 = vmatprep.subr.bf16.mxu0 %v2568
    %2876 = vmatpush1.bf16.msra.mxu0 %v2567
    %2877 = vmatprep.subr.bf16.mxu0 %v2572
    %2878 = vmatpush1.bf16.msra.mxu0 %v2571
    %2879 = vmatprep.mubr.bf16.mxu0 %v1978
    %2880 = vmatmul.mubr.bf16.gmra.mrb[0].mxu0 %v1977
    %v2881 = vpop.f32.mrb[0].mxu0
    %v2882 = vadd.f32 %v2120, %v2881
    %v2883 = vpop.f32.mrb[0].mxu0
    %v2884 = vadd.f32 %v2124, %v2883
    %v2885 = vpop.f32.mrb[0].mxu0
    %v2886 = vpop.f32.mrb[0].mxu0
    %2887 = vdwg.mxu0
    %2888 = vmatprep.subr.bf16.mxu0 %v2576
    %2889 = vmatpush1.bf16.msra.mxu0 %v2575
    %2890 = vmatprep.subr.bf16.mxu0 %v2580
    %2891 = vmatpush1.bf16.msra.mxu0 %v2579
    %2892 = vmatprep.subr.bf16.mxu0 %v2584
    %2893 = vmatpush1.bf16.msra.mxu0 %v2583
    %2894 = vmatprep.subr.bf16.mxu0 %v2588
    %2895 = vmatpush1.bf16.msra.mxu0 %v2587
    %2896 = vmatprep.subr.bf16.mxu0 %v2592
    %2897 = vmatpush1.bf16.msra.mxu0 %v2591
    %2898 = vmatprep.subr.bf16.mxu0 %v2596
    %2899 = vmatpush1.bf16.msra.mxu0 %v2595
    %2900 = vmatprep.subr.bf16.mxu0 %v2600
    %2901 = vmatpush1.bf16.msra.mxu0 %v2599
    %2902 = vmatprep.subr.bf16.mxu0 %v2604
    %2903 = vmatpush1.bf16.msra.mxu0 %v2603
    %2904 = vmatprep.subr.bf16.mxu0 %v2608
    %2905 = vmatpush1.bf16.msra.mxu0 %v2607
    %2906 = vmatprep.subr.bf16.mxu0 %v2612
    %2907 = vmatpush1.bf16.msra.mxu0 %v2611
    %2908 = vmatprep.subr.bf16.mxu0 %v2616
    %2909 = vmatpush1.bf16.msra.mxu0 %v2615
    %2910 = vmatprep.subr.bf16.mxu0 %v2620
    %2911 = vmatpush1.bf16.msra.mxu0 %v2619
    %2912 = vmatprep.subr.bf16.mxu0 %v2624
    %2913 = vmatpush1.bf16.msra.mxu0 %v2623
    %2914 = vmatprep.subr.bf16.mxu0 %v2628
    %2915 = vmatpush1.bf16.msra.mxu0 %v2627
    %2916 = vmatprep.subr.bf16.mxu0 %v2632
    %2917 = vmatpush1.bf16.msra.mxu0 %v2631
    %2918 = vmatprep.subr.bf16.mxu0 %v2636
    %2919 = vmatpush1.bf16.msra.mxu0 %v2635
    %2920 = vmatprep.mubr.bf16.mxu0 %v1980
    %2921 = vmatmul.mubr.bf16.gmra.mrb[0].mxu0 %v1979
    %v2922 = vpop.f32.mrb[0].mxu0
    %v2923 = vadd.f32 %v2882, %v2922
    %v2924 = vpop.f32.mrb[0].mxu0
    %v2925 = vadd.f32 %v2884, %v2924
    %v2926 = vpop.f32.mrb[0].mxu0
    %v2927 = vpop.f32.mrb[0].mxu0
    %2928 = vdwg.mxu0
    %vm2929 = vcmp.ge.f32.partialorder %v2841, 0.0
    %vm2930 = vcmp.ge.f32.partialorder %v2843, 0.0
    %vm2931 = vcmp.ge.f32.partialorder %v2923, 0.0
    %vm2932 = vcmp.ge.f32.partialorder %v2925, 0.0
    %v2933 = vmul.f32 %v2841, 0.01
    %v2934 = vmul.f32 %v2843, 0.01
    %v2935 = vmul.f32 %v2923, 0.01
    %v2936 = vmul.f32 %v2925, 0.01
    %v2937 = vsel %vm2929, %v2841, %v2933
    %v2938 = vsel %vm2930, %v2843, %v2934
    %v2939 = vsel %vm2931, %v2923, %v2935
    %v2940 = vsel %vm2932, %v2925, %v2936
    %v2941 = vpack.c.bf16 %v2937, %v2937
    %v2942 = vpack.c.bf16 %v2938, %v2938
    %v2943 = vpack.c.bf16 %v2939, %v2939
    %v2944 = vpack.c.bf16 %v2940, %v2940
    %v2945 = vld [vmem:[#allocation4] sm:$0xff]
    %v2946 = vld [vmem:[#allocation4 + $0x8] sm:$0xff]
    %v2947 = vld [vmem:[#allocation4 + $0x10] sm:$0xff]
    %v2948 = vld [vmem:[#allocation4 + $0x18] sm:$0xff]
    %v2949 = vld [vmem:[#allocation4 + $0x20] sm:$0xff]
    %v2950 = vld [vmem:[#allocation4 + $0x28] sm:$0xff]
    %v2951 = vld [vmem:[#allocation4 + $0x30] sm:$0xff]
    %v2952 = vld [vmem:[#allocation4 + $0x38] sm:$0xff]
    %v2953 = vld [vmem:[#allocation4 + $0x40] sm:$0xff]
    %v2954 = vld [vmem:[#allocation4 + $0x48] sm:$0xff]
    %v2955 = vld [vmem:[#allocation4 + $0x50] sm:$0xff]
    %v2956 = vld [vmem:[#allocation4 + $0x58] sm:$0xff]
    %v2957 = vld [vmem:[#allocation4 + $0x60] sm:$0xff]
    %v2958 = vld [vmem:[#allocation4 + $0x68] sm:$0xff]
    %v2959 = vld [vmem:[#allocation4 + $0x70] sm:$0xff]
    %v2960 = vld [vmem:[#allocation4 + $0x78] sm:$0xff]
    %v2961 = vld [vmem:[#allocation4 + $0x80] sm:$0xff]
    %v2962 = vld [vmem:[#allocation4 + $0x88] sm:$0xff]
    %v2963 = vld [vmem:[#allocation4 + $0x90] sm:$0xff]
    %v2964 = vld [vmem:[#allocation4 + $0x98] sm:$0xff]
    %v2965 = vld [vmem:[#allocation4 + $0xa0] sm:$0xff]
    %v2966 = vld [vmem:[#allocation4 + $0xa8] sm:$0xff]
    %v2967 = vld [vmem:[#allocation4 + $0xb0] sm:$0xff]
    %v2968 = vld [vmem:[#allocation4 + $0xb8] sm:$0xff]
    %v2969 = vld [vmem:[#allocation4 + $0xc0] sm:$0xff]
    %v2970 = vld [vmem:[#allocation4 + $0xc8] sm:$0xff]
    %v2971 = vld [vmem:[#allocation4 + $0xd0] sm:$0xff]
    %v2972 = vld [vmem:[#allocation4 + $0xd8] sm:$0xff]
    %v2973 = vld [vmem:[#allocation4 + $0xe0] sm:$0xff]
    %v2974 = vld [vmem:[#allocation4 + $0xe8] sm:$0xff]
    %v2975 = vld [vmem:[#allocation4 + $0xf0] sm:$0xff]
    %v2976 = vld [vmem:[#allocation4 + $0xf8] sm:$0xff]
    %v2977 = vld [vmem:[#allocation4 + $0x100] sm:$0xff]
    %v2978 = vld [vmem:[#allocation4 + $0x108] sm:$0xff]
    %v2979 = vld [vmem:[#allocation4 + $0x110] sm:$0xff]
    %v2980 = vld [vmem:[#allocation4 + $0x118] sm:$0xff]
    %v2981 = vld [vmem:[#allocation4 + $0x120] sm:$0xff]
    %v2982 = vld [vmem:[#allocation4 + $0x128] sm:$0xff]
    %v2983 = vld [vmem:[#allocation4 + $0x130] sm:$0xff]
    %v2984 = vld [vmem:[#allocation4 + $0x138] sm:$0xff]
    %v2985 = vld [vmem:[#allocation4 + $0x140] sm:$0xff]
    %v2986 = vld [vmem:[#allocation4 + $0x148] sm:$0xff]
    %v2987 = vld [vmem:[#allocation4 + $0x150] sm:$0xff]
    %v2988 = vld [vmem:[#allocation4 + $0x158] sm:$0xff]
    %v2989 = vld [vmem:[#allocation4 + $0x160] sm:$0xff]
    %v2990 = vld [vmem:[#allocation4 + $0x168] sm:$0xff]
    %v2991 = vld [vmem:[#allocation4 + $0x170] sm:$0xff]
    %v2992 = vld [vmem:[#allocation4 + $0x178] sm:$0xff]
    %v2993 = vld [vmem:[#allocation4 + $0x180] sm:$0xff]
    %v2994 = vld [vmem:[#allocation4 + $0x188] sm:$0xff]
    %v2995 = vld [vmem:[#allocation4 + $0x190] sm:$0xff]
    %v2996 = vld [vmem:[#allocation4 + $0x198] sm:$0xff]
    %v2997 = vld [vmem:[#allocation4 + $0x1a0] sm:$0xff]
    %v2998 = vld [vmem:[#allocation4 + $0x1a8] sm:$0xff]
    %v2999 = vld [vmem:[#allocation4 + $0x1b0] sm:$0xff]
    %v3000 = vld [vmem:[#allocation4 + $0x1b8] sm:$0xff]
    %v3001 = vld [vmem:[#allocation4 + $0x1c0] sm:$0xff]
    %v3002 = vld [vmem:[#allocation4 + $0x1c8] sm:$0xff]
    %v3003 = vld [vmem:[#allocation4 + $0x1d0] sm:$0xff]
    %v3004 = vld [vmem:[#allocation4 + $0x1d8] sm:$0xff]
    %v3005 = vld [vmem:[#allocation4 + $0x1e0] sm:$0xff]
    %v3006 = vld [vmem:[#allocation4 + $0x1e8] sm:$0xff]
    %v3007 = vld [vmem:[#allocation4 + $0x1f0] sm:$0xff]
    %v3008 = vld [vmem:[#allocation4 + $0x1f8] sm:$0xff]
    %v3009 = vlaneseq
    %v3010 = vshrl.u32 %v3009, 7
    %v3011 = vsub.s32 2, %v3010
    %v3012 = vrot.slane %v57, %v3011
    %v3013 = vlaneseq
    %v3014 = vshrl.u32 %v3013, 7
    %v3015 = vsub.s32 2, %v3014
    %v3016 = vrot.slane %v58, %v3015
    %v3081 = vunpack.c.l.b16 %v2945
    %v3082 = vunpack.c.h.b16 %v2945
    %v3083 = vunpack.c.l.b16 %v2946
    %v3084 = vunpack.c.h.b16 %v2946
    %v3085 = vunpack.c.l.b16 %v2947
    %v3086 = vunpack.c.h.b16 %v2947
    %v3087 = vunpack.c.l.b16 %v2948
    %v3088 = vunpack.c.h.b16 %v2948
    %v3089 = vunpack.c.l.b16 %v2949
    %v3090 = vunpack.c.h.b16 %v2949
    %v3091 = vunpack.c.l.b16 %v2950
    %v3092 = vunpack.c.h.b16 %v2950
    %v3093 = vunpack.c.l.b16 %v2951
    %v3094 = vunpack.c.h.b16 %v2951
    %v3095 = vunpack.c.l.b16 %v2952
    %v3096 = vunpack.c.h.b16 %v2952
    %v3097 = vunpack.c.l.b16 %v2953
    %v3098 = vunpack.c.h.b16 %v2953
    %v3099 = vunpack.c.l.b16 %v2954
    %v3100 = vunpack.c.h.b16 %v2954
    %v3101 = vunpack.c.l.b16 %v2955
    %v3102 = vunpack.c.h.b16 %v2955
    %v3103 = vunpack.c.l.b16 %v2956
    %v3104 = vunpack.c.h.b16 %v2956
    %v3105 = vunpack.c.l.b16 %v2957
    %v3106 = vunpack.c.h.b16 %v2957
    %v3107 = vunpack.c.l.b16 %v2958
    %v3108 = vunpack.c.h.b16 %v2958
    %v3109 = vunpack.c.l.b16 %v2959
    %v3110 = vunpack.c.h.b16 %v2959
    %v3111 = vunpack.c.l.b16 %v2960
    %v3112 = vunpack.c.h.b16 %v2960
    %v3113 = vunpack.c.l.b16 %v2961
    %v3114 = vunpack.c.h.b16 %v2961
    %v3115 = vunpack.c.l.b16 %v2962
    %v3116 = vunpack.c.h.b16 %v2962
    %v3117 = vunpack.c.l.b16 %v2963
    %v3118 = vunpack.c.h.b16 %v2963
    %v3119 = vunpack.c.l.b16 %v2964
    %v3120 = vunpack.c.h.b16 %v2964
    %v3121 = vunpack.c.l.b16 %v2965
    %v3122 = vunpack.c.h.b16 %v2965
    %v3123 = vunpack.c.l.b16 %v2966
    %v3124 = vunpack.c.h.b16 %v2966
    %v3125 = vunpack.c.l.b16 %v2967
    %v3126 = vunpack.c.h.b16 %v2967
    %v3127 = vunpack.c.l.b16 %v2968
    %v3128 = vunpack.c.h.b16 %v2968
    %v3129 = vunpack.c.l.b16 %v2969
    %v3130 = vunpack.c.h.b16 %v2969
    %v3131 = vunpack.c.l.b16 %v2970
    %v3132 = vunpack.c.h.b16 %v2970
    %v3133 = vunpack.c.l.b16 %v2971
    %v3134 = vunpack.c.h.b16 %v2971
    %v3135 = vunpack.c.l.b16 %v2972
    %v3136 = vunpack.c.h.b16 %v2972
    %v3137 = vunpack.c.l.b16 %v2973
    %v3138 = vunpack.c.h.b16 %v2973
    %v3139 = vunpack.c.l.b16 %v2974
    %v3140 = vunpack.c.h.b16 %v2974
    %v3141 = vunpack.c.l.b16 %v2975
    %v3142 = vunpack.c.h.b16 %v2975
    %v3143 = vunpack.c.l.b16 %v2976
    %v3144 = vunpack.c.h.b16 %v2976
    %v3145 = vunpack.c.l.b16 %v2977
    %v3146 = vunpack.c.h.b16 %v2977
    %v3147 = vunpack.c.l.b16 %v2978
    %v3148 = vunpack.c.h.b16 %v2978
    %v3149 = vunpack.c.l.b16 %v2979
    %v3150 = vunpack.c.h.b16 %v2979
    %v3151 = vunpack.c.l.b16 %v2980
    %v3152 = vunpack.c.h.b16 %v2980
    %v3153 = vunpack.c.l.b16 %v2981
    %v3154 = vunpack.c.h.b16 %v2981
    %v3155 = vunpack.c.l.b16 %v2982
    %v3156 = vunpack.c.h.b16 %v2982
    %v3157 = vunpack.c.l.b16 %v2983
    %v3158 = vunpack.c.h.b16 %v2983
    %v3159 = vunpack.c.l.b16 %v2984
    %v3160 = vunpack.c.h.b16 %v2984
    %v3161 = vunpack.c.l.b16 %v2985
    %v3162 = vunpack.c.h.b16 %v2985
    %v3163 = vunpack.c.l.b16 %v2986
    %v3164 = vunpack.c.h.b16 %v2986
    %v3165 = vunpack.c.l.b16 %v2987
    %v3166 = vunpack.c.h.b16 %v2987
    %v3167 = vunpack.c.l.b16 %v2988
    %v3168 = vunpack.c.h.b16 %v2988
    %v3169 = vunpack.c.l.b16 %v2989
    %v3170 = vunpack.c.h.b16 %v2989
    %v3171 = vunpack.c.l.b16 %v2990
    %v3172 = vunpack.c.h.b16 %v2990
    %v3173 = vunpack.c.l.b16 %v2991
    %v3174 = vunpack.c.h.b16 %v2991
    %v3175 = vunpack.c.l.b16 %v2992
    %v3176 = vunpack.c.h.b16 %v2992
    %v3177 = vunpack.c.l.b16 %v2993
    %v3178 = vunpack.c.h.b16 %v2993
    %v3179 = vunpack.c.l.b16 %v2994
    %v3180 = vunpack.c.h.b16 %v2994
    %v3181 = vunpack.c.l.b16 %v2995
    %v3182 = vunpack.c.h.b16 %v2995
    %v3183 = vunpack.c.l.b16 %v2996
    %v3184 = vunpack.c.h.b16 %v2996
    %v3185 = vunpack.c.l.b16 %v2997
    %v3186 = vunpack.c.h.b16 %v2997
    %v3187 = vunpack.c.l.b16 %v2998
    %v3188 = vunpack.c.h.b16 %v2998
    %v3189 = vunpack.c.l.b16 %v2999
    %v3190 = vunpack.c.h.b16 %v2999
    %v3191 = vunpack.c.l.b16 %v3000
    %v3192 = vunpack.c.h.b16 %v3000
    %v3193 = vunpack.c.l.b16 %v3001
    %v3194 = vunpack.c.h.b16 %v3001
    %v3195 = vunpack.c.l.b16 %v3002
    %v3196 = vunpack.c.h.b16 %v3002
    %v3197 = vunpack.c.l.b16 %v3003
    %v3198 = vunpack.c.h.b16 %v3003
    %v3199 = vunpack.c.l.b16 %v3004
    %v3200 = vunpack.c.h.b16 %v3004
    %v3201 = vunpack.c.l.b16 %v3005
    %v3202 = vunpack.c.h.b16 %v3005
    %v3203 = vunpack.c.l.b16 %v3006
    %v3204 = vunpack.c.h.b16 %v3006
    %v3205 = vunpack.c.l.b16 %v3007
    %v3206 = vunpack.c.h.b16 %v3007
    %v3207 = vunpack.c.l.b16 %v3008
    %v3208 = vunpack.c.h.b16 %v3008
    %v3209 = vpack.c.b16 %v3083, %v3081
    %v3210 = vpack.c.b16 %v3084, %v3082
    %v3211 = vpack.c.b16 %v3087, %v3085
    %v3212 = vpack.c.b16 %v3088, %v3086
    %v3213 = vpack.c.b16 %v3091, %v3089
    %v3214 = vpack.c.b16 %v3092, %v3090
    %v3215 = vpack.c.b16 %v3095, %v3093
    %v3216 = vpack.c.b16 %v3096, %v3094
    %v3217 = vpack.c.b16 %v3099, %v3097
    %v3218 = vpack.c.b16 %v3100, %v3098
    %v3219 = vpack.c.b16 %v3103, %v3101
    %v3220 = vpack.c.b16 %v3104, %v3102
    %v3221 = vpack.c.b16 %v3107, %v3105
    %v3222 = vpack.c.b16 %v3108, %v3106
    %v3223 = vpack.c.b16 %v3111, %v3109
    %v3224 = vpack.c.b16 %v3112, %v3110
    %v3225 = vpack.c.b16 %v3115, %v3113
    %v3226 = vpack.c.b16 %v3116, %v3114
    %v3227 = vpack.c.b16 %v3119, %v3117
    %v3228 = vpack.c.b16 %v3120, %v3118
    %v3229 = vpack.c.b16 %v3123, %v3121
    %v3230 = vpack.c.b16 %v3124, %v3122
    %v3231 = vpack.c.b16 %v3127, %v3125
    %v3232 = vpack.c.b16 %v3128, %v3126
    %v3233 = vpack.c.b16 %v3131, %v3129
    %v3234 = vpack.c.b16 %v3132, %v3130
    %v3235 = vpack.c.b16 %v3135, %v3133
    %v3236 = vpack.c.b16 %v3136, %v3134
    %v3237 = vpack.c.b16 %v3139, %v3137
    %v3238 = vpack.c.b16 %v3140, %v3138
    %v3239 = vpack.c.b16 %v3143, %v3141
    %v3240 = vpack.c.b16 %v3144, %v3142
    %v3241 = vpack.c.b16 %v3147, %v3145
    %v3242 = vpack.c.b16 %v3148, %v3146
    %v3243 = vpack.c.b16 %v3151, %v3149
    %v3244 = vpack.c.b16 %v3152, %v3150
    %v3245 = vpack.c.b16 %v3155, %v3153
    %v3246 = vpack.c.b16 %v3156, %v3154
    %v3247 = vpack.c.b16 %v3159, %v3157
    %v3248 = vpack.c.b16 %v3160, %v3158
    %v3249 = vpack.c.b16 %v3163, %v3161
    %v3250 = vpack.c.b16 %v3164, %v3162
    %v3251 = vpack.c.b16 %v3167, %v3165
    %v3252 = vpack.c.b16 %v3168, %v3166
    %v3253 = vpack.c.b16 %v3171, %v3169
    %v3254 = vpack.c.b16 %v3172, %v3170
    %v3255 = vpack.c.b16 %v3175, %v3173
    %v3256 = vpack.c.b16 %v3176, %v3174
    %v3257 = vpack.c.b16 %v3179, %v3177
    %v3258 = vpack.c.b16 %v3180, %v3178
    %v3259 = vpack.c.b16 %v3183, %v3181
    %v3260 = vpack.c.b16 %v3184, %v3182
    %v3261 = vpack.c.b16 %v3187, %v3185
    %v3262 = vpack.c.b16 %v3188, %v3186
    %v3263 = vpack.c.b16 %v3191, %v3189
    %v3264 = vpack.c.b16 %v3192, %v3190
    %v3265 = vpack.c.b16 %v3195, %v3193
    %v3266 = vpack.c.b16 %v3196, %v3194
    %v3267 = vpack.c.b16 %v3199, %v3197
    %v3268 = vpack.c.b16 %v3200, %v3198
    %v3269 = vpack.c.b16 %v3203, %v3201
    %v3270 = vpack.c.b16 %v3204, %v3202
    %v3271 = vpack.c.b16 %v3207, %v3205
    %v3272 = vpack.c.b16 %v3208, %v3206
    %3337 = vmatprep.subr.bf16.mxu0 %v3210
    %3338 = vmatpush1.bf16.msra.mxu0 %v3209
    %3339 = vmatprep.subr.bf16.mxu0 %v3212
    %3340 = vmatpush1.bf16.msra.mxu0 %v3211
    %3341 = vmatprep.subr.bf16.mxu0 %v3214
    %3342 = vmatpush1.bf16.msra.mxu0 %v3213
    %3343 = vmatprep.subr.bf16.mxu0 %v3216
    %3344 = vmatpush1.bf16.msra.mxu0 %v3215
    %3345 = vmatprep.subr.bf16.mxu0 %v3218
    %3346 = vmatpush1.bf16.msra.mxu0 %v3217
    %3347 = vmatprep.subr.bf16.mxu0 %v3220
    %3348 = vmatpush1.bf16.msra.mxu0 %v3219
    %3349 = vmatprep.subr.bf16.mxu0 %v3222
    %3350 = vmatpush1.bf16.msra.mxu0 %v3221
    %3351 = vmatprep.subr.bf16.mxu0 %v3224
    %3352 = vmatpush1.bf16.msra.mxu0 %v3223
    %3353 = vmatprep.subr.bf16.mxu0 %v3226
    %3354 = vmatpush1.bf16.msra.mxu0 %v3225
    %3355 = vmatprep.subr.bf16.mxu0 %v3228
    %3356 = vmatpush1.bf16.msra.mxu0 %v3227
    %3357 = vmatprep.subr.bf16.mxu0 %v3230
    %3358 = vmatpush1.bf16.msra.mxu0 %v3229
    %3359 = vmatprep.subr.bf16.mxu0 %v3232
    %3360 = vmatpush1.bf16.msra.mxu0 %v3231
    %3361 = vmatprep.subr.bf16.mxu0 %v3234
    %3362 = vmatpush1.bf16.msra.mxu0 %v3233
    %3363 = vmatprep.subr.bf16.mxu0 %v3236
    %3364 = vmatpush1.bf16.msra.mxu0 %v3235
    %3365 = vmatprep.subr.bf16.mxu0 %v3238
    %3366 = vmatpush1.bf16.msra.mxu0 %v3237
    %3367 = vmatprep.subr.bf16.mxu0 %v3240
    %3368 = vmatpush1.bf16.msra.mxu0 %v3239
    %3369 = vmatprep.mubr.bf16.mxu0 %v2942
    %3370 = vmatmul.mubr.bf16.gmra.mrb[0].mxu0 %v2941
    %v3371 = vpop.f32.mrb[0].mxu0
    %v3372 = vadd.f32 %v3012, %v3371
    %v3373 = vpop.f32.mrb[0].mxu0
    %v3374 = vadd.f32 %v3016, %v3373
    %v3375 = vpop.f32.mrb[0].mxu0
    %v3376 = vpop.f32.mrb[0].mxu0
    %3377 = vdwg.mxu0
    %3378 = vmatprep.subr.bf16.mxu0 %v3242
    %3379 = vmatpush1.bf16.msra.mxu0 %v3241
    %3380 = vmatprep.subr.bf16.mxu0 %v3244
    %3381 = vmatpush1.bf16.msra.mxu0 %v3243
    %3382 = vmatprep.subr.bf16.mxu0 %v3246
    %3383 = vmatpush1.bf16.msra.mxu0 %v3245
    %3384 = vmatprep.subr.bf16.mxu0 %v3248
    %3385 = vmatpush1.bf16.msra.mxu0 %v3247
    %3386 = vmatprep.subr.bf16.mxu0 %v3250
    %3387 = vmatpush1.bf16.msra.mxu0 %v3249
    %3388 = vmatprep.subr.bf16.mxu0 %v3252
    %3389 = vmatpush1.bf16.msra.mxu0 %v3251
    %3390 = vmatprep.subr.bf16.mxu0 %v3254
    %3391 = vmatpush1.bf16.msra.mxu0 %v3253
    %3392 = vmatprep.subr.bf16.mxu0 %v3256
    %3393 = vmatpush1.bf16.msra.mxu0 %v3255
    %3394 = vmatprep.subr.bf16.mxu0 %v3258
    %3395 = vmatpush1.bf16.msra.mxu0 %v3257
    %3396 = vmatprep.subr.bf16.mxu0 %v3260
    %3397 = vmatpush1.bf16.msra.mxu0 %v3259
    %3398 = vmatprep.subr.bf16.mxu0 %v3262
    %3399 = vmatpush1.bf16.msra.mxu0 %v3261
    %3400 = vmatprep.subr.bf16.mxu0 %v3264
    %3401 = vmatpush1.bf16.msra.mxu0 %v3263
    %3402 = vmatprep.subr.bf16.mxu0 %v3266
    %3403 = vmatpush1.bf16.msra.mxu0 %v3265
    %3404 = vmatprep.subr.bf16.mxu0 %v3268
    %3405 = vmatpush1.bf16.msra.mxu0 %v3267
    %3406 = vmatprep.subr.bf16.mxu0 %v3270
    %3407 = vmatpush1.bf16.msra.mxu0 %v3269
    %3408 = vmatprep.subr.bf16.mxu0 %v3272
    %3409 = vmatpush1.bf16.msra.mxu0 %v3271
    %3410 = vmatprep.mubr.bf16.mxu0 %v2944
    %3411 = vmatmul.mubr.bf16.gmra.mrb[0].mxu0 %v2943
    %v3412 = vpop.f32.mrb[0].mxu0
    %v3413 = vadd.f32 %v3372, %v3412
    %v3414 = vpop.f32.mrb[0].mxu0
    %v3415 = vadd.f32 %v3374, %v3414
    %v3416 = vpop.f32.mrb[0].mxu0
    %v3417 = vpop.f32.mrb[0].mxu0
    %3418 = vdwg.mxu0
    %vm3419 = vcmp.ge.f32.partialorder %v3413, 0.0
    %vm3420 = vcmp.ge.f32.partialorder %v3415, 0.0
    %v3421 = vmul.f32 %v3413, 0.01
    %v3422 = vmul.f32 %v3415, 0.01
    %v3423 = vsel %vm3419, %v3413, %v3421
    %v3424 = vsel %vm3420, %v3415, %v3422
    %v3425 = vpack.c.bf16 %v3423, %v3423
    %v3426 = vpack.c.bf16 %v3424, %v3424
    %v3427 = vld [vmem:[#allocation4 + $0x200] sm:$0xff]
    %v3428 = vld [vmem:[#allocation4 + $0x208] sm:$0xff]
    %v3429 = vld [vmem:[#allocation4 + $0x210] sm:$0xff]
    %v3430 = vld [vmem:[#allocation4 + $0x218] sm:$0xff]
    %v3431 = vld [vmem:[#allocation4 + $0x220] sm:$0xff]
    %v3432 = vld [vmem:[#allocation4 + $0x228] sm:$0xff]
    %v3433 = vld [vmem:[#allocation4 + $0x230] sm:$0xff]
    %v3434 = vld [vmem:[#allocation4 + $0x238] sm:$0xff]
    %v3435 = vld [vmem:[#allocation4 + $0x240] sm:$0xff]
    %v3436 = vld [vmem:[#allocation4 + $0x248] sm:$0xff]
    %v3437 = vld [vmem:[#allocation4 + $0x250] sm:$0xff]
    %v3438 = vld [vmem:[#allocation4 + $0x258] sm:$0xff]
    %v3439 = vld [vmem:[#allocation4 + $0x260] sm:$0xff]
    %v3440 = vld [vmem:[#allocation4 + $0x268] sm:$0xff]
    %v3441 = vld [vmem:[#allocation4 + $0x270] sm:$0xff]
    %v3442 = vld [vmem:[#allocation4 + $0x278] sm:$0xff]
    %v3443 = vld [vmem:[#allocation4 + $0x280] sm:$0xff]
    %v3444 = vld [vmem:[#allocation4 + $0x288] sm:$0xff]
    %v3445 = vld [vmem:[#allocation4 + $0x290] sm:$0xff]
    %v3446 = vld [vmem:[#allocation4 + $0x298] sm:$0xff]
    %v3447 = vld [vmem:[#allocation4 + $0x2a0] sm:$0xff]
    %v3448 = vld [vmem:[#allocation4 + $0x2a8] sm:$0xff]
    %v3449 = vld [vmem:[#allocation4 + $0x2b0] sm:$0xff]
    %v3450 = vld [vmem:[#allocation4 + $0x2b8] sm:$0xff]
    %v3451 = vld [vmem:[#allocation4 + $0x2c0] sm:$0xff]
    %v3452 = vld [vmem:[#allocation4 + $0x2c8] sm:$0xff]
    %v3453 = vld [vmem:[#allocation4 + $0x2d0] sm:$0xff]
    %v3454 = vld [vmem:[#allocation4 + $0x2d8] sm:$0xff]
    %v3455 = vld [vmem:[#allocation4 + $0x2e0] sm:$0xff]
    %v3456 = vld [vmem:[#allocation4 + $0x2e8] sm:$0xff]
    %v3457 = vld [vmem:[#allocation4 + $0x2f0] sm:$0xff]
    %v3458 = vld [vmem:[#allocation4 + $0x2f8] sm:$0xff]
    %v3459 = vlaneseq
    %v3460 = vshrl.u32 %v3459, 7
    %v3461 = vsub.s32 3, %v3460
    %v3462 = vrot.slane %v57, %v3461
    %v3463 = vlaneseq
    %v3464 = vshrl.u32 %v3463, 7
    %v3465 = vsub.s32 3, %v3464
    %v3466 = vrot.slane %v58, %v3465
    %v3499 = vunpack.c.l.b16 %v3427
    %v3500 = vunpack.c.h.b16 %v3427
    %v3501 = vunpack.c.l.b16 %v3428
    %v3502 = vunpack.c.h.b16 %v3428
    %v3503 = vunpack.c.l.b16 %v3429
    %v3504 = vunpack.c.h.b16 %v3429
    %v3505 = vunpack.c.l.b16 %v3430
    %v3506 = vunpack.c.h.b16 %v3430
    %v3507 = vunpack.c.l.b16 %v3431
    %v3508 = vunpack.c.h.b16 %v3431
    %v3509 = vunpack.c.l.b16 %v3432
    %v3510 = vunpack.c.h.b16 %v3432
    %v3511 = vunpack.c.l.b16 %v3433
    %v3512 = vunpack.c.h.b16 %v3433
    %v3513 = vunpack.c.l.b16 %v3434
    %v3514 = vunpack.c.h.b16 %v3434
    %v3515 = vunpack.c.l.b16 %v3435
    %v3516 = vunpack.c.h.b16 %v3435
    %v3517 = vunpack.c.l.b16 %v3436
    %v3518 = vunpack.c.h.b16 %v3436
    %v3519 = vunpack.c.l.b16 %v3437
    %v3520 = vunpack.c.h.b16 %v3437
    %v3521 = vunpack.c.l.b16 %v3438
    %v3522 = vunpack.c.h.b16 %v3438
    %v3523 = vunpack.c.l.b16 %v3439
    %v3524 = vunpack.c.h.b16 %v3439
    %v3525 = vunpack.c.l.b16 %v3440
    %v3526 = vunpack.c.h.b16 %v3440
    %v3527 = vunpack.c.l.b16 %v3441
    %v3528 = vunpack.c.h.b16 %v3441
    %v3529 = vunpack.c.l.b16 %v3442
    %v3530 = vunpack.c.h.b16 %v3442
    %v3531 = vunpack.c.l.b16 %v3443
    %v3532 = vunpack.c.h.b16 %v3443
    %v3533 = vunpack.c.l.b16 %v3444
    %v3534 = vunpack.c.h.b16 %v3444
    %v3535 = vunpack.c.l.b16 %v3445
    %v3536 = vunpack.c.h.b16 %v3445
    %v3537 = vunpack.c.l.b16 %v3446
    %v3538 = vunpack.c.h.b16 %v3446
    %v3539 = vunpack.c.l.b16 %v3447
    %v3540 = vunpack.c.h.b16 %v3447
    %v3541 = vunpack.c.l.b16 %v3448
    %v3542 = vunpack.c.h.b16 %v3448
    %v3543 = vunpack.c.l.b16 %v3449
    %v3544 = vunpack.c.h.b16 %v3449
    %v3545 = vunpack.c.l.b16 %v3450
    %v3546 = vunpack.c.h.b16 %v3450
    %v3547 = vunpack.c.l.b16 %v3451
    %v3548 = vunpack.c.h.b16 %v3451
    %v3549 = vunpack.c.l.b16 %v3452
    %v3550 = vunpack.c.h.b16 %v3452
    %v3551 = vunpack.c.l.b16 %v3453
    %v3552 = vunpack.c.h.b16 %v3453
    %v3553 = vunpack.c.l.b16 %v3454
    %v3554 = vunpack.c.h.b16 %v3454
    %v3555 = vunpack.c.l.b16 %v3455
    %v3556 = vunpack.c.h.b16 %v3455
    %v3557 = vunpack.c.l.b16 %v3456
    %v3558 = vunpack.c.h.b16 %v3456
    %v3559 = vunpack.c.l.b16 %v3457
    %v3560 = vunpack.c.h.b16 %v3457
    %v3561 = vunpack.c.l.b16 %v3458
    %v3562 = vunpack.c.h.b16 %v3458
    %v3563 = vpack.c.b16 %v3501, %v3499
    %v3564 = vpack.c.b16 %v3502, %v3500
    %v3565 = vpack.c.b16 %v3505, %v3503
    %v3566 = vpack.c.b16 %v3506, %v3504
    %v3567 = vpack.c.b16 %v3509, %v3507
    %v3568 = vpack.c.b16 %v3510, %v3508
    %v3569 = vpack.c.b16 %v3513, %v3511
    %v3570 = vpack.c.b16 %v3514, %v3512
    %v3571 = vpack.c.b16 %v3517, %v3515
    %v3572 = vpack.c.b16 %v3518, %v3516
    %v3573 = vpack.c.b16 %v3521, %v3519
    %v3574 = vpack.c.b16 %v3522, %v3520
    %v3575 = vpack.c.b16 %v3525, %v3523
    %v3576 = vpack.c.b16 %v3526, %v3524
    %v3577 = vpack.c.b16 %v3529, %v3527
    %v3578 = vpack.c.b16 %v3530, %v3528
    %v3579 = vpack.c.b16 %v3533, %v3531
    %v3580 = vpack.c.b16 %v3534, %v3532
    %v3581 = vpack.c.b16 %v3537, %v3535
    %v3582 = vpack.c.b16 %v3538, %v3536
    %v3583 = vpack.c.b16 %v3541, %v3539
    %v3584 = vpack.c.b16 %v3542, %v3540
    %v3585 = vpack.c.b16 %v3545, %v3543
    %v3586 = vpack.c.b16 %v3546, %v3544
    %v3587 = vpack.c.b16 %v3549, %v3547
    %v3588 = vpack.c.b16 %v3550, %v3548
    %v3589 = vpack.c.b16 %v3553, %v3551
    %v3590 = vpack.c.b16 %v3554, %v3552
    %v3591 = vpack.c.b16 %v3557, %v3555
    %v3592 = vpack.c.b16 %v3558, %v3556
    %v3593 = vpack.c.b16 %v3561, %v3559
    %v3594 = vpack.c.b16 %v3562, %v3560
    %3627 = vmatprep.subr.bf16.mxu0 %v3564
    %3628 = vmatpush1.bf16.msra.mxu0 %v3563
    %3629 = vmatprep.subr.bf16.mxu0 %v3566
    %3630 = vmatpush1.bf16.msra.mxu0 %v3565
    %3631 = vmatprep.subr.bf16.mxu0 %v3568
    %3632 = vmatpush1.bf16.msra.mxu0 %v3567
    %3633 = vmatprep.subr.bf16.mxu0 %v3570
    %3634 = vmatpush1.bf16.msra.mxu0 %v3569
    %3635 = vmatprep.subr.bf16.mxu0 %v3572
    %3636 = vmatpush1.bf16.msra.mxu0 %v3571
    %3637 = vmatprep.subr.bf16.mxu0 %v3574
    %3638 = vmatpush1.bf16.msra.mxu0 %v3573
    %3639 = vmatprep.subr.bf16.mxu0 %v3576
    %3640 = vmatpush1.bf16.msra.mxu0 %v3575
    %3641 = vmatprep.subr.bf16.mxu0 %v3578
    %3642 = vmatpush1.bf16.msra.mxu0 %v3577
    %3643 = vmatprep.subr.bf16.mxu0 %v3580
    %3644 = vmatpush1.bf16.msra.mxu0 %v3579
    %3645 = vmatprep.subr.bf16.mxu0 %v3582
    %3646 = vmatpush1.bf16.msra.mxu0 %v3581
    %3647 = vmatprep.subr.bf16.mxu0 %v3584
    %3648 = vmatpush1.bf16.msra.mxu0 %v3583
    %3649 = vmatprep.subr.bf16.mxu0 %v3586
    %3650 = vmatpush1.bf16.msra.mxu0 %v3585
    %3651 = vmatprep.subr.bf16.mxu0 %v3588
    %3652 = vmatpush1.bf16.msra.mxu0 %v3587
    %3653 = vmatprep.subr.bf16.mxu0 %v3590
    %3654 = vmatpush1.bf16.msra.mxu0 %v3589
    %3655 = vmatprep.subr.bf16.mxu0 %v3592
    %3656 = vmatpush1.bf16.msra.mxu0 %v3591
    %3657 = vmatprep.subr.bf16.mxu0 %v3594
    %3658 = vmatpush1.bf16.msra.mxu0 %v3593
    %3659 = vmatprep.mubr.bf16.mxu0 %v3426
    %3660 = vmatmul.mubr.bf16.gmra.mrb[0].mxu0 %v3425
    %v3661 = vpop.f32.mrb[0].mxu0
    %v3662 = vadd.f32 %v3462, %v3661
    %v3663 = vpop.f32.mrb[0].mxu0
    %v3664 = vadd.f32 %v3466, %v3663
    %v3665 = vpop.f32.mrb[0].mxu0
    %v3666 = vpop.f32.mrb[0].mxu0
    %3667 = vdwg.mxu0
    %vm3668 = vcmp.ge.f32.partialorder %v3662, 0.0
    %vm3669 = vcmp.ge.f32.partialorder %v3664, 0.0
    %v3670 = vmul.f32 %v3662, 0.01
    %v3671 = vmul.f32 %v3664, 0.01
    %v3672 = vsel %vm3668, %v3662, %v3670
    %v3673 = vsel %vm3669, %v3664, %v3671
    %v3674 = vpack.c.bf16 %v3672, %v3672
    %v3675 = vpack.c.bf16 %v3673, %v3673
    %v3676 = vld [vmem:[#allocation4 + $0x300] sm:$0xf]
    %v3677 = vld [vmem:[#allocation4 + $0x308] sm:$0xf]
    %v3678 = vld [vmem:[#allocation4 + $0x310] sm:$0xf]
    %v3679 = vld [vmem:[#allocation4 + $0x318] sm:$0xf]
    %v3680 = vld [vmem:[#allocation4 + $0x320] sm:$0xf]
    %v3681 = vld [vmem:[#allocation4 + $0x328] sm:$0xf]
    %v3682 = vld [vmem:[#allocation4 + $0x330] sm:$0xf]
    %v3683 = vld [vmem:[#allocation4 + $0x338] sm:$0xf]
    %v3684 = vld [vmem:[#allocation4 + $0x340] sm:$0xf]
    %v3685 = vld [vmem:[#allocation4 + $0x348] sm:$0xf]
    %v3686 = vld [vmem:[#allocation4 + $0x350] sm:$0xf]
    %v3687 = vld [vmem:[#allocation4 + $0x358] sm:$0xf]
    %v3688 = vld [vmem:[#allocation4 + $0x360] sm:$0xf]
    %v3689 = vld [vmem:[#allocation4 + $0x368] sm:$0xf]
    %v3690 = vld [vmem:[#allocation4 + $0x370] sm:$0xf]
    %v3691 = vld [vmem:[#allocation4 + $0x378] sm:$0xf]
    %v3692 = vld [vmem:[#allocation4 + $0x380] sm:$0xf]
    %v3693 = vld [vmem:[#allocation4 + $0x388] sm:$0xf]
    %v3694 = vld [vmem:[#allocation4 + $0x390] sm:$0xf]
    %v3695 = vld [vmem:[#allocation4 + $0x398] sm:$0xf]
    %v3696 = vld [vmem:[#allocation4 + $0x3a0] sm:$0xf]
    %v3697 = vld [vmem:[#allocation4 + $0x3a8] sm:$0xf]
    %v3698 = vld [vmem:[#allocation4 + $0x3b0] sm:$0xf]
    %v3699 = vld [vmem:[#allocation4 + $0x3b8] sm:$0xf]
    %v3700 = vld [vmem:[#allocation4 + $0x3c0] sm:$0xf]
    %v3701 = vld [vmem:[#allocation4 + $0x3c8] sm:$0xf]
    %v3702 = vld [vmem:[#allocation4 + $0x3d0] sm:$0xf]
    %v3703 = vld [vmem:[#allocation4 + $0x3d8] sm:$0xf]
    %v3704 = vld [vmem:[#allocation4 + $0x3e0] sm:$0xf]
    %v3705 = vld [vmem:[#allocation4 + $0x3e8] sm:$0xf]
    %v3706 = vld [vmem:[#allocation4 + $0x3f0] sm:$0xf]
    %v3707 = vld [vmem:[#allocation4 + $0x3f8] sm:$0xf]
    %v3708 = vlaneseq
    %v3709 = vshrl.u32 %v3708, 7
    %v3710 = vsub.s32 4, %v3709
    %v3711 = vrot.slane %v57, %v3710
    %v3744 = vunpack.c.l.b16 %v3676
    %v3745 = vunpack.c.l.b16 %v3677
    %v3746 = vunpack.c.l.b16 %v3678
    %v3747 = vunpack.c.l.b16 %v3679
    %v3748 = vunpack.c.l.b16 %v3680
    %v3749 = vunpack.c.l.b16 %v3681
    %v3750 = vunpack.c.l.b16 %v3682
    %v3751 = vunpack.c.l.b16 %v3683
    %v3752 = vunpack.c.l.b16 %v3684
    %v3753 = vunpack.c.l.b16 %v3685
    %v3754 = vunpack.c.l.b16 %v3686
    %v3755 = vunpack.c.l.b16 %v3687
    %v3756 = vunpack.c.l.b16 %v3688
    %v3757 = vunpack.c.l.b16 %v3689
    %v3758 = vunpack.c.l.b16 %v3690
    %v3759 = vunpack.c.l.b16 %v3691
    %v3760 = vunpack.c.l.b16 %v3692
    %v3761 = vunpack.c.l.b16 %v3693
    %v3762 = vunpack.c.l.b16 %v3694
    %v3763 = vunpack.c.l.b16 %v3695
    %v3764 = vunpack.c.l.b16 %v3696
    %v3765 = vunpack.c.l.b16 %v3697
    %v3766 = vunpack.c.l.b16 %v3698
    %v3767 = vunpack.c.l.b16 %v3699
    %v3768 = vunpack.c.l.b16 %v3700
    %v3769 = vunpack.c.l.b16 %v3701
    %v3770 = vunpack.c.l.b16 %v3702
    %v3771 = vunpack.c.l.b16 %v3703
    %v3772 = vunpack.c.l.b16 %v3704
    %v3773 = vunpack.c.l.b16 %v3705
    %v3774 = vunpack.c.l.b16 %v3706
    %v3775 = vunpack.c.l.b16 %v3707
    %v3776 = vpack.c.b16 %v3745, %v3744
    %v3777 = vpack.c.b16 %v3747, %v3746
    %v3778 = vpack.c.b16 %v3749, %v3748
    %v3779 = vpack.c.b16 %v3751, %v3750
    %v3780 = vpack.c.b16 %v3753, %v3752
    %v3781 = vpack.c.b16 %v3755, %v3754
    %v3782 = vpack.c.b16 %v3757, %v3756
    %v3783 = vpack.c.b16 %v3759, %v3758
    %v3784 = vpack.c.b16 %v3761, %v3760
    %v3785 = vpack.c.b16 %v3763, %v3762
    %v3786 = vpack.c.b16 %v3765, %v3764
    %v3787 = vpack.c.b16 %v3767, %v3766
    %v3788 = vpack.c.b16 %v3769, %v3768
    %v3789 = vpack.c.b16 %v3771, %v3770
    %v3790 = vpack.c.b16 %v3773, %v3772
    %v3791 = vpack.c.b16 %v3775, %v3774
    %3808 = vmatprep.subr.bf16.mxu0 0
    %3809 = vmatpush1.bf16.msra.mxu0 %v3776
    %3810 = vmatprep.subr.bf16.mxu0 0
    %3811 = vmatpush1.bf16.msra.mxu0 %v3777
    %3812 = vmatprep.subr.bf16.mxu0 0
    %3813 = vmatpush1.bf16.msra.mxu0 %v3778
    %3814 = vmatprep.subr.bf16.mxu0 0
    %3815 = vmatpush1.bf16.msra.mxu0 %v3779
    %3816 = vmatprep.subr.bf16.mxu0 0
    %3817 = vmatpush1.bf16.msra.mxu0 %v3780
    %3818 = vmatprep.subr.bf16.mxu0 0
    %3819 = vmatpush1.bf16.msra.mxu0 %v3781
    %3820 = vmatprep.subr.bf16.mxu0 0
    %3821 = vmatpush1.bf16.msra.mxu0 %v3782
    %3822 = vmatprep.subr.bf16.mxu0 0
    %3823 = vmatpush1.bf16.msra.mxu0 %v3783
    %3824 = vmatprep.subr.bf16.mxu0 0
    %3825 = vmatpush1.bf16.msra.mxu0 %v3784
    %3826 = vmatprep.subr.bf16.mxu0 0
    %3827 = vmatpush1.bf16.msra.mxu0 %v3785
    %3828 = vmatprep.subr.bf16.mxu0 0
    %3829 = vmatpush1.bf16.msra.mxu0 %v3786
    %3830 = vmatprep.subr.bf16.mxu0 0
    %3831 = vmatpush1.bf16.msra.mxu0 %v3787
    %3832 = vmatprep.subr.bf16.mxu0 0
    %3833 = vmatpush1.bf16.msra.mxu0 %v3788
    %3834 = vmatprep.subr.bf16.mxu0 0
    %3835 = vmatpush1.bf16.msra.mxu0 %v3789
    %3836 = vmatprep.subr.bf16.mxu0 0
    %3837 = vmatpush1.bf16.msra.mxu0 %v3790
    %3838 = vmatprep.subr.bf16.mxu0 0
    %3839 = vmatpush1.bf16.msra.mxu0 %v3791
    %3840 = vmatprep.mubr.bf16.mxu0 %v3675
    %3841 = vmatmul.mubr.bf16.gmra.mrb[0].mxu0 %v3674
    %v3842 = vpop.f32.mrb[0].mxu0
    %v3843 = vadd.f32 %v3711, %v3842
    %v3844 = vpop.f32.mrb[0].mxu0
    %v3845 = vpop.f32.mrb[0].mxu0
    %v3846 = vpop.f32.mrb[0].mxu0
    %3847 = vdwg.mxu0
    %vm3848 = vcmp.ge.f32.partialorder %v3843, 0.0
    %v3849 = vmul.f32 %v3843, 0.01
    %v3850 = vsel %vm3848, %v3843, %v3849
    %v3851 = vpack.c.bf16 %v3850, %v3850
    %v3852 = vld [vmem:[#allocation4 + $0x304] sm:$0xf]
    %v3853 = vld [vmem:[#allocation4 + $0x30c] sm:$0xf]
    %v3854 = vld [vmem:[#allocation4 + $0x314] sm:$0xf]
    %v3855 = vld [vmem:[#allocation4 + $0x31c] sm:$0xf]
    %v3856 = vld [vmem:[#allocation4 + $0x324] sm:$0xf]
    %v3857 = vld [vmem:[#allocation4 + $0x32c] sm:$0xf]
    %v3858 = vld [vmem:[#allocation4 + $0x334] sm:$0xf]
    %v3859 = vld [vmem:[#allocation4 + $0x33c] sm:$0xf]
    %v3860 = vld [vmem:[#allocation4 + $0x344] sm:$0xf]
    %v3861 = vld [vmem:[#allocation4 + $0x34c] sm:$0xf]
    %v3862 = vld [vmem:[#allocation4 + $0x354] sm:$0xf]
    %v3863 = vld [vmem:[#allocation4 + $0x35c] sm:$0xf]
    %v3864 = vld [vmem:[#allocation4 + $0x364] sm:$0xf]
    %v3865 = vld [vmem:[#allocation4 + $0x36c] sm:$0xf]
    %v3866 = vld [vmem:[#allocation4 + $0x374] sm:$0xf]
    %v3867 = vld [vmem:[#allocation4 + $0x37c] sm:$0xf]
    %v3868 = vlaneseq
    %v3869 = vshrl.u32 %v3868, 7
    %v3870 = vsub.s32 5, %v3869
    %v3871 = vrot.slane %v57, %v3870
    %v3888 = vunpack.c.l.b16 %v3852
    %v3889 = vunpack.c.l.b16 %v3853
    %v3890 = vunpack.c.l.b16 %v3854
    %v3891 = vunpack.c.l.b16 %v3855
    %v3892 = vunpack.c.l.b16 %v3856
    %v3893 = vunpack.c.l.b16 %v3857
    %v3894 = vunpack.c.l.b16 %v3858
    %v3895 = vunpack.c.l.b16 %v3859
    %v3896 = vunpack.c.l.b16 %v3860
    %v3897 = vunpack.c.l.b16 %v3861
    %v3898 = vunpack.c.l.b16 %v3862
    %v3899 = vunpack.c.l.b16 %v3863
    %v3900 = vunpack.c.l.b16 %v3864
    %v3901 = vunpack.c.l.b16 %v3865
    %v3902 = vunpack.c.l.b16 %v3866
    %v3903 = vunpack.c.l.b16 %v3867
    %v3904 = vpack.c.b16 %v3889, %v3888
    %v3905 = vpack.c.b16 %v3891, %v3890
    %v3906 = vpack.c.b16 %v3893, %v3892
    %v3907 = vpack.c.b16 %v3895, %v3894
    %v3908 = vpack.c.b16 %v3897, %v3896
    %v3909 = vpack.c.b16 %v3899, %v3898
    %v3910 = vpack.c.b16 %v3901, %v3900
    %v3911 = vpack.c.b16 %v3903, %v3902
    %3920 = vmatprep.subr.bf16.mxu0 0
    %3921 = vmatpush1.bf16.msra.mxu0 %v3904
    %3922 = vmatprep.subr.bf16.mxu0 0
    %3923 = vmatpush1.bf16.msra.mxu0 %v3905
    %3924 = vmatprep.subr.bf16.mxu0 0
    %3925 = vmatpush1.bf16.msra.mxu0 %v3906
    %3926 = vmatprep.subr.bf16.mxu0 0
    %3927 = vmatpush1.bf16.msra.mxu0 %v3907
    %3928 = vmatprep.subr.bf16.mxu0 0
    %3929 = vmatpush1.bf16.msra.mxu0 %v3908
    %3930 = vmatprep.subr.bf16.mxu0 0
    %3931 = vmatpush1.bf16.msra.mxu0 %v3909
    %3932 = vmatprep.subr.bf16.mxu0 0
    %3933 = vmatpush1.bf16.msra.mxu0 %v3910
    %3934 = vmatprep.subr.bf16.mxu0 0
    %3935 = vmatpush1.bf16.msra.mxu0 %v3911
    %3936 = vmatprep.subr.bf16.mxu0 0
    %3937 = vmatpush1.bf16.msra.mxu0 0
    %3938 = vmatprep.subr.bf16.mxu0 0
    %3939 = vmatpush1.bf16.msra.mxu0 0
    %3940 = vmatprep.subr.bf16.mxu0 0
    %3941 = vmatpush1.bf16.msra.mxu0 0
    %3942 = vmatprep.subr.bf16.mxu0 0
    %3943 = vmatpush1.bf16.msra.mxu0 0
    %3944 = vmatprep.subr.bf16.mxu0 0
    %3945 = vmatpush1.bf16.msra.mxu0 0
    %3946 = vmatprep.subr.bf16.mxu0 0
    %3947 = vmatpush1.bf16.msra.mxu0 0
    %3948 = vmatprep.subr.bf16.mxu0 0
    %3949 = vmatpush1.bf16.msra.mxu0 0
    %3950 = vmatprep.subr.bf16.mxu0 0
    %3951 = vmatpush1.bf16.msra.mxu0 0
    %3952 = vmatprep.mubr.bf16.mxu0 0
    %3953 = vmatmul.mubr.bf16.gmra.mrb[0].mxu0 %v3851
    %v3954 = vpop.f32.mrb[0].mxu0
    %v3955 = vadd.f32 %v3871, %v3954
    %v3956 = vpop.f32.mrb[0].mxu0
    %v3957 = vpop.f32.mrb[0].mxu0
    %v3958 = vpop.f32.mrb[0].mxu0
    %3959 = vdwg.mxu0
    %3960 = vst [vmem:[%s4] sm:$0xf] %v3955
    // Predicated region
    $region30: #{adversarial_vae_forward.1} parent=1 // pred_check
      _
    $region31: #{adversarial_vae_forward.1} parent=1 // pred_check_branch
      %3962 = sbr.rel (0) target = $region33
    $region32: #{adversarial_vae_forward.1} parent=1 // pred_region
      _
    $region33: #{adversarial_vae_forward.1} parent=1 // pred_fallthru
      _
    // Predicated region
    $region34: #{adversarial_vae_forward.1} parent=1 // pred_check
      _
    $region35: #{adversarial_vae_forward.1} parent=1 // pred_check_branch
      %3964 = sbr.rel (0) target = $region37
    $region36: #{adversarial_vae_forward.1} parent=1 // pred_region
      _
    $region37: #{adversarial_vae_forward.1} parent=1 // pred_fallthru
      _
    %3965 = vsyncpa [#allocation3], 1
    %3966 = vsyncpa [#allocation5], 1

</llo_original>
